<compile_context>
chip_gen: v7x
topology: tpu7x:2x2x1
jax: 0.10.0
libtpu: 0.0.40
codegen_flags: <defaults>
</compile_context>

<pallas_src>
import functools

import jax
import jax.numpy as jnp
from jax.experimental import pallas as pl
from jax.experimental.pallas import tpu as pltpu  # noqa: F401  (TPU backend assumed)

KH = KW = 5
C1_OUT = 6
C2_OUT = 16
POOL = 2
H1 = 14          # spatial after conv1 + pool (32 -> 28 -> 14)
H2 = 5           # spatial after conv2 + pool (14 -> 10 -> 5)
N_SPATIAL = H2 * H2  # 25


# ---------------------------------------------------------------------------
# BlockSpec helper: whole array resident in VMEM (grid-less kernels)
# ---------------------------------------------------------------------------
def _full_spec(arr):
    shape = tuple(arr.shape)
    if len(shape) == 2:
        return pl.BlockSpec(shape, lambda: (0, 0))
    assert len(shape) == 3
    return pl.BlockSpec(shape, lambda: (0, 0, 0))


# ---------------------------------------------------------------------------
# Kernel 1: conv1 + bias + ReLU + 2x2 maxpool (corner-parity matmuls + max)
# ---------------------------------------------------------------------------
def _conv1_pool_kernel(p1_ref, w1_ref, b1_ref, o_ref):
    # p1: (4, 25, M)  corner-parity im2col (M = N*14*14, lane-dense)
    # w1: (6, 25), b1: (6, 1), o: (6, M)
    w = w1_ref[...]
    m = jnp.dot(w, p1_ref[0], preferred_element_type=jnp.float32)
    for c in range(1, 4):
        m = jnp.maximum(m, jnp.dot(w, p1_ref[c], preferred_element_type=jnp.float32))
    o_ref[...] = jnp.maximum(m + b1_ref[...], 0.0)


def conv1_pool_block(p1, w1t, b1col):
    c_out, m = w1t.shape[0], p1.shape[-1]
    return pl.pallas_call(
        _conv1_pool_kernel,
        out_shape=jax.ShapeDtypeStruct((c_out, m), jnp.float32),
        in_specs=[_full_spec(p1), _full_spec(w1t), _full_spec(b1col)],
        out_specs=pl.BlockSpec((c_out, m), lambda: (0, 0)),
    )(p1, w1t, b1col)


# ---------------------------------------------------------------------------
# Kernel 2: conv2 + bias + ReLU + 2x2 maxpool + fc1 + fc2 + fc3 (all in VMEM)
# ---------------------------------------------------------------------------
def _conv2_fc_kernel(p2_ref, w2_ref, b2_ref, w1r_ref, bf1_ref,
                     wf2_ref, bf2_ref, wf3_ref, bf3_ref, o_ref,
                     *, n_batch, n_pad):
    # p2: (4, 25*n_pad, 150) corner-parity im2col of pooled conv1 activation,
    #     rows ordered (spatial s, batch n) with each spatial group padded to n_pad
    #     rows so all in-kernel row slices are 8-aligned.
    w2 = w2_ref[...]                                                    # (150, 16)
    z = jnp.dot(p2_ref[0], w2, preferred_element_type=jnp.float32)
    for c in range(1, 4):
        z = jnp.maximum(z, jnp.dot(p2_ref[c], w2, preferred_element_type=jnp.float32))
    pooled = jnp.maximum(z + b2_ref[...], 0.0)                          # (25*n_pad, 16)

    # fc1 as 25 row-block matmuls (avoids an in-kernel (25*n_pad,16)->(N,400) reshape)
    w1r = w1r_ref[...]                                                  # (400, 120)
    acc = jnp.zeros((n_pad, 120), jnp.float32)
    for s in range(N_SPATIAL):
        a = pooled[s * n_pad:(s + 1) * n_pad, :]                        # (n_pad, 16)
        b = w1r[s * C2_OUT:(s + 1) * C2_OUT, :]                         # (16, 120)
        acc = acc + jnp.dot(a, b, preferred_element_type=jnp.float32)
    h1 = jnp.maximum(acc + bf1_ref[...], 0.0)                           # (n_pad, 120)
    h2 = jnp.maximum(
        jnp.dot(h1, wf2_ref[...], preferred_element_type=jnp.float32) + bf2_ref[...],
        0.0)                                                            # (n_pad, 84)
    out = jnp.dot(h2, wf3_ref[...], preferred_element_type=jnp.float32) + bf3_ref[...]
    o_ref[...] = out[:n_batch, :]                                       # (N, 10)


def conv2_fc_block(p2, w2mat, b2row, w1r, bf1, wf2, bf2, wf3, bf3, *, n_batch, n_pad):
    kernel = functools.partial(_conv2_fc_kernel, n_batch=n_batch, n_pad=n_pad)
    args = (p2, w2mat, b2row, w1r, bf1, wf2, bf2, wf3, bf3)
    return pl.pallas_call(
        kernel,
        out_shape=jax.ShapeDtypeStruct((n_batch, 10), jnp.float32),
        in_specs=[_full_spec(a) for a in args],
        out_specs=pl.BlockSpec((n_batch, 10), lambda: (0, 0)),
    )(*args)


# ---------------------------------------------------------------------------
# Thin XLA glue: corner-parity patch extraction (tiny tensors)
# ---------------------------------------------------------------------------
def _conv1_corner_patches(x):
    # x: (N, 1, 32, 32) -> (4, 25, N*196).  Rows = taps (ki,kj), cols = (n, i, j).
    n = x.shape[0]
    img = x[:, 0]                                           # (N, 32, 32)
    span = 2 * (H1 - 1) + 1                                 # 27
    mats = []
    for pi in range(POOL):
        for pj in range(POOL):
            taps = []
            for ki in range(KH):
                for kj in range(KW):
                    r0, c0 = pi + ki, pj + kj
                    taps.append(img[:, r0:r0 + span:2, c0:c0 + span:2])   # (N,14,14)
            mats.append(jnp.stack(taps, axis=0).reshape(KH * KW, n * H1 * H1))
    return jnp.stack(mats, axis=0)                          # (4, 25, N*196)


def _conv2_corner_patches(pooled1_t, n, n_pad):
    # pooled1_t: (6, N*196) channel-major -> (4, 25*n_pad, 150) corner im2col with
    # rows ordered (spatial, batch) and columns ordered (tap, channel).
    a = pooled1_t.reshape(C1_OUT, n, H1, H1).transpose(1, 2, 3, 0)   # (N,14,14,6)
    span = 2 * (H2 - 1) + 1                                          # 9
    mats = []
    for pi in range(POOL):
        for pj in range(POOL):
            taps = []
            for ki in range(KH):
                for kj in range(KW):
                    r0, c0 = pi + ki, pj + kj
                    taps.append(a[:, r0:r0 + span:2, c0:c0 + span:2, :])  # (N,5,5,6)
            t = jnp.stack(taps, axis=3)                    # (N, 5, 5, 25, 6)
            t = t.transpose(1, 2, 0, 3, 4)                 # (5, 5, N, 25, 6)
            t = jnp.pad(t, ((0, 0), (0, 0), (0, n_pad - n), (0, 0), (0, 0)))
            mats.append(t.reshape(N_SPATIAL * n_pad, KH * KW * C1_OUT))
    return jnp.stack(mats, axis=0)                         # (4, 25*n_pad, 150)


# ---------------------------------------------------------------------------
# Forward pass (two pallas_calls total)
# ---------------------------------------------------------------------------
def net_forward(x, prep):
    n = x.shape[0]
    n_pad = max(8, ((n + 7) // 8) * 8)
    p1 = _conv1_corner_patches(x.astype(jnp.float32))
    pooled1_t = conv1_pool_block(p1, prep["w1t"], prep["b1col"])     # (6, N*196)
    p2 = _conv2_corner_patches(pooled1_t, n, n_pad)                  # (4, 25*n_pad, 150)
    return conv2_fc_block(
        p2, prep["w2mat"], prep["b2row"], prep["fc1_wr"], prep["fc1_b"],
        prep["fc2_w"], prep["fc2_b"], prep["fc3_w"], prep["fc3_b"],
        n_batch=n, n_pad=n_pad)                                      # (N, 10)


# ---------------------------------------------------------------------------
# Parameters: torch-layout init + one-time kernel-ready re-layout
# ---------------------------------------------------------------------------
def init_params(key):
    keys = jax.random.split(key, 10)

    def u(k, shape, fan_in):
        bound = 1.0 / float(fan_in) ** 0.5
        return jax.random.uniform(k, shape, jnp.float32, -bound, bound)

    return {
        "conv1_w": u(keys[0], (6, 1, 5, 5), 25),
        "conv1_b": u(keys[1], (6,), 25),
        "conv2_w": u(keys[2], (16, 6, 5, 5), 150),
        "conv2_b": u(keys[3], (16,), 150),
        "fc1_w": u(keys[4], (120, 400), 400),   # torch Linear layout: (out, in)
        "fc1_b": u(keys[5], (120,), 400),
        "fc2_w": u(keys[6], (84, 120), 120),
        "fc2_b": u(keys[7], (84,), 120),
        "fc3_w": u(keys[8], (10, 84), 84),
        "fc3_b": u(keys[9], (10,), 84),
    }


def prepare_params(p):
    """One-time re-layout of torch-style parameters into kernel-ready form."""
    f32 = jnp.float32
    # fc1 row permutation: torch flatten order (c, h, w) -> kernel order (h, w, c).
    fc1_wr = (p["fc1_w"].reshape(120, C2_OUT, H2, H2)
              .transpose(2, 3, 1, 0)
              .reshape(C2_OUT * H2 * H2, 120).astype(f32))
    return {
        "w1t": p["conv1_w"].reshape(C1_OUT, KH * KW).astype(f32),          # (6, 25)
        "b1col": p["conv1_b"].reshape(C1_OUT, 1).astype(f32),
        "w2mat": p["conv2_w"].transpose(2, 3, 1, 0).reshape(KH * KW * C1_OUT, C2_OUT).astype(f32),
        "b2row": p["conv2_b"].reshape(1, C2_OUT).astype(f32),
        "fc1_wr": fc1_wr,                                                   # (400, 120)
        "fc1_b": p["fc1_b"].reshape(1, 120).astype(f32),
        "fc2_w": p["fc2_w"].T.astype(f32),                                  # (120, 84)
        "fc2_b": p["fc2_b"].reshape(1, 84).astype(f32),
        "fc3_w": p["fc3_w"].T.astype(f32),                                  # (84, 10)
        "fc3_b": p["fc3_b"].reshape(1, 10).astype(f32),
    }


# ---------------------------------------------------------------------------
# Pure-JAX reference (independent formulation, for a correctness check)
# ---------------------------------------------------------------------------
def net_forward_reference(x, params):
    dn = ("NCHW", "OIHW", "NCHW")
    y = jax.lax.conv_general_dilated(x, params["conv1_w"], (1, 1), "VALID",
                                     dimension_numbers=dn)
    y = jnp.maximum(y + params["conv1_b"].reshape(1, -1, 1, 1), 0.0)
    y = jax.lax.reduce_window(y, -jnp.inf, jax.lax.max, (1, 1, 2, 2), (1, 1, 2, 2), "VALID")
    y = jax.lax.conv_general_dilated(y, params["conv2_w"], (1, 1), "VALID",
                                     dimension_numbers=dn)
    y = jnp.maximum(y + params["conv2_b"].reshape(1, -1, 1, 1), 0.0)
    y = jax.lax.reduce_window(y, -jnp.inf, jax.lax.max, (1, 1, 2, 2), (1, 1, 2, 2), "VALID")
    y = y.reshape(y.shape[0], -1)
    y = jnp.maximum(y @ params["fc1_w"].T + params["fc1_b"], 0.0)
    y = jnp.maximum(y @ params["fc2_w"].T + params["fc2_b"], 0.0)
    return y @ params["fc3_w"].T + params["fc3_b"]


if __name__ == "__main__":
    key = jax.random.PRNGKey(0)
    pkey, xkey = jax.random.split(key)
    params = init_params(pkey)
    prep = prepare_params(params)
    # LeNet expects 32x32 single-channel images: (N, C, H, W) = (2, 1, 32, 32)
    x = jax.random.normal(xkey, (2, 1, 32, 32), jnp.float32)

    fwd = jax.jit(net_forward)
    out = jax.block_until_ready(fwd(x, prep))
    assert out.shape == (2, 10), out.shape

    with jax.default_matmul_precision("highest"):
        ref = net_forward_reference(x, params)
    err = float(jnp.max(jnp.abs(out - ref)))
    assert err < 5e-2, f"mismatch vs reference: max abs err = {err}"

    print("KERNEL_OK")
</pallas_src>

<mosaic_0001>
module attributes {stable_mosaic.version = 11 : i64} {
  func.func @_conv1_pool_kernel(%arg0: memref<4x25x392xf32, #tpu.memory_space<vmem>>, %arg1: memref<6x25xf32, #tpu.memory_space<vmem>>, %arg2: memref<6x1xf32, #tpu.memory_space<vmem>>, %arg3: memref<6x392xf32, #tpu.memory_space<vmem>>) attributes {dimension_semantics = [], scalar_prefetch = 0 : i64, scratch_operands = 0 : i64, tpu.core_type = #tpu.core_type<tc>} {
    %c0 = arith.constant 0 : index
    %c0_0 = arith.constant 0 : index
    %0 = vector.load %arg1[%c0, %c0_0] : memref<6x25xf32, #tpu.memory_space<vmem>>, vector<6x25xf32>
    %c0_1 = arith.constant 0 : index
    %c0_2 = arith.constant 0 : index
    %c0_3 = arith.constant 0 : index
    %1 = vector.load %arg0[%c0_1, %c0_2, %c0_3] : memref<4x25x392xf32, #tpu.memory_space<vmem>>, vector<1x25x392xf32>
    %2 = vector.shape_cast %1 : vector<1x25x392xf32> to vector<25x392xf32>
    %cst = arith.constant dense<0.000000e+00> : vector<6x392xf32>
    %3 = tpu.matmul %0, %2, %cst {dimension_numbers = #tpu.dot_dimension_numbers<[1], [0], [0], [1], [0, 0, 1, 1], [], []>} : vector<6x25xf32>, vector<25x392xf32>, vector<6x392xf32> -> vector<6x392xf32>
    %c1 = arith.constant 1 : index
    %c0_4 = arith.constant 0 : index
    %c0_5 = arith.constant 0 : index
    %4 = vector.load %arg0[%c1, %c0_4, %c0_5] : memref<4x25x392xf32, #tpu.memory_space<vmem>>, vector<1x25x392xf32>
    %5 = vector.shape_cast %4 : vector<1x25x392xf32> to vector<25x392xf32>
    %cst_6 = arith.constant dense<0.000000e+00> : vector<6x392xf32>
    %6 = tpu.matmul %0, %5, %cst_6 {dimension_numbers = #tpu.dot_dimension_numbers<[1], [0], [0], [1], [0, 0, 1, 1], [], []>} : vector<6x25xf32>, vector<25x392xf32>, vector<6x392xf32> -> vector<6x392xf32>
    %7 = arith.maximumf %3, %6 : vector<6x392xf32>
    %c2 = arith.constant 2 : index
    %c0_7 = arith.constant 0 : index
    %c0_8 = arith.constant 0 : index
    %8 = vector.load %arg0[%c2, %c0_7, %c0_8] : memref<4x25x392xf32, #tpu.memory_space<vmem>>, vector<1x25x392xf32>
    %9 = vector.shape_cast %8 : vector<1x25x392xf32> to vector<25x392xf32>
    %cst_9 = arith.constant dense<0.000000e+00> : vector<6x392xf32>
    %10 = tpu.matmul %0, %9, %cst_9 {dimension_numbers = #tpu.dot_dimension_numbers<[1], [0], [0], [1], [0, 0, 1, 1], [], []>} : vector<6x25xf32>, vector<25x392xf32>, vector<6x392xf32> -> vector<6x392xf32>
    %11 = arith.maximumf %7, %10 : vector<6x392xf32>
    %c3 = arith.constant 3 : index
    %c0_10 = arith.constant 0 : index
    %c0_11 = arith.constant 0 : index
    %12 = vector.load %arg0[%c3, %c0_10, %c0_11] : memref<4x25x392xf32, #tpu.memory_space<vmem>>, vector<1x25x392xf32>
    %13 = vector.shape_cast %12 : vector<1x25x392xf32> to vector<25x392xf32>
    %cst_12 = arith.constant dense<0.000000e+00> : vector<6x392xf32>
    %14 = tpu.matmul %0, %13, %cst_12 {dimension_numbers = #tpu.dot_dimension_numbers<[1], [0], [0], [1], [0, 0, 1, 1], [], []>} : vector<6x25xf32>, vector<25x392xf32>, vector<6x392xf32> -> vector<6x392xf32>
    %15 = arith.maximumf %11, %14 : vector<6x392xf32>
    %c0_13 = arith.constant 0 : index
    %c0_14 = arith.constant 0 : index
    %16 = vector.load %arg2[%c0_13, %c0_14] : memref<6x1xf32, #tpu.memory_space<vmem>>, vector<6x1xf32>
    %17 = vector.broadcast %16 : vector<6x1xf32> to vector<6x392xf32>
    %18 = arith.addf %15, %17 : vector<6x392xf32>
    %cst_15 = arith.constant 0.000000e+00 : f32
    %19 = vector.broadcast %cst_15 : f32 to vector<6x392xf32>
    %20 = arith.maximumf %18, %19 : vector<6x392xf32>
    %c0_16 = arith.constant 0 : index
    %c0_17 = arith.constant 0 : index
    %21 = vector.load %arg3[%c0_16, %c0_17] : memref<6x392xf32, #tpu.memory_space<vmem>>, vector<6x392xf32>
    tpu.vector_store %arg3[%c0_16, %c0_17], %20 {strides = array<i32>} : memref<6x392xf32, #tpu.memory_space<vmem>>, vector<6x392xf32>,
    return
  }
}

module attributes {stable_mosaic.version = 11 : i64} {
  func.func @_conv2_fc_kernel(%arg0: memref<4x200x150xf32, #tpu.memory_space<vmem>>, %arg1: memref<150x16xf32, #tpu.memory_space<vmem>>, %arg2: memref<1x16xf32, #tpu.memory_space<vmem>>, %arg3: memref<400x120xf32, #tpu.memory_space<vmem>>, %arg4: memref<1x120xf32, #tpu.memory_space<vmem>>, %arg5: memref<120x84xf32, #tpu.memory_space<vmem>>, %arg6: memref<1x84xf32, #tpu.memory_space<vmem>>, %arg7: memref<84x10xf32, #tpu.memory_space<vmem>>, %arg8: memref<1x10xf32, #tpu.memory_space<vmem>>, %arg9: memref<2x10xf32, #tpu.memory_space<vmem>>) attributes {dimension_semantics = [], scalar_prefetch = 0 : i64, scratch_operands = 0 : i64, tpu.core_type = #tpu.core_type<tc>} {
    %c0 = arith.constant 0 : index
    %c0_0 = arith.constant 0 : index
    %0 = vector.load %arg1[%c0, %c0_0] : memref<150x16xf32, #tpu.memory_space<vmem>>, vector<150x16xf32>
    %c0_1 = arith.constant 0 : index
    %c0_2 = arith.constant 0 : index
    %c0_3 = arith.constant 0 : index
    %1 = vector.load %arg0[%c0_1, %c0_2, %c0_3] : memref<4x200x150xf32, #tpu.memory_space<vmem>>, vector<1x200x150xf32>
    %2 = vector.shape_cast %1 : vector<1x200x150xf32> to vector<200x150xf32>
    %cst = arith.constant dense<0.000000e+00> : vector<200x16xf32>
    %3 = tpu.matmul %2, %0, %cst {dimension_numbers = #tpu.dot_dimension_numbers<[1], [0], [0], [1], [0, 0, 1, 1], [], []>} : vector<200x150xf32>, vector<150x16xf32>, vector<200x16xf32> -> vector<200x16xf32>
    %c1 = arith.constant 1 : index
    %c0_4 = arith.constant 0 : index
    %c0_5 = arith.constant 0 : index
    %4 = vector.load %arg0[%c1, %c0_4, %c0_5] : memref<4x200x150xf32, #tpu.memory_space<vmem>>, vector<1x200x150xf32>
    %5 = vector.shape_cast %4 : vector<1x200x150xf32> to vector<200x150xf32>
    %cst_6 = arith.constant dense<0.000000e+00> : vector<200x16xf32>
    %6 = tpu.matmul %5, %0, %cst_6 {dimension_numbers = #tpu.dot_dimension_numbers<[1], [0], [0], [1], [0, 0, 1, 1], [], []>} : vector<200x150xf32>, vector<150x16xf32>, vector<200x16xf32> -> vector<200x16xf32>
    %7 = arith.maximumf %3, %6 : vector<200x16xf32>
    %c2 = arith.constant 2 : index
    %c0_7 = arith.constant 0 : index
    %c0_8 = arith.constant 0 : index
    %8 = vector.load %arg0[%c2, %c0_7, %c0_8] : memref<4x200x150xf32, #tpu.memory_space<vmem>>, vector<1x200x150xf32>
    %9 = vector.shape_cast %8 : vector<1x200x150xf32> to vector<200x150xf32>
    %cst_9 = arith.constant dense<0.000000e+00> : vector<200x16xf32>
    %10 = tpu.matmul %9, %0, %cst_9 {dimension_numbers = #tpu.dot_dimension_numbers<[1], [0], [0], [1], [0, 0, 1, 1], [], []>} : vector<200x150xf32>, vector<150x16xf32>, vector<200x16xf32> -> vector<200x16xf32>
    %11 = arith.maximumf %7, %10 : vector<200x16xf32>
    %c3 = arith.constant 3 : index
    %c0_10 = arith.constant 0 : index
    %c0_11 = arith.constant 0 : index
    %12 = vector.load %arg0[%c3, %c0_10, %c0_11] : memref<4x200x150xf32, #tpu.memory_space<vmem>>, vector<1x200x150xf32>
    %13 = vector.shape_cast %12 : vector<1x200x150xf32> to vector<200x150xf32>
    %cst_12 = arith.constant dense<0.000000e+00> : vector<200x16xf32>
    %14 = tpu.matmul %13, %0, %cst_12 {dimension_numbers = #tpu.dot_dimension_numbers<[1], [0], [0], [1], [0, 0, 1, 1], [], []>} : vector<200x150xf32>, vector<150x16xf32>, vector<200x16xf32> -> vector<200x16xf32>
    %15 = arith.maximumf %11, %14 : vector<200x16xf32>
    %c0_13 = arith.constant 0 : index
    %c0_14 = arith.constant 0 : index
    %16 = vector.load %arg2[%c0_13, %c0_14] : memref<1x16xf32, #tpu.memory_space<vmem>>, vector<1x16xf32>
    %17 = vector.broadcast %16 : vector<1x16xf32> to vector<200x16xf32>
    %18 = arith.addf %15, %17 : vector<200x16xf32>
    %cst_15 = arith.constant 0.000000e+00 : f32
    %19 = vector.broadcast %cst_15 : f32 to vector<200x16xf32>
    %20 = arith.maximumf %18, %19 : vector<200x16xf32>
    %c0_16 = arith.constant 0 : index
    %c0_17 = arith.constant 0 : index
    %21 = vector.load %arg3[%c0_16, %c0_17] : memref<400x120xf32, #tpu.memory_space<vmem>>, vector<400x120xf32>
    %cst_18 = arith.constant 0.000000e+00 : f32
    %22 = vector.broadcast %cst_18 : f32 to vector<8x120xf32>
    %23 = vector.extract_strided_slice %20 {offsets = [0, 0], sizes = [8, 16], strides = [1, 1]} : vector<200x16xf32> to vector<8x16xf32>
    %24 = vector.extract_strided_slice %21 {offsets = [0, 0], sizes = [16, 120], strides = [1, 1]} : vector<400x120xf32> to vector<16x120xf32>
    %cst_19 = arith.constant dense<0.000000e+00> : vector<8x120xf32>
    %25 = tpu.matmul %23, %24, %cst_19 {dimension_numbers = #tpu.dot_dimension_numbers<[1], [0], [0], [1], [0, 0, 1, 1], [], []>} : vector<8x16xf32>, vector<16x120xf32>, vector<8x120xf32> -> vector<8x120xf32>
    %26 = arith.addf %22, %25 : vector<8x120xf32>
    %27 = vector.extract_strided_slice %20 {offsets = [8, 0], sizes = [8, 16], strides = [1, 1]} : vector<200x16xf32> to vector<8x16xf32>
    %28 = vector.extract_strided_slice %21 {offsets = [16, 0], sizes = [16, 120], strides = [1, 1]} : vector<400x120xf32> to vector<16x120xf32>
    %cst_20 = arith.constant dense<0.000000e+00> : vector<8x120xf32>
    %29 = tpu.matmul %27, %28, %cst_20 {dimension_numbers = #tpu.dot_dimension_numbers<[1], [0], [0], [1], [0, 0, 1, 1], [], []>} : vector<8x16xf32>, vector<16x120xf32>, vector<8x120xf32> -> vector<8x120xf32>
    %30 = arith.addf %26, %29 : vector<8x120xf32>
    %31 = vector.extract_strided_slice %20 {offsets = [16, 0], sizes = [8, 16], strides = [1, 1]} : vector<200x16xf32> to vector<8x16xf32>
    %32 = vector.extract_strided_slice %21 {offsets = [32, 0], sizes = [16, 120], strides = [1, 1]} : vector<400x120xf32> to vector<16x120xf32>
    %cst_21 = arith.constant dense<0.000000e+00> : vector<8x120xf32>
    %33 = tpu.matmul %31, %32, %cst_21 {dimension_numbers = #tpu.dot_dimension_numbers<[1], [0], [0], [1], [0, 0, 1, 1], [], []>} : vector<8x16xf32>, vector<16x120xf32>, vector<8x120xf32> -> vector<8x120xf32>
    %34 = arith.addf %30, %33 : vector<8x120xf32>
    %35 = vector.extract_strided_slice %20 {offsets = [24, 0], sizes = [8, 16], strides = [1, 1]} : vector<200x16xf32> to vector<8x16xf32>
    %36 = vector.extract_strided_slice %21 {offsets = [48, 0], sizes = [16, 120], strides = [1, 1]} : vector<400x120xf32> to vector<16x120xf32>
    %cst_22 = arith.constant dense<0.000000e+00> : vector<8x120xf32>
    %37 = tpu.matmul %35, %36, %cst_22 {dimension_numbers = #tpu.dot_dimension_numbers<[1], [0], [0], [1], [0, 0, 1, 1], [], []>} : vector<8x16xf32>, vector<16x120xf32>, vector<8x120xf32> -> vector<8x120xf32>
    %38 = arith.addf %34, %37 : vector<8x120xf32>
    %39 = vector.extract_strided_slice %20 {offsets = [32, 0], sizes = [8, 16], strides = [1, 1]} : vector<200x16xf32> to vector<8x16xf32>
    %40 = vector.extract_strided_slice %21 {offsets = [64, 0], sizes = [16, 120], strides = [1, 1]} : vector<400x120xf32> to vector<16x120xf32>
    %cst_23 = arith.constant dense<0.000000e+00> : vector<8x120xf32>
    %41 = tpu.matmul %39, %40, %cst_23 {dimension_numbers = #tpu.dot_dimension_numbers<[1], [0], [0], [1], [0, 0, 1, 1], [], []>} : vector<8x16xf32>, vector<16x120xf32>, vector<8x120xf32> -> vector<8x120xf32>
    %42 = arith.addf %38, %41 : vector<8x120xf32>
    %43 = vector.extract_strided_slice %20 {offsets = [40, 0], sizes = [8, 16], strides = [1, 1]} : vector<200x16xf32> to vector<8x16xf32>
    %44 = vector.extract_strided_slice %21 {offsets = [80, 0], sizes = [16, 120], strides = [1, 1]} : vector<400x120xf32> to vector<16x120xf32>
    %cst_24 = arith.constant dense<0.000000e+00> : vector<8x120xf32>
    %45 = tpu.matmul %43, %44, %cst_24 {dimension_numbers = #tpu.dot_dimension_numbers<[1], [0], [0], [1], [0, 0, 1, 1], [], []>} : vector<8x16xf32>, vector<16x120xf32>, vector<8x120xf32> -> vector<8x120xf32>
    %46 = arith.addf %42, %45 : vector<8x120xf32>
    %47 = vector.extract_strided_slice %20 {offsets = [48, 0], sizes = [8, 16], strides = [1, 1]} : vector<200x16xf32> to vector<8x16xf32>
    %48 = vector.extract_strided_slice %21 {offsets = [96, 0], sizes = [16, 120], strides = [1, 1]} : vector<400x120xf32> to vector<16x120xf32>
    %cst_25 = arith.constant dense<0.000000e+00> : vector<8x120xf32>
    %49 = tpu.matmul %47, %48, %cst_25 {dimension_numbers = #tpu.dot_dimension_numbers<[1], [0], [0], [1], [0, 0, 1, 1], [], []>} : vector<8x16xf32>, vector<16x120xf32>, vector<8x120xf32> -> vector<8x120xf32>
    %50 = arith.addf %46, %49 : vector<8x120xf32>
    %51 = vector.extract_strided_slice %20 {offsets = [56, 0], sizes = [8, 16], strides = [1, 1]} : vector<200x16xf32> to vector<8x16xf32>
    %52 = vector.extract_strided_slice %21 {offsets = [112, 0], sizes = [16, 120], strides = [1, 1]} : vector<400x120xf32> to vector<16x120xf32>
    %cst_26 = arith.constant dense<0.000000e+00> : vector<8x120xf32>
    %53 = tpu.matmul %51, %52, %cst_26 {dimension_numbers = #tpu.dot_dimension_numbers<[1], [0], [0], [1], [0, 0, 1, 1], [], []>} : vector<8x16xf32>, vector<16x120xf32>, vector<8x120xf32> -> vector<8x120xf32>
    %54 = arith.addf %50, %53 : vector<8x120xf32>
    %55 = vector.extract_strided_slice %20 {offsets = [64, 0], sizes = [8, 16], strides = [1, 1]} : vector<200x16xf32> to vector<8x16xf32>
    %56 = vector.extract_strided_slice %21 {offsets = [128, 0], sizes = [16, 120], strides = [1, 1]} : vector<400x120xf32> to vector<16x120xf32>
    %cst_27 = arith.constant dense<0.000000e+00> : vector<8x120xf32>
    %57 = tpu.matmul %55, %56, %cst_27 {dimension_numbers = #tpu.dot_dimension_numbers<[1], [0], [0], [1], [0, 0, 1, 1], [], []>} : vector<8x16xf32>, vector<16x120xf32>, vector<8x120xf32> -> vector<8x120xf32>
    %58 = arith.addf %54, %57 : vector<8x120xf32>
    %59 = vector.extract_strided_slice %20 {offsets = [72, 0], sizes = [8, 16], strides = [1, 1]} : vector<200x16xf32> to vector<8x16xf32>
    %60 = vector.extract_strided_slice %21 {offsets = [144, 0], sizes = [16, 120], strides = [1, 1]} : vector<400x120xf32> to vector<16x120xf32>
    %cst_28 = arith.constant dense<0.000000e+00> : vector<8x120xf32>
    %61 = tpu.matmul %59, %60, %cst_28 {dimension_numbers = #tpu.dot_dimension_numbers<[1], [0], [0], [1], [0, 0, 1, 1], [], []>} : vector<8x16xf32>, vector<16x120xf32>, vector<8x120xf32> -> vector<8x120xf32>
    %62 = arith.addf %58, %61 : vector<8x120xf32>
    %63 = vector.extract_strided_slice %20 {offsets = [80, 0], sizes = [8, 16], strides = [1, 1]} : vector<200x16xf32> to vector<8x16xf32>
    %64 = vector.extract_strided_slice %21 {offsets = [160, 0], sizes = [16, 120], strides = [1, 1]} : vector<400x120xf32> to vector<16x120xf32>
    %cst_29 = arith.constant dense<0.000000e+00> : vector<8x120xf32>
    %65 = tpu.matmul %63, %64, %cst_29 {dimension_numbers = #tpu.dot_dimension_numbers<[1], [0], [0], [1], [0, 0, 1, 1], [], []>} : vector<8x16xf32>, vector<16x120xf32>, vector<8x120xf32> -> vector<8x120xf32>
    %66 = arith.addf %62, %65 : vector<8x120xf32>
    %67 = vector.extract_strided_slice %20 {offsets = [88, 0], sizes = [8, 16], strides = [1, 1]} : vector<200x16xf32> to vector<8x16xf32>
    %68 = vector.extract_strided_slice %21 {offsets = [176, 0], sizes = [16, 120], strides = [1, 1]} : vector<400x120xf32> to vector<16x120xf32>
    %cst_30 = arith.constant dense<0.000000e+00> : vector<8x120xf32>
    %69 = tpu.matmul %67, %68, %cst_30 {dimension_numbers = #tpu.dot_dimension_numbers<[1], [0], [0], [1], [0, 0, 1, 1], [], []>} : vector<8x16xf32>, vector<16x120xf32>, vector<8x120xf32> -> vector<8x120xf32>
    %70 = arith.addf %66, %69 : vector<8x120xf32>
    %71 = vector.extract_strided_slice %20 {offsets = [96, 0], sizes = [8, 16], strides = [1, 1]} : vector<200x16xf32> to vector<8x16xf32>
    %72 = vector.extract_strided_slice %21 {offsets = [192, 0], sizes = [16, 120], strides = [1, 1]} : vector<400x120xf32> to vector<16x120xf32>
    %cst_31 = arith.constant dense<0.000000e+00> : vector<8x120xf32>
    %73 = tpu.matmul %71, %72, %cst_31 {dimension_numbers = #tpu.dot_dimension_numbers<[1], [0], [0], [1], [0, 0, 1, 1], [], []>} : vector<8x16xf32>, vector<16x120xf32>, vector<8x120xf32> -> vector<8x120xf32>
    %74 = arith.addf %70, %73 : vector<8x120xf32>
    %75 = vector.extract_strided_slice %20 {offsets = [104, 0], sizes = [8, 16], strides = [1, 1]} : vector<200x16xf32> to vector<8x16xf32>
    %76 = vector.extract_strided_slice %21 {offsets = [208, 0], sizes = [16, 120], strides = [1, 1]} : vector<400x120xf32> to vector<16x120xf32>
    %cst_32 = arith.constant dense<0.000000e+00> : vector<8x120xf32>
    %77 = tpu.matmul %75, %76, %cst_32 {dimension_numbers = #tpu.dot_dimension_numbers<[1], [0], [0], [1], [0, 0, 1, 1], [], []>} : vector<8x16xf32>, vector<16x120xf32>, vector<8x120xf32> -> vector<8x120xf32>
    %78 = arith.addf %74, %77 : vector<8x120xf32>
    %79 = vector.extract_strided_slice %20 {offsets = [112, 0], sizes = [8, 16], strides = [1, 1]} : vector<200x16xf32> to vector<8x16xf32>
    %80 = vector.extract_strided_slice %21 {offsets = [224, 0], sizes = [16, 120], strides = [1, 1]} : vector<400x120xf32> to vector<16x120xf32>
    %cst_33 = arith.constant dense<0.000000e+00> : vector<8x120xf32>
    %81 = tpu.matmul %79, %80, %cst_33 {dimension_numbers = #tpu.dot_dimension_numbers<[1], [0], [0], [1], [0, 0, 1, 1], [], []>} : vector<8x16xf32>, vector<16x120xf32>, vector<8x120xf32> -> vector<8x120xf32>
    %82 = arith.addf %78, %81 : vector<8x120xf32>
    %83 = vector.extract_strided_slice %20 {offsets = [120, 0], sizes = [8, 16], strides = [1, 1]} : vector<200x16xf32> to vector<8x16xf32>
    %84 = vector.extract_strided_slice %21 {offsets = [240, 0], sizes = [16, 120], strides = [1, 1]} : vector<400x120xf32> to vector<16x120xf32>
    %cst_34 = arith.constant dense<0.000000e+00> : vector<8x120xf32>
    %85 = tpu.matmul %83, %84, %cst_34 {dimension_numbers = #tpu.dot_dimension_numbers<[1], [0], [0], [1], [0, 0, 1, 1], [], []>} : vector<8x16xf32>, vector<16x120xf32>, vector<8x120xf32> -> vector<8x120xf32>
    %86 = arith.addf %82, %85 : vector<8x120xf32>
    %87 = vector.extract_strided_slice %20 {offsets = [128, 0], sizes = [8, 16], strides = [1, 1]} : vector<200x16xf32> to vector<8x16xf32>
    %88 = vector.extract_strided_slice %21 {offsets = [256, 0], sizes = [16, 120], strides = [1, 1]} : vector<400x120xf32> to vector<16x120xf32>
    %cst_35 = arith.constant dense<0.000000e+00> : vector<8x120xf32>
    %89 = tpu.matmul %87, %88, %cst_35 {dimension_numbers = #tpu.dot_dimension_numbers<[1], [0], [0], [1], [0, 0, 1, 1], [], []>} : vector<8x16xf32>, vector<16x120xf32>, vector<8x120xf32> -> vector<8x120xf32>
    %90 = arith.addf %86, %89 : vector<8x120xf32>
    %91 = vector.extract_strided_slice %20 {offsets = [136, 0], sizes = [8, 16], strides = [1, 1]} : vector<200x16xf32> to vector<8x16xf32>
    %92 = vector.extract_strided_slice %21 {offsets = [272, 0], sizes = [16, 120], strides = [1, 1]} : vector<400x120xf32> to vector<16x120xf32>
    %cst_36 = arith.constant dense<0.000000e+00> : vector<8x120xf32>
    %93 = tpu.matmul %91, %92, %cst_36 {dimension_numbers = #tpu.dot_dimension_numbers<[1], [0], [0], [1], [0, 0, 1, 1], [], []>} : vector<8x16xf32>, vector<16x120xf32>, vector<8x120xf32> -> vector<8x120xf32>
    %94 = arith.addf %90, %93 : vector<8x120xf32>
    %95 = vector.extract_strided_slice %20 {offsets = [144, 0], sizes = [8, 16], strides = [1, 1]} : vector<200x16xf32> to vector<8x16xf32>
    %96 = vector.extract_strided_slice %21 {offsets = [288, 0], sizes = [16, 120], strides = [1, 1]} : vector<400x120xf32> to vector<16x120xf32>
    %cst_37 = arith.constant dense<0.000000e+00> : vector<8x120xf32>
    %97 = tpu.matmul %95, %96, %cst_37 {dimension_numbers = #tpu.dot_dimension_numbers<[1], [0], [0], [1], [0, 0, 1, 1], [], []>} : vector<8x16xf32>, vector<16x120xf32>, vector<8x120xf32> -> vector<8x120xf32>
    %98 = arith.addf %94, %97 : vector<8x120xf32>
    %99 = vector.extract_strided_slice %20 {offsets = [152, 0], sizes = [8, 16], strides = [1, 1]} : vector<200x16xf32> to vector<8x16xf32>
    %100 = vector.extract_strided_slice %21 {offsets = [304, 0], sizes = [16, 120], strides = [1, 1]} : vector<400x120xf32> to vector<16x120xf32>
    %cst_38 = arith.constant dense<0.000000e+00> : vector<8x120xf32>
    %101 = tpu.matmul %99, %100, %cst_38 {dimension_numbers = #tpu.dot_dimension_numbers<[1], [0], [0], [1], [0, 0, 1, 1], [], []>} : vector<8x16xf32>, vector<16x120xf32>, vector<8x120xf32> -> vector<8x120xf32>
    %102 = arith.addf %98, %101 : vector<8x120xf32>
    %103 = vector.extract_strided_slice %20 {offsets = [160, 0], sizes = [8, 16], strides = [1, 1]} : vector<200x16xf32> to vector<8x16xf32>
    %104 = vector.extract_strided_slice %21 {offsets = [320, 0], sizes = [16, 120], strides = [1, 1]} : vector<400x120xf32> to vector<16x120xf32>
    %cst_39 = arith.constant dense<0.000000e+00> : vector<8x120xf32>
    %105 = tpu.matmul %103, %104, %cst_39 {dimension_numbers = #tpu.dot_dimension_numbers<[1], [0], [0], [1], [0, 0, 1, 1], [], []>} : vector<8x16xf32>, vector<16x120xf32>, vector<8x120xf32> -> vector<8x120xf32>
    %106 = arith.addf %102, %105 : vector<8x120xf32>
    %107 = vector.extract_strided_slice %20 {offsets = [168, 0], sizes = [8, 16], strides = [1, 1]} : vector<200x16xf32> to vector<8x16xf32>
    %108 = vector.extract_strided_slice %21 {offsets = [336, 0], sizes = [16, 120], strides = [1, 1]} : vector<400x120xf32> to vector<16x120xf32>
    %cst_40 = arith.constant dense<0.000000e+00> : vector<8x120xf32>
    %109 = tpu.matmul %107, %108, %cst_40 {dimension_numbers = #tpu.dot_dimension_numbers<[1], [0], [0], [1], [0, 0, 1, 1], [], []>} : vector<8x16xf32>, vector<16x120xf32>, vector<8x120xf32> -> vector<8x120xf32>
    %110 = arith.addf %106, %109 : vector<8x120xf32>
    %111 = vector.extract_strided_slice %20 {offsets = [176, 0], sizes = [8, 16], strides = [1, 1]} : vector<200x16xf32> to vector<8x16xf32>
    %112 = vector.extract_strided_slice %21 {offsets = [352, 0], sizes = [16, 120], strides = [1, 1]} : vector<400x120xf32> to vector<16x120xf32>
    %cst_41 = arith.constant dense<0.000000e+00> : vector<8x120xf32>
    %113 = tpu.matmul %111, %112, %cst_41 {dimension_numbers = #tpu.dot_dimension_numbers<[1], [0], [0], [1], [0, 0, 1, 1], [], []>} : vector<8x16xf32>, vector<16x120xf32>, vector<8x120xf32> -> vector<8x120xf32>
    %114 = arith.addf %110, %113 : vector<8x120xf32>
    %115 = vector.extract_strided_slice %20 {offsets = [184, 0], sizes = [8, 16], strides = [1, 1]} : vector<200x16xf32> to vector<8x16xf32>
    %116 = vector.extract_strided_slice %21 {offsets = [368, 0], sizes = [16, 120], strides = [1, 1]} : vector<400x120xf32> to vector<16x120xf32>
    %cst_42 = arith.constant dense<0.000000e+00> : vector<8x120xf32>
    %117 = tpu.matmul %115, %116, %cst_42 {dimension_numbers = #tpu.dot_dimension_numbers<[1], [0], [0], [1], [0, 0, 1, 1], [], []>} : vector<8x16xf32>, vector<16x120xf32>, vector<8x120xf32> -> vector<8x120xf32>
    %118 = arith.addf %114, %117 : vector<8x120xf32>
    %119 = vector.extract_strided_slice %20 {offsets = [192, 0], sizes = [8, 16], strides = [1, 1]} : vector<200x16xf32> to vector<8x16xf32>
    %120 = vector.extract_strided_slice %21 {offsets = [384, 0], sizes = [16, 120], strides = [1, 1]} : vector<400x120xf32> to vector<16x120xf32>
    %cst_43 = arith.constant dense<0.000000e+00> : vector<8x120xf32>
    %121 = tpu.matmul %119, %120, %cst_43 {dimension_numbers = #tpu.dot_dimension_numbers<[1], [0], [0], [1], [0, 0, 1, 1], [], []>} : vector<8x16xf32>, vector<16x120xf32>, vector<8x120xf32> -> vector<8x120xf32>
    %122 = arith.addf %118, %121 : vector<8x120xf32>
    %c0_44 = arith.constant 0 : index
    %c0_45 = arith.constant 0 : index
    %123 = vector.load %arg4[%c0_44, %c0_45] : memref<1x120xf32, #tpu.memory_space<vmem>>, vector<1x120xf32>
    %124 = vector.broadcast %123 : vector<1x120xf32> to vector<8x120xf32>
    %125 = arith.addf %122, %124 : vector<8x120xf32>
    %cst_46 = arith.constant 0.000000e+00 : f32
    %126 = vector.broadcast %cst_46 : f32 to vector<8x120xf32>
    %127 = arith.maximumf %125, %126 : vector<8x120xf32>
    %c0_47 = arith.constant 0 : index
    %c0_48 = arith.constant 0 : index
    %128 = vector.load %arg5[%c0_47, %c0_48] : memref<120x84xf32, #tpu.memory_space<vmem>>, vector<120x84xf32>
    %cst_49 = arith.constant dense<0.000000e+00> : vector<8x84xf32>
    %129 = tpu.matmul %127, %128, %cst_49 {dimension_numbers = #tpu.dot_dimension_numbers<[1], [0], [0], [1], [0, 0, 1, 1], [], []>} : vector<8x120xf32>, vector<120x84xf32>, vector<8x84xf32> -> vector<8x84xf32>
    %c0_50 = arith.constant 0 : index
    %c0_51 = arith.constant 0 : index
    %130 = vector.load %arg6[%c0_50, %c0_51] : memref<1x84xf32, #tpu.memory_space<vmem>>, vector<1x84xf32>
    %131 = vector.broadcast %130 : vector<1x84xf32> to vector<8x84xf32>
    %132 = arith.addf %129, %131 : vector<8x84xf32>
    %cst_52 = arith.constant 0.000000e+00 : f32
    %133 = vector.broadcast %cst_52 : f32 to vector<8x84xf32>
    %134 = arith.maximumf %132, %133 : vector<8x84xf32>
    %c0_53 = arith.constant 0 : index
    %c0_54 = arith.constant 0 : index
    %135 = vector.load %arg7[%c0_53, %c0_54] : memref<84x10xf32, #tpu.memory_space<vmem>>, vector<84x10xf32>
    %cst_55 = arith.constant dense<0.000000e+00> : vector<8x10xf32>
    %136 = tpu.matmul %134, %135, %cst_55 {dimension_numbers = #tpu.dot_dimension_numbers<[1], [0], [0], [1], [0, 0, 1, 1], [], []>} : vector<8x84xf32>, vector<84x10xf32>, vector<8x10xf32> -> vector<8x10xf32>
    %c0_56 = arith.constant 0 : index
    %c0_57 = arith.constant 0 : index
    %137 = vector.load %arg8[%c0_56, %c0_57] : memref<1x10xf32, #tpu.memory_space<vmem>>, vector<1x10xf32>
    %138 = vector.broadcast %137 : vector<1x10xf32> to vector<8x10xf32>
    %139 = arith.addf %136, %138 : vector<8x10xf32>
    %140 = vector.extract_strided_slice %139 {offsets = [0, 0], sizes = [2, 10], strides = [1, 1]} : vector<8x10xf32> to vector<2x10xf32>
    %c0_58 = arith.constant 0 : index
    %c0_59 = arith.constant 0 : index
    %141 = vector.load %arg9[%c0_58, %c0_59] : memref<2x10xf32, #tpu.memory_space<vmem>>, vector<2x10xf32>
    tpu.vector_store %arg9[%c0_58, %c0_59], %140 {strides = array<i32>} : memref<2x10xf32, #tpu.memory_space<vmem>>, vector<2x10xf32>,
    return
  }
}

</mosaic_0001>

<llo_original>
// kernel: net_forward.2
$region0: #{net_forward.2}
  #allocation0 [shape = 'u32[]', space=smem, size = 0x4, offset = 0x4, fixed_abs, tag = 'smem constant byte address 0x4 - core index']
  #allocation1 [shape = 'u32[144,128]{1,0:T(1,128)}', space=vmem, size = 0x12000, scoped, tag = 'internal scratch']
  %s0 = inlined_call_operand.vmem [shape: f32[4,25,392], index: 0, kind: input, shape index: {}]
  %s1 = inlined_call_operand.hbm [shape: f32[6,25], index: 1, kind: input, shape index: {}]
  %s2 = inlined_call_operand.vmem [shape: f32[6,1], index: 2, kind: input, shape index: {}]
  %s3 = inlined_call_operand.vmem [shape: f32[6,392], index: 3, kind: output, shape index: {}]
  %s4 = sld [smem:[#allocation0]]
  $region26: #{net_forward.2} parent=0
    _
  %s6 = ssub.s32 1, %s4
  %s7 = scalar_select 0, %s6, %s4
  $region1: #{net_forward.2} parent=0
    #allocation2 [shape = 'u8[4096]{0}', space=vmem, size = 0x1000, scoped, tag = 'input window, operand 1, single buffered']
    #allocation3 [shape = 's32[1]{0}', space=sflag, size = 0x4, scoped, tag = 'scoped memory for net_forward.2']
    %8 = vsyncpa [#allocation3], 0
    // Predicated region
    $region2: #{net_forward.2} parent=1 // pred_check
      _
    $region3: #{net_forward.2} parent=1 // pred_check_branch
      %10 = sbr.rel (0) target = $region5
    $region4: #{net_forward.2} parent=1 // pred_region
      _
    $region5: #{net_forward.2} parent=1 // pred_fallthru
      _
    // Predicated region
    $region6: #{net_forward.2} parent=1 // pred_check
      _
    $region7: #{net_forward.2} parent=1 // pred_check_branch
      %12 = sbr.rel (0) target = $region9
    $region8: #{net_forward.2} parent=1 // pred_region
      %s14 = ssub.s32 128, 128
      %15 = vsyncadd [#allocation3], %s14
      %s17 = sshll.u32 [#allocation2], 4
      %s18 = int_to_ptr.vmem [resolvable:$true] %s17
      %20 = dma.hbm_to_vmem [thread:$0]  %s1, 128, %s18, [#allocation3]
    $region9: #{net_forward.2} parent=1 // pred_fallthru
      _
    // Predicated region
    $region10: #{net_forward.2} parent=1 // pred_check
      _
    $region11: #{net_forward.2} parent=1 // pred_check_branch
      %22 = sbr.rel (0) target = $region13
    $region12: #{net_forward.2} parent=1 // pred_region
      _
    $region13: #{net_forward.2} parent=1 // pred_fallthru
      _
    // Predicated region
    $region14: #{net_forward.2} parent=1 // pred_check
      _
    $region15: #{net_forward.2} parent=1 // pred_check_branch
      %24 = sbr.rel (0) target = $region17
    $region16: #{net_forward.2} parent=1 // pred_region
      %25 = dma.done [#allocation3], 128
    $region17: #{net_forward.2} parent=1 // pred_fallthru
      _
    %v26 = vld [vmem:[#allocation2] sm:$0x3f]
    %v27 = vld [vmem:[%s0] sm:$0xff]
    %v28 = vld [vmem:[%s0 + $0x8] sm:$0xff]
    %v29 = vld [vmem:[%s0 + $0x10] sm:$0xff]
    %v30 = vld [vmem:[%s0 + $0x18] sm:$0xff]
    %v31 = vld [vmem:[%s0 + $0x20] sm:$0xff]
    %v32 = vld [vmem:[%s0 + $0x28] sm:$0xff]
    %v33 = vld [vmem:[%s0 + $0x30] sm:$0xff]
    %v34 = vld [vmem:[%s0 + $0x38] sm:$0xff]
    %v35 = vld [vmem:[%s0 + $0x40] sm:$0xff]
    %v36 = vld [vmem:[%s0 + $0x48] sm:$0xff]
    %v37 = vld [vmem:[%s0 + $0x50] sm:$0xff]
    %v38 = vld [vmem:[%s0 + $0x58] sm:$0xff]
    %v39 = vld [vmem:[%s0 + $0x60] sm:$0x1]
    %v40 = vld [vmem:[%s0 + $0x68] sm:$0x1]
    %v41 = vld [vmem:[%s0 + $0x70] sm:$0x1]
    %v42 = vld [vmem:[%s0 + $0x78] sm:$0x1]
    %vm43 = vcmask 203776
    %v45 = vsel %vm43, %v26, 0
    %vm47 = vcmask 1040384
    %v49 = vsel %vm47, %v39, 0
    %v52 = vsel %vm47, %v40, 0
    %v55 = vsel %vm47, %v41, 0
    %v58 = vsel %vm47, %v42, 0
    %60 = vmatprep.subr.mxu0 %v28
    %61 = vmatpush1.msra.mxu0 %v27
    %62 = vmatprep.subr.mxu0 %v32
    %63 = vmatpush1.msra.mxu0 %v31
    %64 = vmatprep.subr.mxu0 %v36
    %65 = vmatpush1.msra.mxu0 %v35
    %66 = vmatprep.subr.mxu0 %v52
    %67 = vmatpush1.msra.mxu0 %v49
    %68 = vmatprep.subr.mxu0 0.0
    %69 = vmatpush1.msra.mxu0 0.0
    %70 = vmatprep.subr.mxu0 0.0
    %71 = vmatpush1.msra.mxu0 0.0
    %72 = vmatprep.subr.mxu0 0.0
    %73 = vmatpush1.msra.mxu0 0.0
    %74 = vmatprep.subr.mxu0 0.0
    %75 = vmatpush1.msra.mxu0 0.0
    %76 = vmatprep.subr.mxu0 0.0
    %77 = vmatpush1.msra.mxu0 0.0
    %78 = vmatprep.subr.mxu0 0.0
    %79 = vmatpush1.msra.mxu0 0.0
    %80 = vmatprep.subr.mxu0 0.0
    %81 = vmatpush1.msra.mxu0 0.0
    %82 = vmatprep.subr.mxu0 0.0
    %83 = vmatpush1.msra.mxu0 0.0
    %84 = vmatprep.subr.mxu0 0.0
    %85 = vmatpush1.msra.mxu0 0.0
    %86 = vmatprep.subr.mxu0 0.0
    %87 = vmatpush1.msra.mxu0 0.0
    %88 = vmatprep.subr.mxu0 0.0
    %89 = vmatpush1.msra.mxu0 0.0
    %90 = vmatprep.subr.mxu0 0.0
    %91 = vmatpush1.msra.mxu0 0.0
    %92 = vmatprep.subr.mxu0 0.0
    %93 = vmatpush1.msra.mxu0 0.0
    %94 = vmatprep.subr.mxu0 0.0
    %95 = vmatpush1.msra.mxu0 0.0
    %96 = vmatprep.subr.mxu0 0.0
    %97 = vmatpush1.msra.mxu0 0.0
    %98 = vmatprep.subr.mxu0 0.0
    %99 = vmatpush1.msra.mxu0 0.0
    %100 = vmatprep.subr.mxu0 0.0
    %101 = vmatpush1.msra.mxu0 0.0
    %102 = vmatprep.subr.mxu0 0.0
    %103 = vmatpush1.msra.mxu0 0.0
    %104 = vmatprep.subr.mxu0 0.0
    %105 = vmatpush1.msra.mxu0 0.0
    %106 = vmatprep.subr.mxu0 0.0
    %107 = vmatpush1.msra.mxu0 0.0
    %108 = vmatprep.subr.mxu0 0.0
    %109 = vmatpush1.msra.mxu0 0.0
    %110 = vmatprep.subr.mxu0 0.0
    %111 = vmatpush1.msra.mxu0 0.0
    %112 = vmatprep.subr.mxu0 0.0
    %113 = vmatpush1.msra.mxu0 0.0
    %114 = vmatprep.subr.mxu0 0.0
    %115 = vmatpush1.msra.mxu0 0.0
    %116 = vmatprep.subr.mxu0 0.0
    %117 = vmatpush1.msra.mxu0 0.0
    %118 = vmatprep.subr.mxu0 0.0
    %119 = vmatpush1.msra.mxu0 0.0
    %120 = vmatprep.subr.mxu0 0.0
    %121 = vmatpush1.msra.mxu0 0.0
    %122 = vmatprep.subr.mxu0 0.0
    %123 = vmatpush1.msra.mxu0 0.0
    %124 = vmatprep.mubr.f32.mxu0 0.0
    %125 = vmatmul.mubr.f32.gmra.mrb[0].mxu0 %v45
    %v126 = vpop.f32.mrb[0].mxu0
    %v127 = vadd.f32 0.0, %v126
    %v128 = vpop.f32.mrb[0].mxu0
    %v129 = vadd.f32 0.0, %v128
    %130 = vdwg.mxu0
    %131 = vmatprep.subr.mxu0 %v30
    %132 = vmatpush1.msra.mxu0 %v29
    %133 = vmatprep.subr.mxu0 %v34
    %134 = vmatpush1.msra.mxu0 %v33
    %135 = vmatprep.subr.mxu0 %v38
    %136 = vmatpush1.msra.mxu0 %v37
    %137 = vmatprep.subr.mxu0 %v58
    %138 = vmatpush1.msra.mxu0 %v55
    %139 = vmatprep.subr.mxu0 0.0
    %140 = vmatpush1.msra.mxu0 0.0
    %141 = vmatprep.subr.mxu0 0.0
    %142 = vmatpush1.msra.mxu0 0.0
    %143 = vmatprep.subr.mxu0 0.0
    %144 = vmatpush1.msra.mxu0 0.0
    %145 = vmatprep.subr.mxu0 0.0
    %146 = vmatpush1.msra.mxu0 0.0
    %147 = vmatprep.subr.mxu0 0.0
    %148 = vmatpush1.msra.mxu0 0.0
    %149 = vmatprep.subr.mxu0 0.0
    %150 = vmatpush1.msra.mxu0 0.0
    %151 = vmatprep.subr.mxu0 0.0
    %152 = vmatpush1.msra.mxu0 0.0
    %153 = vmatprep.subr.mxu0 0.0
    %154 = vmatpush1.msra.mxu0 0.0
    %155 = vmatprep.subr.mxu0 0.0
    %156 = vmatpush1.msra.mxu0 0.0
    %157 = vmatprep.subr.mxu0 0.0
    %158 = vmatpush1.msra.mxu0 0.0
    %159 = vmatprep.subr.mxu0 0.0
    %160 = vmatpush1.msra.mxu0 0.0
    %161 = vmatprep.subr.mxu0 0.0
    %162 = vmatpush1.msra.mxu0 0.0
    %163 = vmatprep.subr.mxu0 0.0
    %164 = vmatpush1.msra.mxu0 0.0
    %165 = vmatprep.subr.mxu0 0.0
    %166 = vmatpush1.msra.mxu0 0.0
    %167 = vmatprep.subr.mxu0 0.0
    %168 = vmatpush1.msra.mxu0 0.0
    %169 = vmatprep.subr.mxu0 0.0
    %170 = vmatpush1.msra.mxu0 0.0
    %171 = vmatprep.subr.mxu0 0.0
    %172 = vmatpush1.msra.mxu0 0.0
    %173 = vmatprep.subr.mxu0 0.0
    %174 = vmatpush1.msra.mxu0 0.0
    %175 = vmatprep.subr.mxu0 0.0
    %176 = vmatpush1.msra.mxu0 0.0
    %177 = vmatprep.subr.mxu0 0.0
    %178 = vmatpush1.msra.mxu0 0.0
    %179 = vmatprep.subr.mxu0 0.0
    %180 = vmatpush1.msra.mxu0 0.0
    %181 = vmatprep.subr.mxu0 0.0
    %182 = vmatpush1.msra.mxu0 0.0
    %183 = vmatprep.subr.mxu0 0.0
    %184 = vmatpush1.msra.mxu0 0.0
    %185 = vmatprep.subr.mxu0 0.0
    %186 = vmatpush1.msra.mxu0 0.0
    %187 = vmatprep.subr.mxu0 0.0
    %188 = vmatpush1.msra.mxu0 0.0
    %189 = vmatprep.subr.mxu0 0.0
    %190 = vmatpush1.msra.mxu0 0.0
    %191 = vmatprep.subr.mxu0 0.0
    %192 = vmatpush1.msra.mxu0 0.0
    %193 = vmatprep.subr.mxu0 0.0
    %194 = vmatpush1.msra.mxu0 0.0
    %195 = vmatprep.mubr.f32.mxu0 0.0
    %196 = vmatmul.mubr.f32.gmra.mrb[0].mxu0 %v45
    %v197 = vpop.f32.mrb[0].mxu0
    %v198 = vadd.f32 0.0, %v197
    %v199 = vpop.f32.mrb[0].mxu0
    %v200 = vadd.f32 0.0, %v199
    %201 = vdwg.mxu0
    %s202 = scalar_lea.vmem %s0, 128
    %v203 = vld [vmem:[%s202] sm:$0xff]
    %v204 = vld [vmem:[%s202 + $0x8] sm:$0xff]
    %v205 = vld [vmem:[%s202 + $0x10] sm:$0xff]
    %v206 = vld [vmem:[%s202 + $0x18] sm:$0xff]
    %v207 = vld [vmem:[%s202 + $0x20] sm:$0xff]
    %v208 = vld [vmem:[%s202 + $0x28] sm:$0xff]
    %v209 = vld [vmem:[%s202 + $0x30] sm:$0xff]
    %v210 = vld [vmem:[%s202 + $0x38] sm:$0xff]
    %v211 = vld [vmem:[%s202 + $0x40] sm:$0xff]
    %v212 = vld [vmem:[%s202 + $0x48] sm:$0xff]
    %v213 = vld [vmem:[%s202 + $0x50] sm:$0xff]
    %v214 = vld [vmem:[%s202 + $0x58] sm:$0xff]
    %v215 = vld [vmem:[%s202 + $0x60] sm:$0x1]
    %v216 = vld [vmem:[%s202 + $0x68] sm:$0x1]
    %v217 = vld [vmem:[%s202 + $0x70] sm:$0x1]
    %v218 = vld [vmem:[%s202 + $0x78] sm:$0x1]
    %v220 = vsel %vm47, %v215, 0
    %v223 = vsel %vm47, %v216, 0
    %v226 = vsel %vm47, %v217, 0
    %v229 = vsel %vm47, %v218, 0
    %231 = vmatprep.subr.mxu0 %v204
    %232 = vmatpush1.msra.mxu0 %v203
    %233 = vmatprep.subr.mxu0 %v208
    %234 = vmatpush1.msra.mxu0 %v207
    %235 = vmatprep.subr.mxu0 %v212
    %236 = vmatpush1.msra.mxu0 %v211
    %237 = vmatprep.subr.mxu0 %v223
    %238 = vmatpush1.msra.mxu0 %v220
    %239 = vmatprep.subr.mxu0 0.0
    %240 = vmatpush1.msra.mxu0 0.0
    %241 = vmatprep.subr.mxu0 0.0
    %242 = vmatpush1.msra.mxu0 0.0
    %243 = vmatprep.subr.mxu0 0.0
    %244 = vmatpush1.msra.mxu0 0.0
    %245 = vmatprep.subr.mxu0 0.0
    %246 = vmatpush1.msra.mxu0 0.0
    %247 = vmatprep.subr.mxu0 0.0
    %248 = vmatpush1.msra.mxu0 0.0
    %249 = vmatprep.subr.mxu0 0.0
    %250 = vmatpush1.msra.mxu0 0.0
    %251 = vmatprep.subr.mxu0 0.0
    %252 = vmatpush1.msra.mxu0 0.0
    %253 = vmatprep.subr.mxu0 0.0
    %254 = vmatpush1.msra.mxu0 0.0
    %255 = vmatprep.subr.mxu0 0.0
    %256 = vmatpush1.msra.mxu0 0.0
    %257 = vmatprep.subr.mxu0 0.0
    %258 = vmatpush1.msra.mxu0 0.0
    %259 = vmatprep.subr.mxu0 0.0
    %260 = vmatpush1.msra.mxu0 0.0
    %261 = vmatprep.subr.mxu0 0.0
    %262 = vmatpush1.msra.mxu0 0.0
    %263 = vmatprep.subr.mxu0 0.0
    %264 = vmatpush1.msra.mxu0 0.0
    %265 = vmatprep.subr.mxu0 0.0
    %266 = vmatpush1.msra.mxu0 0.0
    %267 = vmatprep.subr.mxu0 0.0
    %268 = vmatpush1.msra.mxu0 0.0
    %269 = vmatprep.subr.mxu0 0.0
    %270 = vmatpush1.msra.mxu0 0.0
    %271 = vmatprep.subr.mxu0 0.0
    %272 = vmatpush1.msra.mxu0 0.0
    %273 = vmatprep.subr.mxu0 0.0
    %274 = vmatpush1.msra.mxu0 0.0
    %275 = vmatprep.subr.mxu0 0.0
    %276 = vmatpush1.msra.mxu0 0.0
    %277 = vmatprep.subr.mxu0 0.0
    %278 = vmatpush1.msra.mxu0 0.0
    %279 = vmatprep.subr.mxu0 0.0
    %280 = vmatpush1.msra.mxu0 0.0
    %281 = vmatprep.subr.mxu0 0.0
    %282 = vmatpush1.msra.mxu0 0.0
    %283 = vmatprep.subr.mxu0 0.0
    %284 = vmatpush1.msra.mxu0 0.0
    %285 = vmatprep.subr.mxu0 0.0
    %286 = vmatpush1.msra.mxu0 0.0
    %287 = vmatprep.subr.mxu0 0.0
    %288 = vmatpush1.msra.mxu0 0.0
    %289 = vmatprep.subr.mxu0 0.0
    %290 = vmatpush1.msra.mxu0 0.0
    %291 = vmatprep.subr.mxu0 0.0
    %292 = vmatpush1.msra.mxu0 0.0
    %293 = vmatprep.subr.mxu0 0.0
    %294 = vmatpush1.msra.mxu0 0.0
    %295 = vmatprep.mubr.f32.mxu0 0.0
    %296 = vmatmul.mubr.f32.gmra.mrb[0].mxu0 %v45
    %v297 = vpop.f32.mrb[0].mxu0
    %v298 = vadd.f32 0.0, %v297
    %v299 = vpop.f32.mrb[0].mxu0
    %v300 = vadd.f32 0.0, %v299
    %301 = vdwg.mxu0
    %302 = vmatprep.subr.mxu0 %v206
    %303 = vmatpush1.msra.mxu0 %v205
    %304 = vmatprep.subr.mxu0 %v210
    %305 = vmatpush1.msra.mxu0 %v209
    %306 = vmatprep.subr.mxu0 %v214
    %307 = vmatpush1.msra.mxu0 %v213
    %308 = vmatprep.subr.mxu0 %v229
    %309 = vmatpush1.msra.mxu0 %v226
    %310 = vmatprep.subr.mxu0 0.0
    %311 = vmatpush1.msra.mxu0 0.0
    %312 = vmatprep.subr.mxu0 0.0
    %313 = vmatpush1.msra.mxu0 0.0
    %314 = vmatprep.subr.mxu0 0.0
    %315 = vmatpush1.msra.mxu0 0.0
    %316 = vmatprep.subr.mxu0 0.0
    %317 = vmatpush1.msra.mxu0 0.0
    %318 = vmatprep.subr.mxu0 0.0
    %319 = vmatpush1.msra.mxu0 0.0
    %320 = vmatprep.subr.mxu0 0.0
    %321 = vmatpush1.msra.mxu0 0.0
    %322 = vmatprep.subr.mxu0 0.0
    %323 = vmatpush1.msra.mxu0 0.0
    %324 = vmatprep.subr.mxu0 0.0
    %325 = vmatpush1.msra.mxu0 0.0
    %326 = vmatprep.subr.mxu0 0.0
    %327 = vmatpush1.msra.mxu0 0.0
    %328 = vmatprep.subr.mxu0 0.0
    %329 = vmatpush1.msra.mxu0 0.0
    %330 = vmatprep.subr.mxu0 0.0
    %331 = vmatpush1.msra.mxu0 0.0
    %332 = vmatprep.subr.mxu0 0.0
    %333 = vmatpush1.msra.mxu0 0.0
    %334 = vmatprep.subr.mxu0 0.0
    %335 = vmatpush1.msra.mxu0 0.0
    %336 = vmatprep.subr.mxu0 0.0
    %337 = vmatpush1.msra.mxu0 0.0
    %338 = vmatprep.subr.mxu0 0.0
    %339 = vmatpush1.msra.mxu0 0.0
    %340 = vmatprep.subr.mxu0 0.0
    %341 = vmatpush1.msra.mxu0 0.0
    %342 = vmatprep.subr.mxu0 0.0
    %343 = vmatpush1.msra.mxu0 0.0
    %344 = vmatprep.subr.mxu0 0.0
    %345 = vmatpush1.msra.mxu0 0.0
    %346 = vmatprep.subr.mxu0 0.0
    %347 = vmatpush1.msra.mxu0 0.0
    %348 = vmatprep.subr.mxu0 0.0
    %349 = vmatpush1.msra.mxu0 0.0
    %350 = vmatprep.subr.mxu0 0.0
    %351 = vmatpush1.msra.mxu0 0.0
    %352 = vmatprep.subr.mxu0 0.0
    %353 = vmatpush1.msra.mxu0 0.0
    %354 = vmatprep.subr.mxu0 0.0
    %355 = vmatpush1.msra.mxu0 0.0
    %356 = vmatprep.subr.mxu0 0.0
    %357 = vmatpush1.msra.mxu0 0.0
    %358 = vmatprep.subr.mxu0 0.0
    %359 = vmatpush1.msra.mxu0 0.0
    %360 = vmatprep.subr.mxu0 0.0
    %361 = vmatpush1.msra.mxu0 0.0
    %362 = vmatprep.subr.mxu0 0.0
    %363 = vmatpush1.msra.mxu0 0.0
    %364 = vmatprep.subr.mxu0 0.0
    %365 = vmatpush1.msra.mxu0 0.0
    %366 = vmatprep.mubr.f32.mxu0 0.0
    %367 = vmatmul.mubr.f32.gmra.mrb[0].mxu0 %v45
    %v368 = vpop.f32.mrb[0].mxu0
    %v369 = vadd.f32 0.0, %v368
    %v370 = vpop.f32.mrb[0].mxu0
    %v371 = vadd.f32 0.0, %v370
    %372 = vdwg.mxu0
    %v373 = vmax.f32 %v127, %v298
    %v374 = vmax.f32 %v129, %v300
    %v375 = vmax.f32 %v198, %v369
    %v376 = vmax.f32 %v200, %v371
    %s377 = scalar_lea.vmem %s0, 256
    %v378 = vld [vmem:[%s377] sm:$0xff]
    %v379 = vld [vmem:[%s377 + $0x8] sm:$0xff]
    %v380 = vld [vmem:[%s377 + $0x10] sm:$0xff]
    %v381 = vld [vmem:[%s377 + $0x18] sm:$0xff]
    %v382 = vld [vmem:[%s377 + $0x20] sm:$0xff]
    %v383 = vld [vmem:[%s377 + $0x28] sm:$0xff]
    %v384 = vld [vmem:[%s377 + $0x30] sm:$0xff]
    %v385 = vld [vmem:[%s377 + $0x38] sm:$0xff]
    %v386 = vld [vmem:[%s377 + $0x40] sm:$0xff]
    %v387 = vld [vmem:[%s377 + $0x48] sm:$0xff]
    %v388 = vld [vmem:[%s377 + $0x50] sm:$0xff]
    %v389 = vld [vmem:[%s377 + $0x58] sm:$0xff]
    %v390 = vld [vmem:[%s377 + $0x60] sm:$0x1]
    %v391 = vld [vmem:[%s377 + $0x68] sm:$0x1]
    %v392 = vld [vmem:[%s377 + $0x70] sm:$0x1]
    %v393 = vld [vmem:[%s377 + $0x78] sm:$0x1]
    %v395 = vsel %vm47, %v390, 0
    %v398 = vsel %vm47, %v391, 0
    %v401 = vsel %vm47, %v392, 0
    %v404 = vsel %vm47, %v393, 0
    %406 = vmatprep.subr.mxu0 %v379
    %407 = vmatpush1.msra.mxu0 %v378
    %408 = vmatprep.subr.mxu0 %v383
    %409 = vmatpush1.msra.mxu0 %v382
    %410 = vmatprep.subr.mxu0 %v387
    %411 = vmatpush1.msra.mxu0 %v386
    %412 = vmatprep.subr.mxu0 %v398
    %413 = vmatpush1.msra.mxu0 %v395
    %414 = vmatprep.subr.mxu0 0.0
    %415 = vmatpush1.msra.mxu0 0.0
    %416 = vmatprep.subr.mxu0 0.0
    %417 = vmatpush1.msra.mxu0 0.0
    %418 = vmatprep.subr.mxu0 0.0
    %419 = vmatpush1.msra.mxu0 0.0
    %420 = vmatprep.subr.mxu0 0.0
    %421 = vmatpush1.msra.mxu0 0.0
    %422 = vmatprep.subr.mxu0 0.0
    %423 = vmatpush1.msra.mxu0 0.0
    %424 = vmatprep.subr.mxu0 0.0
    %425 = vmatpush1.msra.mxu0 0.0
    %426 = vmatprep.subr.mxu0 0.0
    %427 = vmatpush1.msra.mxu0 0.0
    %428 = vmatprep.subr.mxu0 0.0
    %429 = vmatpush1.msra.mxu0 0.0
    %430 = vmatprep.subr.mxu0 0.0
    %431 = vmatpush1.msra.mxu0 0.0
    %432 = vmatprep.subr.mxu0 0.0
    %433 = vmatpush1.msra.mxu0 0.0
    %434 = vmatprep.subr.mxu0 0.0
    %435 = vmatpush1.msra.mxu0 0.0
    %436 = vmatprep.subr.mxu0 0.0
    %437 = vmatpush1.msra.mxu0 0.0
    %438 = vmatprep.subr.mxu0 0.0
    %439 = vmatpush1.msra.mxu0 0.0
    %440 = vmatprep.subr.mxu0 0.0
    %441 = vmatpush1.msra.mxu0 0.0
    %442 = vmatprep.subr.mxu0 0.0
    %443 = vmatpush1.msra.mxu0 0.0
    %444 = vmatprep.subr.mxu0 0.0
    %445 = vmatpush1.msra.mxu0 0.0
    %446 = vmatprep.subr.mxu0 0.0
    %447 = vmatpush1.msra.mxu0 0.0
    %448 = vmatprep.subr.mxu0 0.0
    %449 = vmatpush1.msra.mxu0 0.0
    %450 = vmatprep.subr.mxu0 0.0
    %451 = vmatpush1.msra.mxu0 0.0
    %452 = vmatprep.subr.mxu0 0.0
    %453 = vmatpush1.msra.mxu0 0.0
    %454 = vmatprep.subr.mxu0 0.0
    %455 = vmatpush1.msra.mxu0 0.0
    %456 = vmatprep.subr.mxu0 0.0
    %457 = vmatpush1.msra.mxu0 0.0
    %458 = vmatprep.subr.mxu0 0.0
    %459 = vmatpush1.msra.mxu0 0.0
    %460 = vmatprep.subr.mxu0 0.0
    %461 = vmatpush1.msra.mxu0 0.0
    %462 = vmatprep.subr.mxu0 0.0
    %463 = vmatpush1.msra.mxu0 0.0
    %464 = vmatprep.subr.mxu0 0.0
    %465 = vmatpush1.msra.mxu0 0.0
    %466 = vmatprep.subr.mxu0 0.0
    %467 = vmatpush1.msra.mxu0 0.0
    %468 = vmatprep.subr.mxu0 0.0
    %469 = vmatpush1.msra.mxu0 0.0
    %470 = vmatprep.mubr.f32.mxu0 0.0
    %471 = vmatmul.mubr.f32.gmra.mrb[0].mxu0 %v45
    %v472 = vpop.f32.mrb[0].mxu0
    %v473 = vadd.f32 0.0, %v472
    %v474 = vpop.f32.mrb[0].mxu0
    %v475 = vadd.f32 0.0, %v474
    %476 = vdwg.mxu0
    %477 = vmatprep.subr.mxu0 %v381
    %478 = vmatpush1.msra.mxu0 %v380
    %479 = vmatprep.subr.mxu0 %v385
    %480 = vmatpush1.msra.mxu0 %v384
    %481 = vmatprep.subr.mxu0 %v389
    %482 = vmatpush1.msra.mxu0 %v388
    %483 = vmatprep.subr.mxu0 %v404
    %484 = vmatpush1.msra.mxu0 %v401
    %485 = vmatprep.subr.mxu0 0.0
    %486 = vmatpush1.msra.mxu0 0.0
    %487 = vmatprep.subr.mxu0 0.0
    %488 = vmatpush1.msra.mxu0 0.0
    %489 = vmatprep.subr.mxu0 0.0
    %490 = vmatpush1.msra.mxu0 0.0
    %491 = vmatprep.subr.mxu0 0.0
    %492 = vmatpush1.msra.mxu0 0.0
    %493 = vmatprep.subr.mxu0 0.0
    %494 = vmatpush1.msra.mxu0 0.0
    %495 = vmatprep.subr.mxu0 0.0
    %496 = vmatpush1.msra.mxu0 0.0
    %497 = vmatprep.subr.mxu0 0.0
    %498 = vmatpush1.msra.mxu0 0.0
    %499 = vmatprep.subr.mxu0 0.0
    %500 = vmatpush1.msra.mxu0 0.0
    %501 = vmatprep.subr.mxu0 0.0
    %502 = vmatpush1.msra.mxu0 0.0
    %503 = vmatprep.subr.mxu0 0.0
    %504 = vmatpush1.msra.mxu0 0.0
    %505 = vmatprep.subr.mxu0 0.0
    %506 = vmatpush1.msra.mxu0 0.0
    %507 = vmatprep.subr.mxu0 0.0
    %508 = vmatpush1.msra.mxu0 0.0
    %509 = vmatprep.subr.mxu0 0.0
    %510 = vmatpush1.msra.mxu0 0.0
    %511 = vmatprep.subr.mxu0 0.0
    %512 = vmatpush1.msra.mxu0 0.0
    %513 = vmatprep.subr.mxu0 0.0
    %514 = vmatpush1.msra.mxu0 0.0
    %515 = vmatprep.subr.mxu0 0.0
    %516 = vmatpush1.msra.mxu0 0.0
    %517 = vmatprep.subr.mxu0 0.0
    %518 = vmatpush1.msra.mxu0 0.0
    %519 = vmatprep.subr.mxu0 0.0
    %520 = vmatpush1.msra.mxu0 0.0
    %521 = vmatprep.subr.mxu0 0.0
    %522 = vmatpush1.msra.mxu0 0.0
    %523 = vmatprep.subr.mxu0 0.0
    %524 = vmatpush1.msra.mxu0 0.0
    %525 = vmatprep.subr.mxu0 0.0
    %526 = vmatpush1.msra.mxu0 0.0
    %527 = vmatprep.subr.mxu0 0.0
    %528 = vmatpush1.msra.mxu0 0.0
    %529 = vmatprep.subr.mxu0 0.0
    %530 = vmatpush1.msra.mxu0 0.0
    %531 = vmatprep.subr.mxu0 0.0
    %532 = vmatpush1.msra.mxu0 0.0
    %533 = vmatprep.subr.mxu0 0.0
    %534 = vmatpush1.msra.mxu0 0.0
    %535 = vmatprep.subr.mxu0 0.0
    %536 = vmatpush1.msra.mxu0 0.0
    %537 = vmatprep.subr.mxu0 0.0
    %538 = vmatpush1.msra.mxu0 0.0
    %539 = vmatprep.subr.mxu0 0.0
    %540 = vmatpush1.msra.mxu0 0.0
    %541 = vmatprep.mubr.f32.mxu0 0.0
    %542 = vmatmul.mubr.f32.gmra.mrb[0].mxu0 %v45
    %v543 = vpop.f32.mrb[0].mxu0
    %v544 = vadd.f32 0.0, %v543
    %v545 = vpop.f32.mrb[0].mxu0
    %v546 = vadd.f32 0.0, %v545
    %547 = vdwg.mxu0
    %v548 = vmax.f32 %v373, %v473
    %v549 = vmax.f32 %v374, %v475
    %v550 = vmax.f32 %v375, %v544
    %v551 = vmax.f32 %v376, %v546
    %s552 = scalar_lea.vmem %s0, 384
    %v553 = vld [vmem:[%s552] sm:$0xff]
    %v554 = vld [vmem:[%s552 + $0x8] sm:$0xff]
    %v555 = vld [vmem:[%s552 + $0x10] sm:$0xff]
    %v556 = vld [vmem:[%s552 + $0x18] sm:$0xff]
    %v557 = vld [vmem:[%s552 + $0x20] sm:$0xff]
    %v558 = vld [vmem:[%s552 + $0x28] sm:$0xff]
    %v559 = vld [vmem:[%s552 + $0x30] sm:$0xff]
    %v560 = vld [vmem:[%s552 + $0x38] sm:$0xff]
    %v561 = vld [vmem:[%s552 + $0x40] sm:$0xff]
    %v562 = vld [vmem:[%s552 + $0x48] sm:$0xff]
    %v563 = vld [vmem:[%s552 + $0x50] sm:$0xff]
    %v564 = vld [vmem:[%s552 + $0x58] sm:$0xff]
    %v565 = vld [vmem:[%s552 + $0x60] sm:$0x1]
    %v566 = vld [vmem:[%s552 + $0x68] sm:$0x1]
    %v567 = vld [vmem:[%s552 + $0x70] sm:$0x1]
    %v568 = vld [vmem:[%s552 + $0x78] sm:$0x1]
    %v570 = vsel %vm47, %v565, 0
    %v573 = vsel %vm47, %v566, 0
    %v576 = vsel %vm47, %v567, 0
    %v579 = vsel %vm47, %v568, 0
    %581 = vmatprep.subr.mxu0 %v554
    %582 = vmatpush1.msra.mxu0 %v553
    %583 = vmatprep.subr.mxu0 %v558
    %584 = vmatpush1.msra.mxu0 %v557
    %585 = vmatprep.subr.mxu0 %v562
    %586 = vmatpush1.msra.mxu0 %v561
    %587 = vmatprep.subr.mxu0 %v573
    %588 = vmatpush1.msra.mxu0 %v570
    %589 = vmatprep.subr.mxu0 0.0
    %590 = vmatpush1.msra.mxu0 0.0
    %591 = vmatprep.subr.mxu0 0.0
    %592 = vmatpush1.msra.mxu0 0.0
    %593 = vmatprep.subr.mxu0 0.0
    %594 = vmatpush1.msra.mxu0 0.0
    %595 = vmatprep.subr.mxu0 0.0
    %596 = vmatpush1.msra.mxu0 0.0
    %597 = vmatprep.subr.mxu0 0.0
    %598 = vmatpush1.msra.mxu0 0.0
    %599 = vmatprep.subr.mxu0 0.0
    %600 = vmatpush1.msra.mxu0 0.0
    %601 = vmatprep.subr.mxu0 0.0
    %602 = vmatpush1.msra.mxu0 0.0
    %603 = vmatprep.subr.mxu0 0.0
    %604 = vmatpush1.msra.mxu0 0.0
    %605 = vmatprep.subr.mxu0 0.0
    %606 = vmatpush1.msra.mxu0 0.0
    %607 = vmatprep.subr.mxu0 0.0
    %608 = vmatpush1.msra.mxu0 0.0
    %609 = vmatprep.subr.mxu0 0.0
    %610 = vmatpush1.msra.mxu0 0.0
    %611 = vmatprep.subr.mxu0 0.0
    %612 = vmatpush1.msra.mxu0 0.0
    %613 = vmatprep.subr.mxu0 0.0
    %614 = vmatpush1.msra.mxu0 0.0
    %615 = vmatprep.subr.mxu0 0.0
    %616 = vmatpush1.msra.mxu0 0.0
    %617 = vmatprep.subr.mxu0 0.0
    %618 = vmatpush1.msra.mxu0 0.0
    %619 = vmatprep.subr.mxu0 0.0
    %620 = vmatpush1.msra.mxu0 0.0
    %621 = vmatprep.subr.mxu0 0.0
    %622 = vmatpush1.msra.mxu0 0.0
    %623 = vmatprep.subr.mxu0 0.0
    %624 = vmatpush1.msra.mxu0 0.0
    %625 = vmatprep.subr.mxu0 0.0
    %626 = vmatpush1.msra.mxu0 0.0
    %627 = vmatprep.subr.mxu0 0.0
    %628 = vmatpush1.msra.mxu0 0.0
    %629 = vmatprep.subr.mxu0 0.0
    %630 = vmatpush1.msra.mxu0 0.0
    %631 = vmatprep.subr.mxu0 0.0
    %632 = vmatpush1.msra.mxu0 0.0
    %633 = vmatprep.subr.mxu0 0.0
    %634 = vmatpush1.msra.mxu0 0.0
    %635 = vmatprep.subr.mxu0 0.0
    %636 = vmatpush1.msra.mxu0 0.0
    %637 = vmatprep.subr.mxu0 0.0
    %638 = vmatpush1.msra.mxu0 0.0
    %639 = vmatprep.subr.mxu0 0.0
    %640 = vmatpush1.msra.mxu0 0.0
    %641 = vmatprep.subr.mxu0 0.0
    %642 = vmatpush1.msra.mxu0 0.0
    %643 = vmatprep.subr.mxu0 0.0
    %644 = vmatpush1.msra.mxu0 0.0
    %645 = vmatprep.mubr.f32.mxu0 0.0
    %646 = vmatmul.mubr.f32.gmra.mrb[0].mxu0 %v45
    %v647 = vpop.f32.mrb[0].mxu0
    %v648 = vadd.f32 0.0, %v647
    %v649 = vpop.f32.mrb[0].mxu0
    %v650 = vadd.f32 0.0, %v649
    %651 = vdwg.mxu0
    %652 = vmatprep.subr.mxu0 %v556
    %653 = vmatpush1.msra.mxu0 %v555
    %654 = vmatprep.subr.mxu0 %v560
    %655 = vmatpush1.msra.mxu0 %v559
    %656 = vmatprep.subr.mxu0 %v564
    %657 = vmatpush1.msra.mxu0 %v563
    %658 = vmatprep.subr.mxu0 %v579
    %659 = vmatpush1.msra.mxu0 %v576
    %660 = vmatprep.subr.mxu0 0.0
    %661 = vmatpush1.msra.mxu0 0.0
    %662 = vmatprep.subr.mxu0 0.0
    %663 = vmatpush1.msra.mxu0 0.0
    %664 = vmatprep.subr.mxu0 0.0
    %665 = vmatpush1.msra.mxu0 0.0
    %666 = vmatprep.subr.mxu0 0.0
    %667 = vmatpush1.msra.mxu0 0.0
    %668 = vmatprep.subr.mxu0 0.0
    %669 = vmatpush1.msra.mxu0 0.0
    %670 = vmatprep.subr.mxu0 0.0
    %671 = vmatpush1.msra.mxu0 0.0
    %672 = vmatprep.subr.mxu0 0.0
    %673 = vmatpush1.msra.mxu0 0.0
    %674 = vmatprep.subr.mxu0 0.0
    %675 = vmatpush1.msra.mxu0 0.0
    %676 = vmatprep.subr.mxu0 0.0
    %677 = vmatpush1.msra.mxu0 0.0
    %678 = vmatprep.subr.mxu0 0.0
    %679 = vmatpush1.msra.mxu0 0.0
    %680 = vmatprep.subr.mxu0 0.0
    %681 = vmatpush1.msra.mxu0 0.0
    %682 = vmatprep.subr.mxu0 0.0
    %683 = vmatpush1.msra.mxu0 0.0
    %684 = vmatprep.subr.mxu0 0.0
    %685 = vmatpush1.msra.mxu0 0.0
    %686 = vmatprep.subr.mxu0 0.0
    %687 = vmatpush1.msra.mxu0 0.0
    %688 = vmatprep.subr.mxu0 0.0
    %689 = vmatpush1.msra.mxu0 0.0
    %690 = vmatprep.subr.mxu0 0.0
    %691 = vmatpush1.msra.mxu0 0.0
    %692 = vmatprep.subr.mxu0 0.0
    %693 = vmatpush1.msra.mxu0 0.0
    %694 = vmatprep.subr.mxu0 0.0
    %695 = vmatpush1.msra.mxu0 0.0
    %696 = vmatprep.subr.mxu0 0.0
    %697 = vmatpush1.msra.mxu0 0.0
    %698 = vmatprep.subr.mxu0 0.0
    %699 = vmatpush1.msra.mxu0 0.0
    %700 = vmatprep.subr.mxu0 0.0
    %701 = vmatpush1.msra.mxu0 0.0
    %702 = vmatprep.subr.mxu0 0.0
    %703 = vmatpush1.msra.mxu0 0.0
    %704 = vmatprep.subr.mxu0 0.0
    %705 = vmatpush1.msra.mxu0 0.0
    %706 = vmatprep.subr.mxu0 0.0
    %707 = vmatpush1.msra.mxu0 0.0
    %708 = vmatprep.subr.mxu0 0.0
    %709 = vmatpush1.msra.mxu0 0.0
    %710 = vmatprep.subr.mxu0 0.0
    %711 = vmatpush1.msra.mxu0 0.0
    %712 = vmatprep.subr.mxu0 0.0
    %713 = vmatpush1.msra.mxu0 0.0
    %714 = vmatprep.subr.mxu0 0.0
    %715 = vmatpush1.msra.mxu0 0.0
    %716 = vmatprep.mubr.f32.mxu0 0.0
    %717 = vmatmul.mubr.f32.gmra.mrb[0].mxu0 %v45
    %v718 = vpop.f32.mrb[0].mxu0
    %v719 = vadd.f32 0.0, %v718
    %v720 = vpop.f32.mrb[0].mxu0
    %v721 = vadd.f32 0.0, %v720
    %722 = vdwg.mxu0
    %v723 = vmax.f32 %v548, %v648
    %v724 = vmax.f32 %v549, %v650
    %v725 = vmax.f32 %v550, %v719
    %v726 = vmax.f32 %v551, %v721
    %v727 = vld [vmem:[%s2] sm:$0x3f]
    %729 = vset.pattern.permute.xlu0 0
    %730 = vperm.xlu0 %729, %v727
    %v731 = vpop.permute.xlu0 %730
    %v733 = vadd.f32 %v723, %v731
    %v734 = vadd.f32 %v724, %v731
    %v735 = vadd.f32 %v725, %v731
    %v736 = vadd.f32 %v726, %v731
    %v737 = vmax.f32 %v733, 0.0
    %v738 = vmax.f32 %v734, 0.0
    %v739 = vmax.f32 %v735, 0.0
    %v740 = vmax.f32 %v736, 0.0
    %741 = vst [vmem:[%s3] sm:$0x3f] %v737
    %742 = vst [vmem:[%s3 + $0x8] sm:$0x3f] %v738
    %743 = vst [vmem:[%s3 + $0x10] sm:$0x3f] %v739
    %vm744 = vcmask 62464
    %745 = vst.msk [vmem:[%s3 + $0x18] sm:$0x3f] %vm744, %v740
    // Predicated region
    $region18: #{net_forward.2} parent=1 // pred_check
      _
    $region19: #{net_forward.2} parent=1 // pred_check_branch
      %747 = sbr.rel (0) target = $region21
    $region20: #{net_forward.2} parent=1 // pred_region
      _
    $region21: #{net_forward.2} parent=1 // pred_fallthru
      _
    // Predicated region
    $region22: #{net_forward.2} parent=1 // pred_check
      _
    $region23: #{net_forward.2} parent=1 // pred_check_branch
      %749 = sbr.rel (0) target = $region25
    $region24: #{net_forward.2} parent=1 // pred_region
      _
    $region25: #{net_forward.2} parent=1 // pred_fallthru
      _
    %750 = vsyncpa [#allocation3], 1

// kernel: net_forward.3
$region0: #{net_forward.3}
  #allocation0 [shape = 'u32[]', space=smem, size = 0x4, offset = 0x4, fixed_abs, tag = 'smem constant byte address 0x4 - core index']
  #allocation1 [shape = 'u32[144,128]{1,0:T(1,128)}', space=vmem, size = 0x12000, scoped, tag = 'internal scratch']
  %s0 = inlined_call_operand.vmem [shape: f32[4,200,150], index: 0, kind: input, shape index: {}]
  %s1 = inlined_call_operand.vmem [shape: f32[150,16], index: 1, kind: input, shape index: {}]
  %s2 = inlined_call_operand.vmem [shape: f32[1,16], index: 2, kind: input, shape index: {}]
  %s3 = inlined_call_operand.vmem [shape: f32[400,120], index: 3, kind: input, shape index: {}]
  %s4 = inlined_call_operand.vmem [shape: f32[1,120], index: 4, kind: input, shape index: {}]
  %s5 = inlined_call_operand.vmem [shape: f32[120,84], index: 5, kind: input, shape index: {}]
  %s6 = inlined_call_operand.vmem [shape: f32[1,84], index: 6, kind: input, shape index: {}]
  %s7 = inlined_call_operand.vmem [shape: f32[84,10], index: 7, kind: input, shape index: {}]
  %s8 = inlined_call_operand.vmem [shape: f32[1,10], index: 8, kind: input, shape index: {}]
  %s9 = inlined_call_operand.hbm [shape: f32[2,10], index: 9, kind: output, shape index: {}]
  %s10 = sld [smem:[#allocation0]]
  $region46: #{net_forward.3} parent=0
    _
  %s12 = ssub.s32 1, %s10
  %s13 = scalar_select 0, %s12, %s10
  $region1: #{net_forward.3} parent=0
    #allocation2 [shape = 'u8[1024]{0}', space=vmem, size = 0x400, scoped, tag = 'output window, operand 0, single buffered']
    #allocation3 [shape = 's32[1]{0}', space=sflag, size = 0x4, scoped, tag = 'scoped memory for net_forward.3']
    %14 = vsyncpa [#allocation3], 0
    // Predicated region
    $region2: #{net_forward.3} parent=1 // pred_check
      _
    $region3: #{net_forward.3} parent=1 // pred_check_branch
      %16 = sbr.rel (0) target = $region5
    $region4: #{net_forward.3} parent=1 // pred_region
      _
    $region5: #{net_forward.3} parent=1 // pred_fallthru
      _
    // Predicated region
    $region6: #{net_forward.3} parent=1 // pred_check
      _
    $region7: #{net_forward.3} parent=1 // pred_check_branch
      %18 = sbr.rel (0) target = $region9
    $region8: #{net_forward.3} parent=1 // pred_region
      _
    $region9: #{net_forward.3} parent=1 // pred_fallthru
      _
    // Predicated region
    $region10: #{net_forward.3} parent=1 // pred_check
      _
    $region11: #{net_forward.3} parent=1 // pred_check_branch
      %20 = sbr.rel (0) target = $region13
    $region12: #{net_forward.3} parent=1 // pred_region
      _
    $region13: #{net_forward.3} parent=1 // pred_fallthru
      _
    // Predicated region
    $region14: #{net_forward.3} parent=1 // pred_check
      _
    $region15: #{net_forward.3} parent=1 // pred_check_branch
      %22 = sbr.rel (0) target = $region17
    $region16: #{net_forward.3} parent=1 // pred_region
      _
    $region17: #{net_forward.3} parent=1 // pred_fallthru
      _
    // Predicated region
    $region18: #{net_forward.3} parent=1 // pred_check
      _
    $region19: #{net_forward.3} parent=1 // pred_check_branch
      %24 = sbr.rel (0) target = $region21
    $region20: #{net_forward.3} parent=1 // pred_region
      _
    $region21: #{net_forward.3} parent=1 // pred_fallthru
      _
    // Predicated region
    $region22: #{net_forward.3} parent=1 // pred_check
      _
    $region23: #{net_forward.3} parent=1 // pred_check_branch
      %26 = sbr.rel (0) target = $region25
    $region24: #{net_forward.3} parent=1 // pred_region
      _
    $region25: #{net_forward.3} parent=1 // pred_fallthru
      _
    // Predicated region
    $region26: #{net_forward.3} parent=1 // pred_check
      _
    $region27: #{net_forward.3} parent=1 // pred_check_branch
      %28 = sbr.rel (0) target = $region29
    $region28: #{net_forward.3} parent=1 // pred_region
      _
    $region29: #{net_forward.3} parent=1 // pred_fallthru
      _
    // Predicated region
    $region30: #{net_forward.3} parent=1 // pred_check
      _
    $region31: #{net_forward.3} parent=1 // pred_check_branch
      %30 = sbr.rel (0) target = $region33
    $region32: #{net_forward.3} parent=1 // pred_region
      _
    $region33: #{net_forward.3} parent=1 // pred_fallthru
      _
    // Predicated region
    $region34: #{net_forward.3} parent=1 // pred_check
      _
    $region35: #{net_forward.3} parent=1 // pred_check_branch
      %32 = sbr.rel (0) target = $region37
    $region36: #{net_forward.3} parent=1 // pred_region
      _
    $region37: #{net_forward.3} parent=1 // pred_fallthru
      _
    %v33 = vld [vmem:[%s1] sm:$0xff]
    %v34 = vld [vmem:[%s1 + $0x8] sm:$0xff]
    %v35 = vld [vmem:[%s1 + $0x10] sm:$0xff]
    %v36 = vld [vmem:[%s1 + $0x18] sm:$0xff]
    %v37 = vld [vmem:[%s1 + $0x20] sm:$0xff]
    %v38 = vld [vmem:[%s1 + $0x28] sm:$0xff]
    %v39 = vld [vmem:[%s1 + $0x30] sm:$0xff]
    %v40 = vld [vmem:[%s1 + $0x38] sm:$0xff]
    %v41 = vld [vmem:[%s1 + $0x40] sm:$0xff]
    %v42 = vld [vmem:[%s1 + $0x48] sm:$0xff]
    %v43 = vld [vmem:[%s1 + $0x50] sm:$0xff]
    %v44 = vld [vmem:[%s1 + $0x58] sm:$0xff]
    %v45 = vld [vmem:[%s1 + $0x60] sm:$0xff]
    %v46 = vld [vmem:[%s1 + $0x68] sm:$0xff]
    %v47 = vld [vmem:[%s1 + $0x70] sm:$0xff]
    %v48 = vld [vmem:[%s1 + $0x78] sm:$0xff]
    %v49 = vld [vmem:[%s1 + $0x80] sm:$0xff]
    %v50 = vld [vmem:[%s1 + $0x88] sm:$0xff]
    %v51 = vld [vmem:[%s1 + $0x90] sm:$0x3f]
    %v52 = vld [vmem:[%s0] sm:$0xff]
    %v53 = vld [vmem:[%s0 + $0x8] sm:$0xff]
    %v54 = vld [vmem:[%s0 + $0x10] sm:$0xff]
    %v55 = vld [vmem:[%s0 + $0x18] sm:$0xff]
    %v56 = vld [vmem:[%s0 + $0x20] sm:$0xff]
    %v57 = vld [vmem:[%s0 + $0x28] sm:$0xff]
    %v58 = vld [vmem:[%s0 + $0x30] sm:$0xff]
    %v59 = vld [vmem:[%s0 + $0x38] sm:$0xff]
    %v60 = vld [vmem:[%s0 + $0x40] sm:$0xff]
    %v61 = vld [vmem:[%s0 + $0x48] sm:$0xff]
    %v62 = vld [vmem:[%s0 + $0x50] sm:$0xff]
    %v63 = vld [vmem:[%s0 + $0x58] sm:$0xff]
    %v64 = vld [vmem:[%s0 + $0x60] sm:$0xff]
    %v65 = vld [vmem:[%s0 + $0x68] sm:$0xff]
    %v66 = vld [vmem:[%s0 + $0x70] sm:$0xff]
    %v67 = vld [vmem:[%s0 + $0x78] sm:$0xff]
    %v68 = vld [vmem:[%s0 + $0x80] sm:$0xff]
    %v69 = vld [vmem:[%s0 + $0x88] sm:$0xff]
    %v70 = vld [vmem:[%s0 + $0x90] sm:$0xff]
    %v71 = vld [vmem:[%s0 + $0x98] sm:$0xff]
    %v72 = vld [vmem:[%s0 + $0xa0] sm:$0xff]
    %v73 = vld [vmem:[%s0 + $0xa8] sm:$0xff]
    %v74 = vld [vmem:[%s0 + $0xb0] sm:$0xff]
    %v75 = vld [vmem:[%s0 + $0xb8] sm:$0xff]
    %v76 = vld [vmem:[%s0 + $0xc0] sm:$0xff]
    %v77 = vld [vmem:[%s0 + $0xc8] sm:$0xff]
    %v78 = vld [vmem:[%s0 + $0xd0] sm:$0xff]
    %v79 = vld [vmem:[%s0 + $0xd8] sm:$0xff]
    %v80 = vld [vmem:[%s0 + $0xe0] sm:$0xff]
    %v81 = vld [vmem:[%s0 + $0xe8] sm:$0xff]
    %v82 = vld [vmem:[%s0 + $0xf0] sm:$0xff]
    %v83 = vld [vmem:[%s0 + $0xf8] sm:$0xff]
    %v84 = vld [vmem:[%s0 + $0x100] sm:$0xff]
    %v85 = vld [vmem:[%s0 + $0x108] sm:$0xff]
    %v86 = vld [vmem:[%s0 + $0x110] sm:$0xff]
    %v87 = vld [vmem:[%s0 + $0x118] sm:$0xff]
    %v88 = vld [vmem:[%s0 + $0x120] sm:$0xff]
    %v89 = vld [vmem:[%s0 + $0x128] sm:$0xff]
    %v90 = vld [vmem:[%s0 + $0x130] sm:$0xff]
    %v91 = vld [vmem:[%s0 + $0x138] sm:$0xff]
    %v92 = vld [vmem:[%s0 + $0x140] sm:$0xff]
    %v93 = vld [vmem:[%s0 + $0x148] sm:$0xff]
    %v94 = vld [vmem:[%s0 + $0x150] sm:$0xff]
    %v95 = vld [vmem:[%s0 + $0x158] sm:$0xff]
    %v96 = vld [vmem:[%s0 + $0x160] sm:$0xff]
    %v97 = vld [vmem:[%s0 + $0x168] sm:$0xff]
    %v98 = vld [vmem:[%s0 + $0x170] sm:$0xff]
    %v99 = vld [vmem:[%s0 + $0x178] sm:$0xff]
    %v100 = vld [vmem:[%s0 + $0x180] sm:$0xff]
    %v101 = vld [vmem:[%s0 + $0x188] sm:$0xff]
    %vm102 = vcmask 179200
    %v104 = vsel %vm102, %v53, 0
    %v107 = vsel %vm102, %v55, 0
    %v110 = vsel %vm102, %v57, 0
    %v113 = vsel %vm102, %v59, 0
    %v116 = vsel %vm102, %v61, 0
    %v119 = vsel %vm102, %v63, 0
    %v122 = vsel %vm102, %v65, 0
    %v125 = vsel %vm102, %v67, 0
    %v128 = vsel %vm102, %v69, 0
    %v131 = vsel %vm102, %v71, 0
    %v134 = vsel %vm102, %v73, 0
    %v137 = vsel %vm102, %v75, 0
    %v140 = vsel %vm102, %v77, 0
    %v143 = vsel %vm102, %v79, 0
    %v146 = vsel %vm102, %v81, 0
    %v149 = vsel %vm102, %v83, 0
    %v152 = vsel %vm102, %v85, 0
    %v155 = vsel %vm102, %v87, 0
    %v158 = vsel %vm102, %v89, 0
    %v161 = vsel %vm102, %v91, 0
    %v164 = vsel %vm102, %v93, 0
    %v167 = vsel %vm102, %v95, 0
    %v170 = vsel %vm102, %v97, 0
    %v173 = vsel %vm102, %v99, 0
    %v176 = vsel %vm102, %v101, 0
    %vm178 = vcmask 1045504
    %v180 = vsel %vm178, %v51, 0
    %182 = vmatprep.subr.mxu0 0.0
    %183 = vmatpush1.msra.mxu0 %v33
    %184 = vmatprep.subr.mxu0 0.0
    %185 = vmatpush1.msra.mxu0 %v34
    %186 = vmatprep.subr.mxu0 0.0
    %187 = vmatpush1.msra.mxu0 %v35
    %188 = vmatprep.subr.mxu0 0.0
    %189 = vmatpush1.msra.mxu0 %v36
    %190 = vmatprep.subr.mxu0 0.0
    %191 = vmatpush1.msra.mxu0 %v37
    %192 = vmatprep.subr.mxu0 0.0
    %193 = vmatpush1.msra.mxu0 %v38
    %194 = vmatprep.subr.mxu0 0.0
    %195 = vmatpush1.msra.mxu0 %v39
    %196 = vmatprep.subr.mxu0 0.0
    %197 = vmatpush1.msra.mxu0 %v40
    %198 = vmatprep.subr.mxu0 0.0
    %199 = vmatpush1.msra.mxu0 %v41
    %200 = vmatprep.subr.mxu0 0.0
    %201 = vmatpush1.msra.mxu0 %v42
    %202 = vmatprep.subr.mxu0 0.0
    %203 = vmatpush1.msra.mxu0 %v43
    %204 = vmatprep.subr.mxu0 0.0
    %205 = vmatpush1.msra.mxu0 %v44
    %206 = vmatprep.subr.mxu0 0.0
    %207 = vmatpush1.msra.mxu0 %v45
    %208 = vmatprep.subr.mxu0 0.0
    %209 = vmatpush1.msra.mxu0 %v46
    %210 = vmatprep.subr.mxu0 0.0
    %211 = vmatpush1.msra.mxu0 %v47
    %212 = vmatprep.subr.mxu0 0.0
    %213 = vmatpush1.msra.mxu0 %v48
    %214 = vmatprep.subr.mxu0 0.0
    %215 = vmatpush1.msra.mxu0 %v49
    %216 = vmatprep.subr.mxu0 0.0
    %217 = vmatpush1.msra.mxu0 %v50
    %218 = vmatprep.subr.mxu0 0.0
    %219 = vmatpush1.msra.mxu0 %v180
    %220 = vmatprep.subr.mxu0 0.0
    %221 = vmatpush1.msra.mxu0 0.0
    %222 = vmatprep.subr.mxu0 0.0
    %223 = vmatpush1.msra.mxu0 0.0
    %224 = vmatprep.subr.mxu0 0.0
    %225 = vmatpush1.msra.mxu0 0.0
    %226 = vmatprep.subr.mxu0 0.0
    %227 = vmatpush1.msra.mxu0 0.0
    %228 = vmatprep.subr.mxu0 0.0
    %229 = vmatpush1.msra.mxu0 0.0
    %230 = vmatprep.subr.mxu0 0.0
    %231 = vmatpush1.msra.mxu0 0.0
    %232 = vmatprep.subr.mxu0 0.0
    %233 = vmatpush1.msra.mxu0 0.0
    %234 = vmatprep.subr.mxu0 0.0
    %235 = vmatpush1.msra.mxu0 0.0
    %236 = vmatprep.subr.mxu0 0.0
    %237 = vmatpush1.msra.mxu0 0.0
    %238 = vmatprep.subr.mxu0 0.0
    %239 = vmatpush1.msra.mxu0 0.0
    %240 = vmatprep.subr.mxu0 0.0
    %241 = vmatpush1.msra.mxu0 0.0
    %242 = vmatprep.subr.mxu0 0.0
    %243 = vmatpush1.msra.mxu0 0.0
    %244 = vmatprep.subr.mxu0 0.0
    %245 = vmatpush1.msra.mxu0 0.0
    %246 = vmatprep.mubr.f32.mxu0 %v104
    %247 = vmatmul.mubr.f32.gmra.mrb[0].mxu0 %v52
    %v248 = vpop.f32.mrb[0].mxu0
    %v249 = vadd.f32 0.0, %v248
    %v250 = vpop.f32.mrb[0].mxu0
    %251 = vmatprep.mubr.f32.mxu0 %v107
    %252 = vmatmul.mubr.f32.gmra.mrb[0].mxu0 %v54
    %v253 = vpop.f32.mrb[0].mxu0
    %v254 = vadd.f32 0.0, %v253
    %v255 = vpop.f32.mrb[0].mxu0
    %256 = vmatprep.mubr.f32.mxu0 %v110
    %257 = vmatmul.mubr.f32.gmra.mrb[0].mxu0 %v56
    %v258 = vpop.f32.mrb[0].mxu0
    %v259 = vadd.f32 0.0, %v258
    %v260 = vpop.f32.mrb[0].mxu0
    %261 = vmatprep.mubr.f32.mxu0 %v113
    %262 = vmatmul.mubr.f32.gmra.mrb[0].mxu0 %v58
    %v263 = vpop.f32.mrb[0].mxu0
    %v264 = vadd.f32 0.0, %v263
    %v265 = vpop.f32.mrb[0].mxu0
    %266 = vmatprep.mubr.f32.mxu0 %v116
    %267 = vmatmul.mubr.f32.gmra.mrb[0].mxu0 %v60
    %v268 = vpop.f32.mrb[0].mxu0
    %v269 = vadd.f32 0.0, %v268
    %v270 = vpop.f32.mrb[0].mxu0
    %271 = vmatprep.mubr.f32.mxu0 %v119
    %272 = vmatmul.mubr.f32.gmra.mrb[0].mxu0 %v62
    %v273 = vpop.f32.mrb[0].mxu0
    %v274 = vadd.f32 0.0, %v273
    %v275 = vpop.f32.mrb[0].mxu0
    %276 = vmatprep.mubr.f32.mxu0 %v122
    %277 = vmatmul.mubr.f32.gmra.mrb[0].mxu0 %v64
    %v278 = vpop.f32.mrb[0].mxu0
    %v279 = vadd.f32 0.0, %v278
    %v280 = vpop.f32.mrb[0].mxu0
    %281 = vmatprep.mubr.f32.mxu0 %v125
    %282 = vmatmul.mubr.f32.gmra.mrb[0].mxu0 %v66
    %v283 = vpop.f32.mrb[0].mxu0
    %v284 = vadd.f32 0.0, %v283
    %v285 = vpop.f32.mrb[0].mxu0
    %286 = vmatprep.mubr.f32.mxu0 %v128
    %287 = vmatmul.mubr.f32.gmra.mrb[0].mxu0 %v68
    %v288 = vpop.f32.mrb[0].mxu0
    %v289 = vadd.f32 0.0, %v288
    %v290 = vpop.f32.mrb[0].mxu0
    %291 = vmatprep.mubr.f32.mxu0 %v131
    %292 = vmatmul.mubr.f32.gmra.mrb[0].mxu0 %v70
    %v293 = vpop.f32.mrb[0].mxu0
    %v294 = vadd.f32 0.0, %v293
    %v295 = vpop.f32.mrb[0].mxu0
    %296 = vmatprep.mubr.f32.mxu0 %v134
    %297 = vmatmul.mubr.f32.gmra.mrb[0].mxu0 %v72
    %v298 = vpop.f32.mrb[0].mxu0
    %v299 = vadd.f32 0.0, %v298
    %v300 = vpop.f32.mrb[0].mxu0
    %301 = vmatprep.mubr.f32.mxu0 %v137
    %302 = vmatmul.mubr.f32.gmra.mrb[0].mxu0 %v74
    %v303 = vpop.f32.mrb[0].mxu0
    %v304 = vadd.f32 0.0, %v303
    %v305 = vpop.f32.mrb[0].mxu0
    %306 = vmatprep.mubr.f32.mxu0 %v140
    %307 = vmatmul.mubr.f32.gmra.mrb[0].mxu0 %v76
    %v308 = vpop.f32.mrb[0].mxu0
    %v309 = vadd.f32 0.0, %v308
    %v310 = vpop.f32.mrb[0].mxu0
    %311 = vmatprep.mubr.f32.mxu0 %v143
    %312 = vmatmul.mubr.f32.gmra.mrb[0].mxu0 %v78
    %v313 = vpop.f32.mrb[0].mxu0
    %v314 = vadd.f32 0.0, %v313
    %v315 = vpop.f32.mrb[0].mxu0
    %316 = vmatprep.mubr.f32.mxu0 %v146
    %317 = vmatmul.mubr.f32.gmra.mrb[0].mxu0 %v80
    %v318 = vpop.f32.mrb[0].mxu0
    %v319 = vadd.f32 0.0, %v318
    %v320 = vpop.f32.mrb[0].mxu0
    %321 = vmatprep.mubr.f32.mxu0 %v149
    %322 = vmatmul.mubr.f32.gmra.mrb[0].mxu0 %v82
    %v323 = vpop.f32.mrb[0].mxu0
    %v324 = vadd.f32 0.0, %v323
    %v325 = vpop.f32.mrb[0].mxu0
    %326 = vmatprep.mubr.f32.mxu0 %v152
    %327 = vmatmul.mubr.f32.gmra.mrb[0].mxu0 %v84
    %v328 = vpop.f32.mrb[0].mxu0
    %v329 = vadd.f32 0.0, %v328
    %v330 = vpop.f32.mrb[0].mxu0
    %331 = vmatprep.mubr.f32.mxu0 %v155
    %332 = vmatmul.mubr.f32.gmra.mrb[0].mxu0 %v86
    %v333 = vpop.f32.mrb[0].mxu0
    %v334 = vadd.f32 0.0, %v333
    %v335 = vpop.f32.mrb[0].mxu0
    %336 = vmatprep.mubr.f32.mxu0 %v158
    %337 = vmatmul.mubr.f32.gmra.mrb[0].mxu0 %v88
    %v338 = vpop.f32.mrb[0].mxu0
    %v339 = vadd.f32 0.0, %v338
    %v340 = vpop.f32.mrb[0].mxu0
    %341 = vmatprep.mubr.f32.mxu0 %v161
    %342 = vmatmul.mubr.f32.gmra.mrb[0].mxu0 %v90
    %v343 = vpop.f32.mrb[0].mxu0
    %v344 = vadd.f32 0.0, %v343
    %v345 = vpop.f32.mrb[0].mxu0
    %346 = vmatprep.mubr.f32.mxu0 %v164
    %347 = vmatmul.mubr.f32.gmra.mrb[0].mxu0 %v92
    %v348 = vpop.f32.mrb[0].mxu0
    %v349 = vadd.f32 0.0, %v348
    %v350 = vpop.f32.mrb[0].mxu0
    %351 = vmatprep.mubr.f32.mxu0 %v167
    %352 = vmatmul.mubr.f32.gmra.mrb[0].mxu0 %v94
    %v353 = vpop.f32.mrb[0].mxu0
    %v354 = vadd.f32 0.0, %v353
    %v355 = vpop.f32.mrb[0].mxu0
    %356 = vmatprep.mubr.f32.mxu0 %v170
    %357 = vmatmul.mubr.f32.gmra.mrb[0].mxu0 %v96
    %v358 = vpop.f32.mrb[0].mxu0
    %v359 = vadd.f32 0.0, %v358
    %v360 = vpop.f32.mrb[0].mxu0
    %361 = vmatprep.mubr.f32.mxu0 %v173
    %362 = vmatmul.mubr.f32.gmra.mrb[0].mxu0 %v98
    %v363 = vpop.f32.mrb[0].mxu0
    %v364 = vadd.f32 0.0, %v363
    %v365 = vpop.f32.mrb[0].mxu0
    %366 = vmatprep.mubr.f32.mxu0 %v176
    %367 = vmatmul.mubr.f32.gmra.mrb[0].mxu0 %v100
    %v368 = vpop.f32.mrb[0].mxu0
    %v369 = vadd.f32 0.0, %v368
    %v370 = vpop.f32.mrb[0].mxu0
    %371 = vdwg.mxu0
    %s372 = scalar_lea.vmem %s0, 400
    %v373 = vld [vmem:[%s372] sm:$0xff]
    %v374 = vld [vmem:[%s372 + $0x8] sm:$0xff]
    %v375 = vld [vmem:[%s372 + $0x10] sm:$0xff]
    %v376 = vld [vmem:[%s372 + $0x18] sm:$0xff]
    %v377 = vld [vmem:[%s372 + $0x20] sm:$0xff]
    %v378 = vld [vmem:[%s372 + $0x28] sm:$0xff]
    %v379 = vld [vmem:[%s372 + $0x30] sm:$0xff]
    %v380 = vld [vmem:[%s372 + $0x38] sm:$0xff]
    %v381 = vld [vmem:[%s372 + $0x40] sm:$0xff]
    %v382 = vld [vmem:[%s372 + $0x48] sm:$0xff]
    %v383 = vld [vmem:[%s372 + $0x50] sm:$0xff]
    %v384 = vld [vmem:[%s372 + $0x58] sm:$0xff]
    %v385 = vld [vmem:[%s372 + $0x60] sm:$0xff]
    %v386 = vld [vmem:[%s372 + $0x68] sm:$0xff]
    %v387 = vld [vmem:[%s372 + $0x70] sm:$0xff]
    %v388 = vld [vmem:[%s372 + $0x78] sm:$0xff]
    %v389 = vld [vmem:[%s372 + $0x80] sm:$0xff]
    %v390 = vld [vmem:[%s372 + $0x88] sm:$0xff]
    %v391 = vld [vmem:[%s372 + $0x90] sm:$0xff]
    %v392 = vld [vmem:[%s372 + $0x98] sm:$0xff]
    %v393 = vld [vmem:[%s372 + $0xa0] sm:$0xff]
    %v394 = vld [vmem:[%s372 + $0xa8] sm:$0xff]
    %v395 = vld [vmem:[%s372 + $0xb0] sm:$0xff]
    %v396 = vld [vmem:[%s372 + $0xb8] sm:$0xff]
    %v397 = vld [vmem:[%s372 + $0xc0] sm:$0xff]
    %v398 = vld [vmem:[%s372 + $0xc8] sm:$0xff]
    %v399 = vld [vmem:[%s372 + $0xd0] sm:$0xff]
    %v400 = vld [vmem:[%s372 + $0xd8] sm:$0xff]
    %v401 = vld [vmem:[%s372 + $0xe0] sm:$0xff]
    %v402 = vld [vmem:[%s372 + $0xe8] sm:$0xff]
    %v403 = vld [vmem:[%s372 + $0xf0] sm:$0xff]
    %v404 = vld [vmem:[%s372 + $0xf8] sm:$0xff]
    %v405 = vld [vmem:[%s372 + $0x100] sm:$0xff]
    %v406 = vld [vmem:[%s372 + $0x108] sm:$0xff]
    %v407 = vld [vmem:[%s372 + $0x110] sm:$0xff]
    %v408 = vld [vmem:[%s372 + $0x118] sm:$0xff]
    %v409 = vld [vmem:[%s372 + $0x120] sm:$0xff]
    %v410 = vld [vmem:[%s372 + $0x128] sm:$0xff]
    %v411 = vld [vmem:[%s372 + $0x130] sm:$0xff]
    %v412 = vld [vmem:[%s372 + $0x138] sm:$0xff]
    %v413 = vld [vmem:[%s372 + $0x140] sm:$0xff]
    %v414 = vld [vmem:[%s372 + $0x148] sm:$0xff]
    %v415 = vld [vmem:[%s372 + $0x150] sm:$0xff]
    %v416 = vld [vmem:[%s372 + $0x158] sm:$0xff]
    %v417 = vld [vmem:[%s372 + $0x160] sm:$0xff]
    %v418 = vld [vmem:[%s372 + $0x168] sm:$0xff]
    %v419 = vld [vmem:[%s372 + $0x170] sm:$0xff]
    %v420 = vld [vmem:[%s372 + $0x178] sm:$0xff]
    %v421 = vld [vmem:[%s372 + $0x180] sm:$0xff]
    %v422 = vld [vmem:[%s372 + $0x188] sm:$0xff]
    %v424 = vsel %vm102, %v374, 0
    %v427 = vsel %vm102, %v376, 0
    %v430 = vsel %vm102, %v378, 0
    %v433 = vsel %vm102, %v380, 0
    %v436 = vsel %vm102, %v382, 0
    %v439 = vsel %vm102, %v384, 0
    %v442 = vsel %vm102, %v386, 0
    %v445 = vsel %vm102, %v388, 0
    %v448 = vsel %vm102, %v390, 0
    %v451 = vsel %vm102, %v392, 0
    %v454 = vsel %vm102, %v394, 0
    %v457 = vsel %vm102, %v396, 0
    %v460 = vsel %vm102, %v398, 0
    %v463 = vsel %vm102, %v400, 0
    %v466 = vsel %vm102, %v402, 0
    %v469 = vsel %vm102, %v404, 0
    %v472 = vsel %vm102, %v406, 0
    %v475 = vsel %vm102, %v408, 0
    %v478 = vsel %vm102, %v410, 0
    %v481 = vsel %vm102, %v412, 0
    %v484 = vsel %vm102, %v414, 0
    %v487 = vsel %vm102, %v416, 0
    %v490 = vsel %vm102, %v418, 0
    %v493 = vsel %vm102, %v420, 0
    %v496 = vsel %vm102, %v422, 0
    %498 = vmatprep.subr.mxu0 0.0
    %499 = vmatpush1.msra.mxu0 %v33
    %500 = vmatprep.subr.mxu0 0.0
    %501 = vmatpush1.msra.mxu0 %v34
    %502 = vmatprep.subr.mxu0 0.0
    %503 = vmatpush1.msra.mxu0 %v35
    %504 = vmatprep.subr.mxu0 0.0
    %505 = vmatpush1.msra.mxu0 %v36
    %506 = vmatprep.subr.mxu0 0.0
    %507 = vmatpush1.msra.mxu0 %v37
    %508 = vmatprep.subr.mxu0 0.0
    %509 = vmatpush1.msra.mxu0 %v38
    %510 = vmatprep.subr.mxu0 0.0
    %511 = vmatpush1.msra.mxu0 %v39
    %512 = vmatprep.subr.mxu0 0.0
    %513 = vmatpush1.msra.mxu0 %v40
    %514 = vmatprep.subr.mxu0 0.0
    %515 = vmatpush1.msra.mxu0 %v41
    %516 = vmatprep.subr.mxu0 0.0
    %517 = vmatpush1.msra.mxu0 %v42
    %518 = vmatprep.subr.mxu0 0.0
    %519 = vmatpush1.msra.mxu0 %v43
    %520 = vmatprep.subr.mxu0 0.0
    %521 = vmatpush1.msra.mxu0 %v44
    %522 = vmatprep.subr.mxu0 0.0
    %523 = vmatpush1.msra.mxu0 %v45
    %524 = vmatprep.subr.mxu0 0.0
    %525 = vmatpush1.msra.mxu0 %v46
    %526 = vmatprep.subr.mxu0 0.0
    %527 = vmatpush1.msra.mxu0 %v47
    %528 = vmatprep.subr.mxu0 0.0
    %529 = vmatpush1.msra.mxu0 %v48
    %530 = vmatprep.subr.mxu0 0.0
    %531 = vmatpush1.msra.mxu0 %v49
    %532 = vmatprep.subr.mxu0 0.0
    %533 = vmatpush1.msra.mxu0 %v50
    %534 = vmatprep.subr.mxu0 0.0
    %535 = vmatpush1.msra.mxu0 %v180
    %536 = vmatprep.subr.mxu0 0.0
    %537 = vmatpush1.msra.mxu0 0.0
    %538 = vmatprep.subr.mxu0 0.0
    %539 = vmatpush1.msra.mxu0 0.0
    %540 = vmatprep.subr.mxu0 0.0
    %541 = vmatpush1.msra.mxu0 0.0
    %542 = vmatprep.subr.mxu0 0.0
    %543 = vmatpush1.msra.mxu0 0.0
    %544 = vmatprep.subr.mxu0 0.0
    %545 = vmatpush1.msra.mxu0 0.0
    %546 = vmatprep.subr.mxu0 0.0
    %547 = vmatpush1.msra.mxu0 0.0
    %548 = vmatprep.subr.mxu0 0.0
    %549 = vmatpush1.msra.mxu0 0.0
    %550 = vmatprep.subr.mxu0 0.0
    %551 = vmatpush1.msra.mxu0 0.0
    %552 = vmatprep.subr.mxu0 0.0
    %553 = vmatpush1.msra.mxu0 0.0
    %554 = vmatprep.subr.mxu0 0.0
    %555 = vmatpush1.msra.mxu0 0.0
    %556 = vmatprep.subr.mxu0 0.0
    %557 = vmatpush1.msra.mxu0 0.0
    %558 = vmatprep.subr.mxu0 0.0
    %559 = vmatpush1.msra.mxu0 0.0
    %560 = vmatprep.subr.mxu0 0.0
    %561 = vmatpush1.msra.mxu0 0.0
    %562 = vmatprep.mubr.f32.mxu0 %v424
    %563 = vmatmul.mubr.f32.gmra.mrb[0].mxu0 %v373
    %v564 = vpop.f32.mrb[0].mxu0
    %v565 = vadd.f32 0.0, %v564
    %v566 = vpop.f32.mrb[0].mxu0
    %567 = vmatprep.mubr.f32.mxu0 %v427
    %568 = vmatmul.mubr.f32.gmra.mrb[0].mxu0 %v375
    %v569 = vpop.f32.mrb[0].mxu0
    %v570 = vadd.f32 0.0, %v569
    %v571 = vpop.f32.mrb[0].mxu0
    %572 = vmatprep.mubr.f32.mxu0 %v430
    %573 = vmatmul.mubr.f32.gmra.mrb[0].mxu0 %v377
    %v574 = vpop.f32.mrb[0].mxu0
    %v575 = vadd.f32 0.0, %v574
    %v576 = vpop.f32.mrb[0].mxu0
    %577 = vmatprep.mubr.f32.mxu0 %v433
    %578 = vmatmul.mubr.f32.gmra.mrb[0].mxu0 %v379
    %v579 = vpop.f32.mrb[0].mxu0
    %v580 = vadd.f32 0.0, %v579
    %v581 = vpop.f32.mrb[0].mxu0
    %582 = vmatprep.mubr.f32.mxu0 %v436
    %583 = vmatmul.mubr.f32.gmra.mrb[0].mxu0 %v381
    %v584 = vpop.f32.mrb[0].mxu0
    %v585 = vadd.f32 0.0, %v584
    %v586 = vpop.f32.mrb[0].mxu0
    %587 = vmatprep.mubr.f32.mxu0 %v439
    %588 = vmatmul.mubr.f32.gmra.mrb[0].mxu0 %v383
    %v589 = vpop.f32.mrb[0].mxu0
    %v590 = vadd.f32 0.0, %v589
    %v591 = vpop.f32.mrb[0].mxu0
    %592 = vmatprep.mubr.f32.mxu0 %v442
    %593 = vmatmul.mubr.f32.gmra.mrb[0].mxu0 %v385
    %v594 = vpop.f32.mrb[0].mxu0
    %v595 = vadd.f32 0.0, %v594
    %v596 = vpop.f32.mrb[0].mxu0
    %597 = vmatprep.mubr.f32.mxu0 %v445
    %598 = vmatmul.mubr.f32.gmra.mrb[0].mxu0 %v387
    %v599 = vpop.f32.mrb[0].mxu0
    %v600 = vadd.f32 0.0, %v599
    %v601 = vpop.f32.mrb[0].mxu0
    %602 = vmatprep.mubr.f32.mxu0 %v448
    %603 = vmatmul.mubr.f32.gmra.mrb[0].mxu0 %v389
    %v604 = vpop.f32.mrb[0].mxu0
    %v605 = vadd.f32 0.0, %v604
    %v606 = vpop.f32.mrb[0].mxu0
    %607 = vmatprep.mubr.f32.mxu0 %v451
    %608 = vmatmul.mubr.f32.gmra.mrb[0].mxu0 %v391
    %v609 = vpop.f32.mrb[0].mxu0
    %v610 = vadd.f32 0.0, %v609
    %v611 = vpop.f32.mrb[0].mxu0
    %612 = vmatprep.mubr.f32.mxu0 %v454
    %613 = vmatmul.mubr.f32.gmra.mrb[0].mxu0 %v393
    %v614 = vpop.f32.mrb[0].mxu0
    %v615 = vadd.f32 0.0, %v614
    %v616 = vpop.f32.mrb[0].mxu0
    %617 = vmatprep.mubr.f32.mxu0 %v457
    %618 = vmatmul.mubr.f32.gmra.mrb[0].mxu0 %v395
    %v619 = vpop.f32.mrb[0].mxu0
    %v620 = vadd.f32 0.0, %v619
    %v621 = vpop.f32.mrb[0].mxu0
    %622 = vmatprep.mubr.f32.mxu0 %v460
    %623 = vmatmul.mubr.f32.gmra.mrb[0].mxu0 %v397
    %v624 = vpop.f32.mrb[0].mxu0
    %v625 = vadd.f32 0.0, %v624
    %v626 = vpop.f32.mrb[0].mxu0
    %627 = vmatprep.mubr.f32.mxu0 %v463
    %628 = vmatmul.mubr.f32.gmra.mrb[0].mxu0 %v399
    %v629 = vpop.f32.mrb[0].mxu0
    %v630 = vadd.f32 0.0, %v629
    %v631 = vpop.f32.mrb[0].mxu0
    %632 = vmatprep.mubr.f32.mxu0 %v466
    %633 = vmatmul.mubr.f32.gmra.mrb[0].mxu0 %v401
    %v634 = vpop.f32.mrb[0].mxu0
    %v635 = vadd.f32 0.0, %v634
    %v636 = vpop.f32.mrb[0].mxu0
    %637 = vmatprep.mubr.f32.mxu0 %v469
    %638 = vmatmul.mubr.f32.gmra.mrb[0].mxu0 %v403
    %v639 = vpop.f32.mrb[0].mxu0
    %v640 = vadd.f32 0.0, %v639
    %v641 = vpop.f32.mrb[0].mxu0
    %642 = vmatprep.mubr.f32.mxu0 %v472
    %643 = vmatmul.mubr.f32.gmra.mrb[0].mxu0 %v405
    %v644 = vpop.f32.mrb[0].mxu0
    %v645 = vadd.f32 0.0, %v644
    %v646 = vpop.f32.mrb[0].mxu0
    %647 = vmatprep.mubr.f32.mxu0 %v475
    %648 = vmatmul.mubr.f32.gmra.mrb[0].mxu0 %v407
    %v649 = vpop.f32.mrb[0].mxu0
    %v650 = vadd.f32 0.0, %v649
    %v651 = vpop.f32.mrb[0].mxu0
    %652 = vmatprep.mubr.f32.mxu0 %v478
    %653 = vmatmul.mubr.f32.gmra.mrb[0].mxu0 %v409
    %v654 = vpop.f32.mrb[0].mxu0
    %v655 = vadd.f32 0.0, %v654
    %v656 = vpop.f32.mrb[0].mxu0
    %657 = vmatprep.mubr.f32.mxu0 %v481
    %658 = vmatmul.mubr.f32.gmra.mrb[0].mxu0 %v411
    %v659 = vpop.f32.mrb[0].mxu0
    %v660 = vadd.f32 0.0, %v659
    %v661 = vpop.f32.mrb[0].mxu0
    %662 = vmatprep.mubr.f32.mxu0 %v484
    %663 = vmatmul.mubr.f32.gmra.mrb[0].mxu0 %v413
    %v664 = vpop.f32.mrb[0].mxu0
    %v665 = vadd.f32 0.0, %v664
    %v666 = vpop.f32.mrb[0].mxu0
    %667 = vmatprep.mubr.f32.mxu0 %v487
    %668 = vmatmul.mubr.f32.gmra.mrb[0].mxu0 %v415
    %v669 = vpop.f32.mrb[0].mxu0
    %v670 = vadd.f32 0.0, %v669
    %v671 = vpop.f32.mrb[0].mxu0
    %672 = vmatprep.mubr.f32.mxu0 %v490
    %673 = vmatmul.mubr.f32.gmra.mrb[0].mxu0 %v417
    %v674 = vpop.f32.mrb[0].mxu0
    %v675 = vadd.f32 0.0, %v674
    %v676 = vpop.f32.mrb[0].mxu0
    %677 = vmatprep.mubr.f32.mxu0 %v493
    %678 = vmatmul.mubr.f32.gmra.mrb[0].mxu0 %v419
    %v679 = vpop.f32.mrb[0].mxu0
    %v680 = vadd.f32 0.0, %v679
    %v681 = vpop.f32.mrb[0].mxu0
    %682 = vmatprep.mubr.f32.mxu0 %v496
    %683 = vmatmul.mubr.f32.gmra.mrb[0].mxu0 %v421
    %v684 = vpop.f32.mrb[0].mxu0
    %v685 = vadd.f32 0.0, %v684
    %v686 = vpop.f32.mrb[0].mxu0
    %687 = vdwg.mxu0
    %v688 = vmax.f32 %v249, %v565
    %v689 = vmax.f32 %v254, %v570
    %v690 = vmax.f32 %v259, %v575
    %v691 = vmax.f32 %v264, %v580
    %v692 = vmax.f32 %v269, %v585
    %v693 = vmax.f32 %v274, %v590
    %v694 = vmax.f32 %v279, %v595
    %v695 = vmax.f32 %v284, %v600
    %v696 = vmax.f32 %v289, %v605
    %v697 = vmax.f32 %v294, %v610
    %v698 = vmax.f32 %v299, %v615
    %v699 = vmax.f32 %v304, %v620
    %v700 = vmax.f32 %v309, %v625
    %v701 = vmax.f32 %v314, %v630
    %v702 = vmax.f32 %v319, %v635
    %v703 = vmax.f32 %v324, %v640
    %v704 = vmax.f32 %v329, %v645
    %v705 = vmax.f32 %v334, %v650
    %v706 = vmax.f32 %v339, %v655
    %v707 = vmax.f32 %v344, %v660
    %v708 = vmax.f32 %v349, %v665
    %v709 = vmax.f32 %v354, %v670
    %v710 = vmax.f32 %v359, %v675
    %v711 = vmax.f32 %v364, %v680
    %v712 = vmax.f32 %v369, %v685
    %s713 = scalar_lea.vmem %s0, 800
    %v714 = vld [vmem:[%s713] sm:$0xff]
    %v715 = vld [vmem:[%s713 + $0x8] sm:$0xff]
    %v716 = vld [vmem:[%s713 + $0x10] sm:$0xff]
    %v717 = vld [vmem:[%s713 + $0x18] sm:$0xff]
    %v718 = vld [vmem:[%s713 + $0x20] sm:$0xff]
    %v719 = vld [vmem:[%s713 + $0x28] sm:$0xff]
    %v720 = vld [vmem:[%s713 + $0x30] sm:$0xff]
    %v721 = vld [vmem:[%s713 + $0x38] sm:$0xff]
    %v722 = vld [vmem:[%s713 + $0x40] sm:$0xff]
    %v723 = vld [vmem:[%s713 + $0x48] sm:$0xff]
    %v724 = vld [vmem:[%s713 + $0x50] sm:$0xff]
    %v725 = vld [vmem:[%s713 + $0x58] sm:$0xff]
    %v726 = vld [vmem:[%s713 + $0x60] sm:$0xff]
    %v727 = vld [vmem:[%s713 + $0x68] sm:$0xff]
    %v728 = vld [vmem:[%s713 + $0x70] sm:$0xff]
    %v729 = vld [vmem:[%s713 + $0x78] sm:$0xff]
    %v730 = vld [vmem:[%s713 + $0x80] sm:$0xff]
    %v731 = vld [vmem:[%s713 + $0x88] sm:$0xff]
    %v732 = vld [vmem:[%s713 + $0x90] sm:$0xff]
    %v733 = vld [vmem:[%s713 + $0x98] sm:$0xff]
    %v734 = vld [vmem:[%s713 + $0xa0] sm:$0xff]
    %v735 = vld [vmem:[%s713 + $0xa8] sm:$0xff]
    %v736 = vld [vmem:[%s713 + $0xb0] sm:$0xff]
    %v737 = vld [vmem:[%s713 + $0xb8] sm:$0xff]
    %v738 = vld [vmem:[%s713 + $0xc0] sm:$0xff]
    %v739 = vld [vmem:[%s713 + $0xc8] sm:$0xff]
    %v740 = vld [vmem:[%s713 + $0xd0] sm:$0xff]
    %v741 = vld [vmem:[%s713 + $0xd8] sm:$0xff]
    %v742 = vld [vmem:[%s713 + $0xe0] sm:$0xff]
    %v743 = vld [vmem:[%s713 + $0xe8] sm:$0xff]
    %v744 = vld [vmem:[%s713 + $0xf0] sm:$0xff]
    %v745 = vld [vmem:[%s713 + $0xf8] sm:$0xff]
    %v746 = vld [vmem:[%s713 + $0x100] sm:$0xff]
    %v747 = vld [vmem:[%s713 + $0x108] sm:$0xff]
    %v748 = vld [vmem:[%s713 + $0x110] sm:$0xff]
    %v749 = vld [vmem:[%s713 + $0x118] sm:$0xff]
    %v750 = vld [vmem:[%s713 + $0x120] sm:$0xff]
    %v751 = vld [vmem:[%s713 + $0x128] sm:$0xff]
    %v752 = vld [vmem:[%s713 + $0x130] sm:$0xff]
    %v753 = vld [vmem:[%s713 + $0x138] sm:$0xff]
    %v754 = vld [vmem:[%s713 + $0x140] sm:$0xff]
    %v755 = vld [vmem:[%s713 + $0x148] sm:$0xff]
    %v756 = vld [vmem:[%s713 + $0x150] sm:$0xff]
    %v757 = vld [vmem:[%s713 + $0x158] sm:$0xff]
    %v758 = vld [vmem:[%s713 + $0x160] sm:$0xff]
    %v759 = vld [vmem:[%s713 + $0x168] sm:$0xff]
    %v760 = vld [vmem:[%s713 + $0x170] sm:$0xff]
    %v761 = vld [vmem:[%s713 + $0x178] sm:$0xff]
    %v762 = vld [vmem:[%s713 + $0x180] sm:$0xff]
    %v763 = vld [vmem:[%s713 + $0x188] sm:$0xff]
    %v765 = vsel %vm102, %v715, 0
    %v768 = vsel %vm102, %v717, 0
    %v771 = vsel %vm102, %v719, 0
    %v774 = vsel %vm102, %v721, 0
    %v777 = vsel %vm102, %v723, 0
    %v780 = vsel %vm102, %v725, 0
    %v783 = vsel %vm102, %v727, 0
    %v786 = vsel %vm102, %v729, 0
    %v789 = vsel %vm102, %v731, 0
    %v792 = vsel %vm102, %v733, 0
    %v795 = vsel %vm102, %v735, 0
    %v798 = vsel %vm102, %v737, 0
    %v801 = vsel %vm102, %v739, 0
    %v804 = vsel %vm102, %v741, 0
    %v807 = vsel %vm102, %v743, 0
    %v810 = vsel %vm102, %v745, 0
    %v813 = vsel %vm102, %v747, 0
    %v816 = vsel %vm102, %v749, 0
    %v819 = vsel %vm102, %v751, 0
    %v822 = vsel %vm102, %v753, 0
    %v825 = vsel %vm102, %v755, 0
    %v828 = vsel %vm102, %v757, 0
    %v831 = vsel %vm102, %v759, 0
    %v834 = vsel %vm102, %v761, 0
    %v837 = vsel %vm102, %v763, 0
    %839 = vmatprep.subr.mxu0 0.0
    %840 = vmatpush1.msra.mxu0 %v33
    %841 = vmatprep.subr.mxu0 0.0
    %842 = vmatpush1.msra.mxu0 %v34
    %843 = vmatprep.subr.mxu0 0.0
    %844 = vmatpush1.msra.mxu0 %v35
    %845 = vmatprep.subr.mxu0 0.0
    %846 = vmatpush1.msra.mxu0 %v36
    %847 = vmatprep.subr.mxu0 0.0
    %848 = vmatpush1.msra.mxu0 %v37
    %849 = vmatprep.subr.mxu0 0.0
    %850 = vmatpush1.msra.mxu0 %v38
    %851 = vmatprep.subr.mxu0 0.0
    %852 = vmatpush1.msra.mxu0 %v39
    %853 = vmatprep.subr.mxu0 0.0
    %854 = vmatpush1.msra.mxu0 %v40
    %855 = vmatprep.subr.mxu0 0.0
    %856 = vmatpush1.msra.mxu0 %v41
    %857 = vmatprep.subr.mxu0 0.0
    %858 = vmatpush1.msra.mxu0 %v42
    %859 = vmatprep.subr.mxu0 0.0
    %860 = vmatpush1.msra.mxu0 %v43
    %861 = vmatprep.subr.mxu0 0.0
    %862 = vmatpush1.msra.mxu0 %v44
    %863 = vmatprep.subr.mxu0 0.0
    %864 = vmatpush1.msra.mxu0 %v45
    %865 = vmatprep.subr.mxu0 0.0
    %866 = vmatpush1.msra.mxu0 %v46
    %867 = vmatprep.subr.mxu0 0.0
    %868 = vmatpush1.msra.mxu0 %v47
    %869 = vmatprep.subr.mxu0 0.0
    %870 = vmatpush1.msra.mxu0 %v48
    %871 = vmatprep.subr.mxu0 0.0
    %872 = vmatpush1.msra.mxu0 %v49
    %873 = vmatprep.subr.mxu0 0.0
    %874 = vmatpush1.msra.mxu0 %v50
    %875 = vmatprep.subr.mxu0 0.0
    %876 = vmatpush1.msra.mxu0 %v180
    %877 = vmatprep.subr.mxu0 0.0
    %878 = vmatpush1.msra.mxu0 0.0
    %879 = vmatprep.subr.mxu0 0.0
    %880 = vmatpush1.msra.mxu0 0.0
    %881 = vmatprep.subr.mxu0 0.0
    %882 = vmatpush1.msra.mxu0 0.0
    %883 = vmatprep.subr.mxu0 0.0
    %884 = vmatpush1.msra.mxu0 0.0
    %885 = vmatprep.subr.mxu0 0.0
    %886 = vmatpush1.msra.mxu0 0.0
    %887 = vmatprep.subr.mxu0 0.0
    %888 = vmatpush1.msra.mxu0 0.0
    %889 = vmatprep.subr.mxu0 0.0
    %890 = vmatpush1.msra.mxu0 0.0
    %891 = vmatprep.subr.mxu0 0.0
    %892 = vmatpush1.msra.mxu0 0.0
    %893 = vmatprep.subr.mxu0 0.0
    %894 = vmatpush1.msra.mxu0 0.0
    %895 = vmatprep.subr.mxu0 0.0
    %896 = vmatpush1.msra.mxu0 0.0
    %897 = vmatprep.subr.mxu0 0.0
    %898 = vmatpush1.msra.mxu0 0.0
    %899 = vmatprep.subr.mxu0 0.0
    %900 = vmatpush1.msra.mxu0 0.0
    %901 = vmatprep.subr.mxu0 0.0
    %902 = vmatpush1.msra.mxu0 0.0
    %903 = vmatprep.mubr.f32.mxu0 %v765
    %904 = vmatmul.mubr.f32.gmra.mrb[0].mxu0 %v714
    %v905 = vpop.f32.mrb[0].mxu0
    %v906 = vadd.f32 0.0, %v905
    %v907 = vpop.f32.mrb[0].mxu0
    %908 = vmatprep.mubr.f32.mxu0 %v768
    %909 = vmatmul.mubr.f32.gmra.mrb[0].mxu0 %v716
    %v910 = vpop.f32.mrb[0].mxu0
    %v911 = vadd.f32 0.0, %v910
    %v912 = vpop.f32.mrb[0].mxu0
    %913 = vmatprep.mubr.f32.mxu0 %v771
    %914 = vmatmul.mubr.f32.gmra.mrb[0].mxu0 %v718
    %v915 = vpop.f32.mrb[0].mxu0
    %v916 = vadd.f32 0.0, %v915
    %v917 = vpop.f32.mrb[0].mxu0
    %918 = vmatprep.mubr.f32.mxu0 %v774
    %919 = vmatmul.mubr.f32.gmra.mrb[0].mxu0 %v720
    %v920 = vpop.f32.mrb[0].mxu0
    %v921 = vadd.f32 0.0, %v920
    %v922 = vpop.f32.mrb[0].mxu0
    %923 = vmatprep.mubr.f32.mxu0 %v777
    %924 = vmatmul.mubr.f32.gmra.mrb[0].mxu0 %v722
    %v925 = vpop.f32.mrb[0].mxu0
    %v926 = vadd.f32 0.0, %v925
    %v927 = vpop.f32.mrb[0].mxu0
    %928 = vmatprep.mubr.f32.mxu0 %v780
    %929 = vmatmul.mubr.f32.gmra.mrb[0].mxu0 %v724
    %v930 = vpop.f32.mrb[0].mxu0
    %v931 = vadd.f32 0.0, %v930
    %v932 = vpop.f32.mrb[0].mxu0
    %933 = vmatprep.mubr.f32.mxu0 %v783
    %934 = vmatmul.mubr.f32.gmra.mrb[0].mxu0 %v726
    %v935 = vpop.f32.mrb[0].mxu0
    %v936 = vadd.f32 0.0, %v935
    %v937 = vpop.f32.mrb[0].mxu0
    %938 = vmatprep.mubr.f32.mxu0 %v786
    %939 = vmatmul.mubr.f32.gmra.mrb[0].mxu0 %v728
    %v940 = vpop.f32.mrb[0].mxu0
    %v941 = vadd.f32 0.0, %v940
    %v942 = vpop.f32.mrb[0].mxu0
    %943 = vmatprep.mubr.f32.mxu0 %v789
    %944 = vmatmul.mubr.f32.gmra.mrb[0].mxu0 %v730
    %v945 = vpop.f32.mrb[0].mxu0
    %v946 = vadd.f32 0.0, %v945
    %v947 = vpop.f32.mrb[0].mxu0
    %948 = vmatprep.mubr.f32.mxu0 %v792
    %949 = vmatmul.mubr.f32.gmra.mrb[0].mxu0 %v732
    %v950 = vpop.f32.mrb[0].mxu0
    %v951 = vadd.f32 0.0, %v950
    %v952 = vpop.f32.mrb[0].mxu0
    %953 = vmatprep.mubr.f32.mxu0 %v795
    %954 = vmatmul.mubr.f32.gmra.mrb[0].mxu0 %v734
    %v955 = vpop.f32.mrb[0].mxu0
    %v956 = vadd.f32 0.0, %v955
    %v957 = vpop.f32.mrb[0].mxu0
    %958 = vmatprep.mubr.f32.mxu0 %v798
    %959 = vmatmul.mubr.f32.gmra.mrb[0].mxu0 %v736
    %v960 = vpop.f32.mrb[0].mxu0
    %v961 = vadd.f32 0.0, %v960
    %v962 = vpop.f32.mrb[0].mxu0
    %963 = vmatprep.mubr.f32.mxu0 %v801
    %964 = vmatmul.mubr.f32.gmra.mrb[0].mxu0 %v738
    %v965 = vpop.f32.mrb[0].mxu0
    %v966 = vadd.f32 0.0, %v965
    %v967 = vpop.f32.mrb[0].mxu0
    %968 = vmatprep.mubr.f32.mxu0 %v804
    %969 = vmatmul.mubr.f32.gmra.mrb[0].mxu0 %v740
    %v970 = vpop.f32.mrb[0].mxu0
    %v971 = vadd.f32 0.0, %v970
    %v972 = vpop.f32.mrb[0].mxu0
    %973 = vmatprep.mubr.f32.mxu0 %v807
    %974 = vmatmul.mubr.f32.gmra.mrb[0].mxu0 %v742
    %v975 = vpop.f32.mrb[0].mxu0
    %v976 = vadd.f32 0.0, %v975
    %v977 = vpop.f32.mrb[0].mxu0
    %978 = vmatprep.mubr.f32.mxu0 %v810
    %979 = vmatmul.mubr.f32.gmra.mrb[0].mxu0 %v744
    %v980 = vpop.f32.mrb[0].mxu0
    %v981 = vadd.f32 0.0, %v980
    %v982 = vpop.f32.mrb[0].mxu0
    %983 = vmatprep.mubr.f32.mxu0 %v813
    %984 = vmatmul.mubr.f32.gmra.mrb[0].mxu0 %v746
    %v985 = vpop.f32.mrb[0].mxu0
    %v986 = vadd.f32 0.0, %v985
    %v987 = vpop.f32.mrb[0].mxu0
    %988 = vmatprep.mubr.f32.mxu0 %v816
    %989 = vmatmul.mubr.f32.gmra.mrb[0].mxu0 %v748
    %v990 = vpop.f32.mrb[0].mxu0
    %v991 = vadd.f32 0.0, %v990
    %v992 = vpop.f32.mrb[0].mxu0
    %993 = vmatprep.mubr.f32.mxu0 %v819
    %994 = vmatmul.mubr.f32.gmra.mrb[0].mxu0 %v750
    %v995 = vpop.f32.mrb[0].mxu0
    %v996 = vadd.f32 0.0, %v995
    %v997 = vpop.f32.mrb[0].mxu0
    %998 = vmatprep.mubr.f32.mxu0 %v822
    %999 = vmatmul.mubr.f32.gmra.mrb[0].mxu0 %v752
    %v1000 = vpop.f32.mrb[0].mxu0
    %v1001 = vadd.f32 0.0, %v1000
    %v1002 = vpop.f32.mrb[0].mxu0
    %1003 = vmatprep.mubr.f32.mxu0 %v825
    %1004 = vmatmul.mubr.f32.gmra.mrb[0].mxu0 %v754
    %v1005 = vpop.f32.mrb[0].mxu0
    %v1006 = vadd.f32 0.0, %v1005
    %v1007 = vpop.f32.mrb[0].mxu0
    %1008 = vmatprep.mubr.f32.mxu0 %v828
    %1009 = vmatmul.mubr.f32.gmra.mrb[0].mxu0 %v756
    %v1010 = vpop.f32.mrb[0].mxu0
    %v1011 = vadd.f32 0.0, %v1010
    %v1012 = vpop.f32.mrb[0].mxu0
    %1013 = vmatprep.mubr.f32.mxu0 %v831
    %1014 = vmatmul.mubr.f32.gmra.mrb[0].mxu0 %v758
    %v1015 = vpop.f32.mrb[0].mxu0
    %v1016 = vadd.f32 0.0, %v1015
    %v1017 = vpop.f32.mrb[0].mxu0
    %1018 = vmatprep.mubr.f32.mxu0 %v834
    %1019 = vmatmul.mubr.f32.gmra.mrb[0].mxu0 %v760
    %v1020 = vpop.f32.mrb[0].mxu0
    %v1021 = vadd.f32 0.0, %v1020
    %v1022 = vpop.f32.mrb[0].mxu0
    %1023 = vmatprep.mubr.f32.mxu0 %v837
    %1024 = vmatmul.mubr.f32.gmra.mrb[0].mxu0 %v762
    %v1025 = vpop.f32.mrb[0].mxu0
    %v1026 = vadd.f32 0.0, %v1025
    %v1027 = vpop.f32.mrb[0].mxu0
    %1028 = vdwg.mxu0
    %v1029 = vmax.f32 %v688, %v906
    %v1030 = vmax.f32 %v689, %v911
    %v1031 = vmax.f32 %v690, %v916
    %v1032 = vmax.f32 %v691, %v921
    %v1033 = vmax.f32 %v692, %v926
    %v1034 = vmax.f32 %v693, %v931
    %v1035 = vmax.f32 %v694, %v936
    %v1036 = vmax.f32 %v695, %v941
    %v1037 = vmax.f32 %v696, %v946
    %v1038 = vmax.f32 %v697, %v951
    %v1039 = vmax.f32 %v698, %v956
    %v1040 = vmax.f32 %v699, %v961
    %v1041 = vmax.f32 %v700, %v966
    %v1042 = vmax.f32 %v701, %v971
    %v1043 = vmax.f32 %v702, %v976
    %v1044 = vmax.f32 %v703, %v981
    %v1045 = vmax.f32 %v704, %v986
    %v1046 = vmax.f32 %v705, %v991
    %v1047 = vmax.f32 %v706, %v996
    %v1048 = vmax.f32 %v707, %v1001
    %v1049 = vmax.f32 %v708, %v1006
    %v1050 = vmax.f32 %v709, %v1011
    %v1051 = vmax.f32 %v710, %v1016
    %v1052 = vmax.f32 %v711, %v1021
    %v1053 = vmax.f32 %v712, %v1026
    %s1054 = scalar_lea.vmem %s0, 1200
    %v1055 = vld [vmem:[%s1054] sm:$0xff]
    %v1056 = vld [vmem:[%s1054 + $0x8] sm:$0xff]
    %v1057 = vld [vmem:[%s1054 + $0x10] sm:$0xff]
    %v1058 = vld [vmem:[%s1054 + $0x18] sm:$0xff]
    %v1059 = vld [vmem:[%s1054 + $0x20] sm:$0xff]
    %v1060 = vld [vmem:[%s1054 + $0x28] sm:$0xff]
    %v1061 = vld [vmem:[%s1054 + $0x30] sm:$0xff]
    %v1062 = vld [vmem:[%s1054 + $0x38] sm:$0xff]
    %v1063 = vld [vmem:[%s1054 + $0x40] sm:$0xff]
    %v1064 = vld [vmem:[%s1054 + $0x48] sm:$0xff]
    %v1065 = vld [vmem:[%s1054 + $0x50] sm:$0xff]
    %v1066 = vld [vmem:[%s1054 + $0x58] sm:$0xff]
    %v1067 = vld [vmem:[%s1054 + $0x60] sm:$0xff]
    %v1068 = vld [vmem:[%s1054 + $0x68] sm:$0xff]
    %v1069 = vld [vmem:[%s1054 + $0x70] sm:$0xff]
    %v1070 = vld [vmem:[%s1054 + $0x78] sm:$0xff]
    %v1071 = vld [vmem:[%s1054 + $0x80] sm:$0xff]
    %v1072 = vld [vmem:[%s1054 + $0x88] sm:$0xff]
    %v1073 = vld [vmem:[%s1054 + $0x90] sm:$0xff]
    %v1074 = vld [vmem:[%s1054 + $0x98] sm:$0xff]
    %v1075 = vld [vmem:[%s1054 + $0xa0] sm:$0xff]
    %v1076 = vld [vmem:[%s1054 + $0xa8] sm:$0xff]
    %v1077 = vld [vmem:[%s1054 + $0xb0] sm:$0xff]
    %v1078 = vld [vmem:[%s1054 + $0xb8] sm:$0xff]
    %v1079 = vld [vmem:[%s1054 + $0xc0] sm:$0xff]
    %v1080 = vld [vmem:[%s1054 + $0xc8] sm:$0xff]
    %v1081 = vld [vmem:[%s1054 + $0xd0] sm:$0xff]
    %v1082 = vld [vmem:[%s1054 + $0xd8] sm:$0xff]
    %v1083 = vld [vmem:[%s1054 + $0xe0] sm:$0xff]
    %v1084 = vld [vmem:[%s1054 + $0xe8] sm:$0xff]
    %v1085 = vld [vmem:[%s1054 + $0xf0] sm:$0xff]
    %v1086 = vld [vmem:[%s1054 + $0xf8] sm:$0xff]
    %v1087 = vld [vmem:[%s1054 + $0x100] sm:$0xff]
    %v1088 = vld [vmem:[%s1054 + $0x108] sm:$0xff]
    %v1089 = vld [vmem:[%s1054 + $0x110] sm:$0xff]
    %v1090 = vld [vmem:[%s1054 + $0x118] sm:$0xff]
    %v1091 = vld [vmem:[%s1054 + $0x120] sm:$0xff]
    %v1092 = vld [vmem:[%s1054 + $0x128] sm:$0xff]
    %v1093 = vld [vmem:[%s1054 + $0x130] sm:$0xff]
    %v1094 = vld [vmem:[%s1054 + $0x138] sm:$0xff]
    %v1095 = vld [vmem:[%s1054 + $0x140] sm:$0xff]
    %v1096 = vld [vmem:[%s1054 + $0x148] sm:$0xff]
    %v1097 = vld [vmem:[%s1054 + $0x150] sm:$0xff]
    %v1098 = vld [vmem:[%s1054 + $0x158] sm:$0xff]
    %v1099 = vld [vmem:[%s1054 + $0x160] sm:$0xff]
    %v1100 = vld [vmem:[%s1054 + $0x168] sm:$0xff]
    %v1101 = vld [vmem:[%s1054 + $0x170] sm:$0xff]
    %v1102 = vld [vmem:[%s1054 + $0x178] sm:$0xff]
    %v1103 = vld [vmem:[%s1054 + $0x180] sm:$0xff]
    %v1104 = vld [vmem:[%s1054 + $0x188] sm:$0xff]
    %v1106 = vsel %vm102, %v1056, 0
    %v1109 = vsel %vm102, %v1058, 0
    %v1112 = vsel %vm102, %v1060, 0
    %v1115 = vsel %vm102, %v1062, 0
    %v1118 = vsel %vm102, %v1064, 0
    %v1121 = vsel %vm102, %v1066, 0
    %v1124 = vsel %vm102, %v1068, 0
    %v1127 = vsel %vm102, %v1070, 0
    %v1130 = vsel %vm102, %v1072, 0
    %v1133 = vsel %vm102, %v1074, 0
    %v1136 = vsel %vm102, %v1076, 0
    %v1139 = vsel %vm102, %v1078, 0
    %v1142 = vsel %vm102, %v1080, 0
    %v1145 = vsel %vm102, %v1082, 0
    %v1148 = vsel %vm102, %v1084, 0
    %v1151 = vsel %vm102, %v1086, 0
    %v1154 = vsel %vm102, %v1088, 0
    %v1157 = vsel %vm102, %v1090, 0
    %v1160 = vsel %vm102, %v1092, 0
    %v1163 = vsel %vm102, %v1094, 0
    %v1166 = vsel %vm102, %v1096, 0
    %v1169 = vsel %vm102, %v1098, 0
    %v1172 = vsel %vm102, %v1100, 0
    %v1175 = vsel %vm102, %v1102, 0
    %v1178 = vsel %vm102, %v1104, 0
    %1180 = vmatprep.subr.mxu0 0.0
    %1181 = vmatpush1.msra.mxu0 %v33
    %1182 = vmatprep.subr.mxu0 0.0
    %1183 = vmatpush1.msra.mxu0 %v34
    %1184 = vmatprep.subr.mxu0 0.0
    %1185 = vmatpush1.msra.mxu0 %v35
    %1186 = vmatprep.subr.mxu0 0.0
    %1187 = vmatpush1.msra.mxu0 %v36
    %1188 = vmatprep.subr.mxu0 0.0
    %1189 = vmatpush1.msra.mxu0 %v37
    %1190 = vmatprep.subr.mxu0 0.0
    %1191 = vmatpush1.msra.mxu0 %v38
    %1192 = vmatprep.subr.mxu0 0.0
    %1193 = vmatpush1.msra.mxu0 %v39
    %1194 = vmatprep.subr.mxu0 0.0
    %1195 = vmatpush1.msra.mxu0 %v40
    %1196 = vmatprep.subr.mxu0 0.0
    %1197 = vmatpush1.msra.mxu0 %v41
    %1198 = vmatprep.subr.mxu0 0.0
    %1199 = vmatpush1.msra.mxu0 %v42
    %1200 = vmatprep.subr.mxu0 0.0
    %1201 = vmatpush1.msra.mxu0 %v43
    %1202 = vmatprep.subr.mxu0 0.0
    %1203 = vmatpush1.msra.mxu0 %v44
    %1204 = vmatprep.subr.mxu0 0.0
    %1205 = vmatpush1.msra.mxu0 %v45
    %1206 = vmatprep.subr.mxu0 0.0
    %1207 = vmatpush1.msra.mxu0 %v46
    %1208 = vmatprep.subr.mxu0 0.0
    %1209 = vmatpush1.msra.mxu0 %v47
    %1210 = vmatprep.subr.mxu0 0.0
    %1211 = vmatpush1.msra.mxu0 %v48
    %1212 = vmatprep.subr.mxu0 0.0
    %1213 = vmatpush1.msra.mxu0 %v49
    %1214 = vmatprep.subr.mxu0 0.0
    %1215 = vmatpush1.msra.mxu0 %v50
    %1216 = vmatprep.subr.mxu0 0.0
    %1217 = vmatpush1.msra.mxu0 %v180
    %1218 = vmatprep.subr.mxu0 0.0
    %1219 = vmatpush1.msra.mxu0 0.0
    %1220 = vmatprep.subr.mxu0 0.0
    %1221 = vmatpush1.msra.mxu0 0.0
    %1222 = vmatprep.subr.mxu0 0.0
    %1223 = vmatpush1.msra.mxu0 0.0
    %1224 = vmatprep.subr.mxu0 0.0
    %1225 = vmatpush1.msra.mxu0 0.0
    %1226 = vmatprep.subr.mxu0 0.0
    %1227 = vmatpush1.msra.mxu0 0.0
    %1228 = vmatprep.subr.mxu0 0.0
    %1229 = vmatpush1.msra.mxu0 0.0
    %1230 = vmatprep.subr.mxu0 0.0
    %1231 = vmatpush1.msra.mxu0 0.0
    %1232 = vmatprep.subr.mxu0 0.0
    %1233 = vmatpush1.msra.mxu0 0.0
    %1234 = vmatprep.subr.mxu0 0.0
    %1235 = vmatpush1.msra.mxu0 0.0
    %1236 = vmatprep.subr.mxu0 0.0
    %1237 = vmatpush1.msra.mxu0 0.0
    %1238 = vmatprep.subr.mxu0 0.0
    %1239 = vmatpush1.msra.mxu0 0.0
    %1240 = vmatprep.subr.mxu0 0.0
    %1241 = vmatpush1.msra.mxu0 0.0
    %1242 = vmatprep.subr.mxu0 0.0
    %1243 = vmatpush1.msra.mxu0 0.0
    %1244 = vmatprep.mubr.f32.mxu0 %v1106
    %1245 = vmatmul.mubr.f32.gmra.mrb[0].mxu0 %v1055
    %v1246 = vpop.f32.mrb[0].mxu0
    %v1247 = vadd.f32 0.0, %v1246
    %v1248 = vpop.f32.mrb[0].mxu0
    %1249 = vmatprep.mubr.f32.mxu0 %v1109
    %1250 = vmatmul.mubr.f32.gmra.mrb[0].mxu0 %v1057
    %v1251 = vpop.f32.mrb[0].mxu0
    %v1252 = vadd.f32 0.0, %v1251
    %v1253 = vpop.f32.mrb[0].mxu0
    %1254 = vmatprep.mubr.f32.mxu0 %v1112
    %1255 = vmatmul.mubr.f32.gmra.mrb[0].mxu0 %v1059
    %v1256 = vpop.f32.mrb[0].mxu0
    %v1257 = vadd.f32 0.0, %v1256
    %v1258 = vpop.f32.mrb[0].mxu0
    %1259 = vmatprep.mubr.f32.mxu0 %v1115
    %1260 = vmatmul.mubr.f32.gmra.mrb[0].mxu0 %v1061
    %v1261 = vpop.f32.mrb[0].mxu0
    %v1262 = vadd.f32 0.0, %v1261
    %v1263 = vpop.f32.mrb[0].mxu0
    %1264 = vmatprep.mubr.f32.mxu0 %v1118
    %1265 = vmatmul.mubr.f32.gmra.mrb[0].mxu0 %v1063
    %v1266 = vpop.f32.mrb[0].mxu0
    %v1267 = vadd.f32 0.0, %v1266
    %v1268 = vpop.f32.mrb[0].mxu0
    %1269 = vmatprep.mubr.f32.mxu0 %v1121
    %1270 = vmatmul.mubr.f32.gmra.mrb[0].mxu0 %v1065
    %v1271 = vpop.f32.mrb[0].mxu0
    %v1272 = vadd.f32 0.0, %v1271
    %v1273 = vpop.f32.mrb[0].mxu0
    %1274 = vmatprep.mubr.f32.mxu0 %v1124
    %1275 = vmatmul.mubr.f32.gmra.mrb[0].mxu0 %v1067
    %v1276 = vpop.f32.mrb[0].mxu0
    %v1277 = vadd.f32 0.0, %v1276
    %v1278 = vpop.f32.mrb[0].mxu0
    %1279 = vmatprep.mubr.f32.mxu0 %v1127
    %1280 = vmatmul.mubr.f32.gmra.mrb[0].mxu0 %v1069
    %v1281 = vpop.f32.mrb[0].mxu0
    %v1282 = vadd.f32 0.0, %v1281
    %v1283 = vpop.f32.mrb[0].mxu0
    %1284 = vmatprep.mubr.f32.mxu0 %v1130
    %1285 = vmatmul.mubr.f32.gmra.mrb[0].mxu0 %v1071
    %v1286 = vpop.f32.mrb[0].mxu0
    %v1287 = vadd.f32 0.0, %v1286
    %v1288 = vpop.f32.mrb[0].mxu0
    %1289 = vmatprep.mubr.f32.mxu0 %v1133
    %1290 = vmatmul.mubr.f32.gmra.mrb[0].mxu0 %v1073
    %v1291 = vpop.f32.mrb[0].mxu0
    %v1292 = vadd.f32 0.0, %v1291
    %v1293 = vpop.f32.mrb[0].mxu0
    %1294 = vmatprep.mubr.f32.mxu0 %v1136
    %1295 = vmatmul.mubr.f32.gmra.mrb[0].mxu0 %v1075
    %v1296 = vpop.f32.mrb[0].mxu0
    %v1297 = vadd.f32 0.0, %v1296
    %v1298 = vpop.f32.mrb[0].mxu0
    %1299 = vmatprep.mubr.f32.mxu0 %v1139
    %1300 = vmatmul.mubr.f32.gmra.mrb[0].mxu0 %v1077
    %v1301 = vpop.f32.mrb[0].mxu0
    %v1302 = vadd.f32 0.0, %v1301
    %v1303 = vpop.f32.mrb[0].mxu0
    %1304 = vmatprep.mubr.f32.mxu0 %v1142
    %1305 = vmatmul.mubr.f32.gmra.mrb[0].mxu0 %v1079
    %v1306 = vpop.f32.mrb[0].mxu0
    %v1307 = vadd.f32 0.0, %v1306
    %v1308 = vpop.f32.mrb[0].mxu0
    %1309 = vmatprep.mubr.f32.mxu0 %v1145
    %1310 = vmatmul.mubr.f32.gmra.mrb[0].mxu0 %v1081
    %v1311 = vpop.f32.mrb[0].mxu0
    %v1312 = vadd.f32 0.0, %v1311
    %v1313 = vpop.f32.mrb[0].mxu0
    %1314 = vmatprep.mubr.f32.mxu0 %v1148
    %1315 = vmatmul.mubr.f32.gmra.mrb[0].mxu0 %v1083
    %v1316 = vpop.f32.mrb[0].mxu0
    %v1317 = vadd.f32 0.0, %v1316
    %v1318 = vpop.f32.mrb[0].mxu0
    %1319 = vmatprep.mubr.f32.mxu0 %v1151
    %1320 = vmatmul.mubr.f32.gmra.mrb[0].mxu0 %v1085
    %v1321 = vpop.f32.mrb[0].mxu0
    %v1322 = vadd.f32 0.0, %v1321
    %v1323 = vpop.f32.mrb[0].mxu0
    %1324 = vmatprep.mubr.f32.mxu0 %v1154
    %1325 = vmatmul.mubr.f32.gmra.mrb[0].mxu0 %v1087
    %v1326 = vpop.f32.mrb[0].mxu0
    %v1327 = vadd.f32 0.0, %v1326
    %v1328 = vpop.f32.mrb[0].mxu0
    %1329 = vmatprep.mubr.f32.mxu0 %v1157
    %1330 = vmatmul.mubr.f32.gmra.mrb[0].mxu0 %v1089
    %v1331 = vpop.f32.mrb[0].mxu0
    %v1332 = vadd.f32 0.0, %v1331
    %v1333 = vpop.f32.mrb[0].mxu0
    %1334 = vmatprep.mubr.f32.mxu0 %v1160
    %1335 = vmatmul.mubr.f32.gmra.mrb[0].mxu0 %v1091
    %v1336 = vpop.f32.mrb[0].mxu0
    %v1337 = vadd.f32 0.0, %v1336
    %v1338 = vpop.f32.mrb[0].mxu0
    %1339 = vmatprep.mubr.f32.mxu0 %v1163
    %1340 = vmatmul.mubr.f32.gmra.mrb[0].mxu0 %v1093
    %v1341 = vpop.f32.mrb[0].mxu0
    %v1342 = vadd.f32 0.0, %v1341
    %v1343 = vpop.f32.mrb[0].mxu0
    %1344 = vmatprep.mubr.f32.mxu0 %v1166
    %1345 = vmatmul.mubr.f32.gmra.mrb[0].mxu0 %v1095
    %v1346 = vpop.f32.mrb[0].mxu0
    %v1347 = vadd.f32 0.0, %v1346
    %v1348 = vpop.f32.mrb[0].mxu0
    %1349 = vmatprep.mubr.f32.mxu0 %v1169
    %1350 = vmatmul.mubr.f32.gmra.mrb[0].mxu0 %v1097
    %v1351 = vpop.f32.mrb[0].mxu0
    %v1352 = vadd.f32 0.0, %v1351
    %v1353 = vpop.f32.mrb[0].mxu0
    %1354 = vmatprep.mubr.f32.mxu0 %v1172
    %1355 = vmatmul.mubr.f32.gmra.mrb[0].mxu0 %v1099
    %v1356 = vpop.f32.mrb[0].mxu0
    %v1357 = vadd.f32 0.0, %v1356
    %v1358 = vpop.f32.mrb[0].mxu0
    %1359 = vmatprep.mubr.f32.mxu0 %v1175
    %1360 = vmatmul.mubr.f32.gmra.mrb[0].mxu0 %v1101
    %v1361 = vpop.f32.mrb[0].mxu0
    %v1362 = vadd.f32 0.0, %v1361
    %v1363 = vpop.f32.mrb[0].mxu0
    %1364 = vmatprep.mubr.f32.mxu0 %v1178
    %1365 = vmatmul.mubr.f32.gmra.mrb[0].mxu0 %v1103
    %v1366 = vpop.f32.mrb[0].mxu0
    %v1367 = vadd.f32 0.0, %v1366
    %v1368 = vpop.f32.mrb[0].mxu0
    %1369 = vdwg.mxu0
    %v1370 = vmax.f32 %v1029, %v1247
    %v1371 = vmax.f32 %v1030, %v1252
    %v1372 = vmax.f32 %v1031, %v1257
    %v1373 = vmax.f32 %v1032, %v1262
    %v1374 = vmax.f32 %v1033, %v1267
    %v1375 = vmax.f32 %v1034, %v1272
    %v1376 = vmax.f32 %v1035, %v1277
    %v1377 = vmax.f32 %v1036, %v1282
    %v1378 = vmax.f32 %v1037, %v1287
    %v1379 = vmax.f32 %v1038, %v1292
    %v1380 = vmax.f32 %v1039, %v1297
    %v1381 = vmax.f32 %v1040, %v1302
    %v1382 = vmax.f32 %v1041, %v1307
    %v1383 = vmax.f32 %v1042, %v1312
    %v1384 = vmax.f32 %v1043, %v1317
    %v1385 = vmax.f32 %v1044, %v1322
    %v1386 = vmax.f32 %v1045, %v1327
    %v1387 = vmax.f32 %v1046, %v1332
    %v1388 = vmax.f32 %v1047, %v1337
    %v1389 = vmax.f32 %v1048, %v1342
    %v1390 = vmax.f32 %v1049, %v1347
    %v1391 = vmax.f32 %v1050, %v1352
    %v1392 = vmax.f32 %v1051, %v1357
    %v1393 = vmax.f32 %v1052, %v1362
    %v1394 = vmax.f32 %v1053, %v1367
    %v1395 = vld [vmem:[%s2] sm:$0x1]
    %v1397 = vlaneseq
    %v1398 = vshrl.u32 %v1397, 7
    %v1399 = vsub.s32 0, %v1398
    %v1400 = vrot.slane %v1395, %v1399
    %v1402 = vadd.f32 %v1370, %v1400
    %v1403 = vadd.f32 %v1371, %v1400
    %v1404 = vadd.f32 %v1372, %v1400
    %v1405 = vadd.f32 %v1373, %v1400
    %v1406 = vadd.f32 %v1374, %v1400
    %v1407 = vadd.f32 %v1375, %v1400
    %v1408 = vadd.f32 %v1376, %v1400
    %v1409 = vadd.f32 %v1377, %v1400
    %v1410 = vadd.f32 %v1378, %v1400
    %v1411 = vadd.f32 %v1379, %v1400
    %v1412 = vadd.f32 %v1380, %v1400
    %v1413 = vadd.f32 %v1381, %v1400
    %v1414 = vadd.f32 %v1382, %v1400
    %v1415 = vadd.f32 %v1383, %v1400
    %v1416 = vadd.f32 %v1384, %v1400
    %v1417 = vadd.f32 %v1385, %v1400
    %v1418 = vadd.f32 %v1386, %v1400
    %v1419 = vadd.f32 %v1387, %v1400
    %v1420 = vadd.f32 %v1388, %v1400
    %v1421 = vadd.f32 %v1389, %v1400
    %v1422 = vadd.f32 %v1390, %v1400
    %v1423 = vadd.f32 %v1391, %v1400
    %v1424 = vadd.f32 %v1392, %v1400
    %v1425 = vadd.f32 %v1393, %v1400
    %v1426 = vadd.f32 %v1394, %v1400
    %v1427 = vmax.f32 %v1402, 0.0
    %v1428 = vmax.f32 %v1403, 0.0
    %v1429 = vmax.f32 %v1404, 0.0
    %v1430 = vmax.f32 %v1405, 0.0
    %v1431 = vmax.f32 %v1406, 0.0
    %v1432 = vmax.f32 %v1407, 0.0
    %v1433 = vmax.f32 %v1408, 0.0
    %v1434 = vmax.f32 %v1409, 0.0
    %v1435 = vmax.f32 %v1410, 0.0
    %v1436 = vmax.f32 %v1411, 0.0
    %v1437 = vmax.f32 %v1412, 0.0
    %v1438 = vmax.f32 %v1413, 0.0
    %v1439 = vmax.f32 %v1414, 0.0
    %v1440 = vmax.f32 %v1415, 0.0
    %v1441 = vmax.f32 %v1416, 0.0
    %v1442 = vmax.f32 %v1417, 0.0
    %v1443 = vmax.f32 %v1418, 0.0
    %v1444 = vmax.f32 %v1419, 0.0
    %v1445 = vmax.f32 %v1420, 0.0
    %v1446 = vmax.f32 %v1421, 0.0
    %v1447 = vmax.f32 %v1422, 0.0
    %v1448 = vmax.f32 %v1423, 0.0
    %v1449 = vmax.f32 %v1424, 0.0
    %v1450 = vmax.f32 %v1425, 0.0
    %v1451 = vmax.f32 %v1426, 0.0
    %v1452 = vld [vmem:[%s3] sm:$0xff]
    %v1453 = vld [vmem:[%s3 + $0x8] sm:$0xff]
    %v1454 = vld [vmem:[%s3 + $0x10] sm:$0xff]
    %v1455 = vld [vmem:[%s3 + $0x18] sm:$0xff]
    %v1456 = vld [vmem:[%s3 + $0x20] sm:$0xff]
    %v1457 = vld [vmem:[%s3 + $0x28] sm:$0xff]
    %v1458 = vld [vmem:[%s3 + $0x30] sm:$0xff]
    %v1459 = vld [vmem:[%s3 + $0x38] sm:$0xff]
    %v1460 = vld [vmem:[%s3 + $0x40] sm:$0xff]
    %v1461 = vld [vmem:[%s3 + $0x48] sm:$0xff]
    %v1462 = vld [vmem:[%s3 + $0x50] sm:$0xff]
    %v1463 = vld [vmem:[%s3 + $0x58] sm:$0xff]
    %v1464 = vld [vmem:[%s3 + $0x60] sm:$0xff]
    %v1465 = vld [vmem:[%s3 + $0x68] sm:$0xff]
    %v1466 = vld [vmem:[%s3 + $0x70] sm:$0xff]
    %v1467 = vld [vmem:[%s3 + $0x78] sm:$0xff]
    %v1468 = vld [vmem:[%s3 + $0x80] sm:$0xff]
    %v1469 = vld [vmem:[%s3 + $0x88] sm:$0xff]
    %v1470 = vld [vmem:[%s3 + $0x90] sm:$0xff]
    %v1471 = vld [vmem:[%s3 + $0x98] sm:$0xff]
    %v1472 = vld [vmem:[%s3 + $0xa0] sm:$0xff]
    %v1473 = vld [vmem:[%s3 + $0xa8] sm:$0xff]
    %v1474 = vld [vmem:[%s3 + $0xb0] sm:$0xff]
    %v1475 = vld [vmem:[%s3 + $0xb8] sm:$0xff]
    %v1476 = vld [vmem:[%s3 + $0xc0] sm:$0xff]
    %v1477 = vld [vmem:[%s3 + $0xc8] sm:$0xff]
    %v1478 = vld [vmem:[%s3 + $0xd0] sm:$0xff]
    %v1479 = vld [vmem:[%s3 + $0xd8] sm:$0xff]
    %v1480 = vld [vmem:[%s3 + $0xe0] sm:$0xff]
    %v1481 = vld [vmem:[%s3 + $0xe8] sm:$0xff]
    %v1482 = vld [vmem:[%s3 + $0xf0] sm:$0xff]
    %v1483 = vld [vmem:[%s3 + $0xf8] sm:$0xff]
    %v1484 = vld [vmem:[%s3 + $0x100] sm:$0xff]
    %v1485 = vld [vmem:[%s3 + $0x108] sm:$0xff]
    %v1486 = vld [vmem:[%s3 + $0x110] sm:$0xff]
    %v1487 = vld [vmem:[%s3 + $0x118] sm:$0xff]
    %v1488 = vld [vmem:[%s3 + $0x120] sm:$0xff]
    %v1489 = vld [vmem:[%s3 + $0x128] sm:$0xff]
    %v1490 = vld [vmem:[%s3 + $0x130] sm:$0xff]
    %v1491 = vld [vmem:[%s3 + $0x138] sm:$0xff]
    %v1492 = vld [vmem:[%s3 + $0x140] sm:$0xff]
    %v1493 = vld [vmem:[%s3 + $0x148] sm:$0xff]
    %v1494 = vld [vmem:[%s3 + $0x150] sm:$0xff]
    %v1495 = vld [vmem:[%s3 + $0x158] sm:$0xff]
    %v1496 = vld [vmem:[%s3 + $0x160] sm:$0xff]
    %v1497 = vld [vmem:[%s3 + $0x168] sm:$0xff]
    %v1498 = vld [vmem:[%s3 + $0x170] sm:$0xff]
    %v1499 = vld [vmem:[%s3 + $0x178] sm:$0xff]
    %v1500 = vld [vmem:[%s3 + $0x180] sm:$0xff]
    %v1501 = vld [vmem:[%s3 + $0x188] sm:$0xff]
    %vm1502 = vcmask 130048
    %v1504 = vsel %vm1502, %v1428, 0
    %1506 = vmatprep.subr.mxu0 0.0
    %1507 = vmatpush1.msra.mxu0 %v1454
    %1508 = vmatprep.subr.mxu0 0.0
    %1509 = vmatpush1.msra.mxu0 %v1455
    %1510 = vmatprep.subr.mxu0 0.0
    %1511 = vmatpush1.msra.mxu0 0.0
    %1512 = vmatprep.subr.mxu0 0.0
    %1513 = vmatpush1.msra.mxu0 0.0
    %1514 = vmatprep.subr.mxu0 0.0
    %1515 = vmatpush1.msra.mxu0 0.0
    %1516 = vmatprep.subr.mxu0 0.0
    %1517 = vmatpush1.msra.mxu0 0.0
    %1518 = vmatprep.subr.mxu0 0.0
    %1519 = vmatpush1.msra.mxu0 0.0
    %1520 = vmatprep.subr.mxu0 0.0
    %1521 = vmatpush1.msra.mxu0 0.0
    %1522 = vmatprep.subr.mxu0 0.0
    %1523 = vmatpush1.msra.mxu0 0.0
    %1524 = vmatprep.subr.mxu0 0.0
    %1525 = vmatpush1.msra.mxu0 0.0
    %1526 = vmatprep.subr.mxu0 0.0
    %1527 = vmatpush1.msra.mxu0 0.0
    %1528 = vmatprep.subr.mxu0 0.0
    %1529 = vmatpush1.msra.mxu0 0.0
    %1530 = vmatprep.subr.mxu0 0.0
    %1531 = vmatpush1.msra.mxu0 0.0
    %1532 = vmatprep.subr.mxu0 0.0
    %1533 = vmatpush1.msra.mxu0 0.0
    %1534 = vmatprep.subr.mxu0 0.0
    %1535 = vmatpush1.msra.mxu0 0.0
    %1536 = vmatprep.subr.mxu0 0.0
    %1537 = vmatpush1.msra.mxu0 0.0
    %1538 = vmatprep.subr.mxu0 0.0
    %1539 = vmatpush1.msra.mxu0 0.0
    %1540 = vmatprep.subr.mxu0 0.0
    %1541 = vmatpush1.msra.mxu0 0.0
    %1542 = vmatprep.subr.mxu0 0.0
    %1543 = vmatpush1.msra.mxu0 0.0
    %1544 = vmatprep.subr.mxu0 0.0
    %1545 = vmatpush1.msra.mxu0 0.0
    %1546 = vmatprep.subr.mxu0 0.0
    %1547 = vmatpush1.msra.mxu0 0.0
    %1548 = vmatprep.subr.mxu0 0.0
    %1549 = vmatpush1.msra.mxu0 0.0
    %1550 = vmatprep.subr.mxu0 0.0
    %1551 = vmatpush1.msra.mxu0 0.0
    %1552 = vmatprep.subr.mxu0 0.0
    %1553 = vmatpush1.msra.mxu0 0.0
    %1554 = vmatprep.subr.mxu0 0.0
    %1555 = vmatpush1.msra.mxu0 0.0
    %1556 = vmatprep.subr.mxu0 0.0
    %1557 = vmatpush1.msra.mxu0 0.0
    %1558 = vmatprep.subr.mxu0 0.0
    %1559 = vmatpush1.msra.mxu0 0.0
    %1560 = vmatprep.subr.mxu0 0.0
    %1561 = vmatpush1.msra.mxu0 0.0
    %1562 = vmatprep.subr.mxu0 0.0
    %1563 = vmatpush1.msra.mxu0 0.0
    %1564 = vmatprep.subr.mxu0 0.0
    %1565 = vmatpush1.msra.mxu0 0.0
    %1566 = vmatprep.subr.mxu0 0.0
    %1567 = vmatpush1.msra.mxu0 0.0
    %1568 = vmatprep.subr.mxu0 0.0
    %1569 = vmatpush1.msra.mxu0 0.0
    %1570 = vmatprep.mubr.f32.mxu0 0.0
    %1571 = vmatmul.mubr.f32.gmra.mrb[0].mxu0 %v1504
    %v1572 = vpop.f32.mrb[0].mxu0
    %v1573 = vadd.f32 0.0, %v1572
    %v1574 = vpop.f32.mrb[0].mxu0
    %1575 = vdwg.mxu0
    %v1577 = vsel %vm1502, %v1427, 0
    %1579 = vmatprep.subr.mxu0 0.0
    %1580 = vmatpush1.msra.mxu0 %v1452
    %1581 = vmatprep.subr.mxu0 0.0
    %1582 = vmatpush1.msra.mxu0 %v1453
    %1583 = vmatprep.subr.mxu0 0.0
    %1584 = vmatpush1.msra.mxu0 0.0
    %1585 = vmatprep.subr.mxu0 0.0
    %1586 = vmatpush1.msra.mxu0 0.0
    %1587 = vmatprep.subr.mxu0 0.0
    %1588 = vmatpush1.msra.mxu0 0.0
    %1589 = vmatprep.subr.mxu0 0.0
    %1590 = vmatpush1.msra.mxu0 0.0
    %1591 = vmatprep.subr.mxu0 0.0
    %1592 = vmatpush1.msra.mxu0 0.0
    %1593 = vmatprep.subr.mxu0 0.0
    %1594 = vmatpush1.msra.mxu0 0.0
    %1595 = vmatprep.subr.mxu0 0.0
    %1596 = vmatpush1.msra.mxu0 0.0
    %1597 = vmatprep.subr.mxu0 0.0
    %1598 = vmatpush1.msra.mxu0 0.0
    %1599 = vmatprep.subr.mxu0 0.0
    %1600 = vmatpush1.msra.mxu0 0.0
    %1601 = vmatprep.subr.mxu0 0.0
    %1602 = vmatpush1.msra.mxu0 0.0
    %1603 = vmatprep.subr.mxu0 0.0
    %1604 = vmatpush1.msra.mxu0 0.0
    %1605 = vmatprep.subr.mxu0 0.0
    %1606 = vmatpush1.msra.mxu0 0.0
    %1607 = vmatprep.subr.mxu0 0.0
    %1608 = vmatpush1.msra.mxu0 0.0
    %1609 = vmatprep.subr.mxu0 0.0
    %1610 = vmatpush1.msra.mxu0 0.0
    %1611 = vmatprep.subr.mxu0 0.0
    %1612 = vmatpush1.msra.mxu0 0.0
    %1613 = vmatprep.subr.mxu0 0.0
    %1614 = vmatpush1.msra.mxu0 0.0
    %1615 = vmatprep.subr.mxu0 0.0
    %1616 = vmatpush1.msra.mxu0 0.0
    %1617 = vmatprep.subr.mxu0 0.0
    %1618 = vmatpush1.msra.mxu0 0.0
    %1619 = vmatprep.subr.mxu0 0.0
    %1620 = vmatpush1.msra.mxu0 0.0
    %1621 = vmatprep.subr.mxu0 0.0
    %1622 = vmatpush1.msra.mxu0 0.0
    %1623 = vmatprep.subr.mxu0 0.0
    %1624 = vmatpush1.msra.mxu0 0.0
    %1625 = vmatprep.subr.mxu0 0.0
    %1626 = vmatpush1.msra.mxu0 0.0
    %1627 = vmatprep.subr.mxu0 0.0
    %1628 = vmatpush1.msra.mxu0 0.0
    %1629 = vmatprep.subr.mxu0 0.0
    %1630 = vmatpush1.msra.mxu0 0.0
    %1631 = vmatprep.subr.mxu0 0.0
    %1632 = vmatpush1.msra.mxu0 0.0
    %1633 = vmatprep.subr.mxu0 0.0
    %1634 = vmatpush1.msra.mxu0 0.0
    %1635 = vmatprep.subr.mxu0 0.0
    %1636 = vmatpush1.msra.mxu0 0.0
    %1637 = vmatprep.subr.mxu0 0.0
    %1638 = vmatpush1.msra.mxu0 0.0
    %1639 = vmatprep.subr.mxu0 0.0
    %1640 = vmatpush1.msra.mxu0 0.0
    %1641 = vmatprep.subr.mxu0 0.0
    %1642 = vmatpush1.msra.mxu0 0.0
    %1643 = vmatprep.mubr.f32.mxu0 0.0
    %1644 = vmatmul.mubr.f32.gmra.mrb[0].mxu0 %v1577
    %v1645 = vpop.f32.mrb[0].mxu0
    %v1646 = vadd.f32 %v1573, %v1645
    %v1647 = vpop.f32.mrb[0].mxu0
    %1648 = vdwg.mxu0
    %v1650 = vsel %vm1502, %v1429, 0
    %1652 = vmatprep.subr.mxu0 0.0
    %1653 = vmatpush1.msra.mxu0 %v1456
    %1654 = vmatprep.subr.mxu0 0.0
    %1655 = vmatpush1.msra.mxu0 %v1457
    %1656 = vmatprep.subr.mxu0 0.0
    %1657 = vmatpush1.msra.mxu0 0.0
    %1658 = vmatprep.subr.mxu0 0.0
    %1659 = vmatpush1.msra.mxu0 0.0
    %1660 = vmatprep.subr.mxu0 0.0
    %1661 = vmatpush1.msra.mxu0 0.0
    %1662 = vmatprep.subr.mxu0 0.0
    %1663 = vmatpush1.msra.mxu0 0.0
    %1664 = vmatprep.subr.mxu0 0.0
    %1665 = vmatpush1.msra.mxu0 0.0
    %1666 = vmatprep.subr.mxu0 0.0
    %1667 = vmatpush1.msra.mxu0 0.0
    %1668 = vmatprep.subr.mxu0 0.0
    %1669 = vmatpush1.msra.mxu0 0.0
    %1670 = vmatprep.subr.mxu0 0.0
    %1671 = vmatpush1.msra.mxu0 0.0
    %1672 = vmatprep.subr.mxu0 0.0
    %1673 = vmatpush1.msra.mxu0 0.0
    %1674 = vmatprep.subr.mxu0 0.0
    %1675 = vmatpush1.msra.mxu0 0.0
    %1676 = vmatprep.subr.mxu0 0.0
    %1677 = vmatpush1.msra.mxu0 0.0
    %1678 = vmatprep.subr.mxu0 0.0
    %1679 = vmatpush1.msra.mxu0 0.0
    %1680 = vmatprep.subr.mxu0 0.0
    %1681 = vmatpush1.msra.mxu0 0.0
    %1682 = vmatprep.subr.mxu0 0.0
    %1683 = vmatpush1.msra.mxu0 0.0
    %1684 = vmatprep.subr.mxu0 0.0
    %1685 = vmatpush1.msra.mxu0 0.0
    %1686 = vmatprep.subr.mxu0 0.0
    %1687 = vmatpush1.msra.mxu0 0.0
    %1688 = vmatprep.subr.mxu0 0.0
    %1689 = vmatpush1.msra.mxu0 0.0
    %1690 = vmatprep.subr.mxu0 0.0
    %1691 = vmatpush1.msra.mxu0 0.0
    %1692 = vmatprep.subr.mxu0 0.0
    %1693 = vmatpush1.msra.mxu0 0.0
    %1694 = vmatprep.subr.mxu0 0.0
    %1695 = vmatpush1.msra.mxu0 0.0
    %1696 = vmatprep.subr.mxu0 0.0
    %1697 = vmatpush1.msra.mxu0 0.0
    %1698 = vmatprep.subr.mxu0 0.0
    %1699 = vmatpush1.msra.mxu0 0.0
    %1700 = vmatprep.subr.mxu0 0.0
    %1701 = vmatpush1.msra.mxu0 0.0
    %1702 = vmatprep.subr.mxu0 0.0
    %1703 = vmatpush1.msra.mxu0 0.0
    %1704 = vmatprep.subr.mxu0 0.0
    %1705 = vmatpush1.msra.mxu0 0.0
    %1706 = vmatprep.subr.mxu0 0.0
    %1707 = vmatpush1.msra.mxu0 0.0
    %1708 = vmatprep.subr.mxu0 0.0
    %1709 = vmatpush1.msra.mxu0 0.0
    %1710 = vmatprep.subr.mxu0 0.0
    %1711 = vmatpush1.msra.mxu0 0.0
    %1712 = vmatprep.subr.mxu0 0.0
    %1713 = vmatpush1.msra.mxu0 0.0
    %1714 = vmatprep.subr.mxu0 0.0
    %1715 = vmatpush1.msra.mxu0 0.0
    %1716 = vmatprep.mubr.f32.mxu0 0.0
    %1717 = vmatmul.mubr.f32.gmra.mrb[0].mxu0 %v1650
    %v1718 = vpop.f32.mrb[0].mxu0
    %v1719 = vadd.f32 0.0, %v1718
    %v1720 = vpop.f32.mrb[0].mxu0
    %1721 = vdwg.mxu0
    %v1722 = vadd.f32 %v1646, %v1719
    %v1724 = vsel %vm1502, %v1430, 0
    %1726 = vmatprep.subr.mxu0 0.0
    %1727 = vmatpush1.msra.mxu0 %v1458
    %1728 = vmatprep.subr.mxu0 0.0
    %1729 = vmatpush1.msra.mxu0 %v1459
    %1730 = vmatprep.subr.mxu0 0.0
    %1731 = vmatpush1.msra.mxu0 0.0
    %1732 = vmatprep.subr.mxu0 0.0
    %1733 = vmatpush1.msra.mxu0 0.0
    %1734 = vmatprep.subr.mxu0 0.0
    %1735 = vmatpush1.msra.mxu0 0.0
    %1736 = vmatprep.subr.mxu0 0.0
    %1737 = vmatpush1.msra.mxu0 0.0
    %1738 = vmatprep.subr.mxu0 0.0
    %1739 = vmatpush1.msra.mxu0 0.0
    %1740 = vmatprep.subr.mxu0 0.0
    %1741 = vmatpush1.msra.mxu0 0.0
    %1742 = vmatprep.subr.mxu0 0.0
    %1743 = vmatpush1.msra.mxu0 0.0
    %1744 = vmatprep.subr.mxu0 0.0
    %1745 = vmatpush1.msra.mxu0 0.0
    %1746 = vmatprep.subr.mxu0 0.0
    %1747 = vmatpush1.msra.mxu0 0.0
    %1748 = vmatprep.subr.mxu0 0.0
    %1749 = vmatpush1.msra.mxu0 0.0
    %1750 = vmatprep.subr.mxu0 0.0
    %1751 = vmatpush1.msra.mxu0 0.0
    %1752 = vmatprep.subr.mxu0 0.0
    %1753 = vmatpush1.msra.mxu0 0.0
    %1754 = vmatprep.subr.mxu0 0.0
    %1755 = vmatpush1.msra.mxu0 0.0
    %1756 = vmatprep.subr.mxu0 0.0
    %1757 = vmatpush1.msra.mxu0 0.0
    %1758 = vmatprep.subr.mxu0 0.0
    %1759 = vmatpush1.msra.mxu0 0.0
    %1760 = vmatprep.subr.mxu0 0.0
    %1761 = vmatpush1.msra.mxu0 0.0
    %1762 = vmatprep.subr.mxu0 0.0
    %1763 = vmatpush1.msra.mxu0 0.0
    %1764 = vmatprep.subr.mxu0 0.0
    %1765 = vmatpush1.msra.mxu0 0.0
    %1766 = vmatprep.subr.mxu0 0.0
    %1767 = vmatpush1.msra.mxu0 0.0
    %1768 = vmatprep.subr.mxu0 0.0
    %1769 = vmatpush1.msra.mxu0 0.0
    %1770 = vmatprep.subr.mxu0 0.0
    %1771 = vmatpush1.msra.mxu0 0.0
    %1772 = vmatprep.subr.mxu0 0.0
    %1773 = vmatpush1.msra.mxu0 0.0
    %1774 = vmatprep.subr.mxu0 0.0
    %1775 = vmatpush1.msra.mxu0 0.0
    %1776 = vmatprep.subr.mxu0 0.0
    %1777 = vmatpush1.msra.mxu0 0.0
    %1778 = vmatprep.subr.mxu0 0.0
    %1779 = vmatpush1.msra.mxu0 0.0
    %1780 = vmatprep.subr.mxu0 0.0
    %1781 = vmatpush1.msra.mxu0 0.0
    %1782 = vmatprep.subr.mxu0 0.0
    %1783 = vmatpush1.msra.mxu0 0.0
    %1784 = vmatprep.subr.mxu0 0.0
    %1785 = vmatpush1.msra.mxu0 0.0
    %1786 = vmatprep.subr.mxu0 0.0
    %1787 = vmatpush1.msra.mxu0 0.0
    %1788 = vmatprep.subr.mxu0 0.0
    %1789 = vmatpush1.msra.mxu0 0.0
    %1790 = vmatprep.mubr.f32.mxu0 0.0
    %1791 = vmatmul.mubr.f32.gmra.mrb[0].mxu0 %v1724
    %v1792 = vpop.f32.mrb[0].mxu0
    %v1793 = vadd.f32 0.0, %v1792
    %v1794 = vpop.f32.mrb[0].mxu0
    %1795 = vdwg.mxu0
    %v1796 = vadd.f32 %v1722, %v1793
    %v1798 = vsel %vm1502, %v1431, 0
    %1800 = vmatprep.subr.mxu0 0.0
    %1801 = vmatpush1.msra.mxu0 %v1460
    %1802 = vmatprep.subr.mxu0 0.0
    %1803 = vmatpush1.msra.mxu0 %v1461
    %1804 = vmatprep.subr.mxu0 0.0
    %1805 = vmatpush1.msra.mxu0 0.0
    %1806 = vmatprep.subr.mxu0 0.0
    %1807 = vmatpush1.msra.mxu0 0.0
    %1808 = vmatprep.subr.mxu0 0.0
    %1809 = vmatpush1.msra.mxu0 0.0
    %1810 = vmatprep.subr.mxu0 0.0
    %1811 = vmatpush1.msra.mxu0 0.0
    %1812 = vmatprep.subr.mxu0 0.0
    %1813 = vmatpush1.msra.mxu0 0.0
    %1814 = vmatprep.subr.mxu0 0.0
    %1815 = vmatpush1.msra.mxu0 0.0
    %1816 = vmatprep.subr.mxu0 0.0
    %1817 = vmatpush1.msra.mxu0 0.0
    %1818 = vmatprep.subr.mxu0 0.0
    %1819 = vmatpush1.msra.mxu0 0.0
    %1820 = vmatprep.subr.mxu0 0.0
    %1821 = vmatpush1.msra.mxu0 0.0
    %1822 = vmatprep.subr.mxu0 0.0
    %1823 = vmatpush1.msra.mxu0 0.0
    %1824 = vmatprep.subr.mxu0 0.0
    %1825 = vmatpush1.msra.mxu0 0.0
    %1826 = vmatprep.subr.mxu0 0.0
    %1827 = vmatpush1.msra.mxu0 0.0
    %1828 = vmatprep.subr.mxu0 0.0
    %1829 = vmatpush1.msra.mxu0 0.0
    %1830 = vmatprep.subr.mxu0 0.0
    %1831 = vmatpush1.msra.mxu0 0.0
    %1832 = vmatprep.subr.mxu0 0.0
    %1833 = vmatpush1.msra.mxu0 0.0
    %1834 = vmatprep.subr.mxu0 0.0
    %1835 = vmatpush1.msra.mxu0 0.0
    %1836 = vmatprep.subr.mxu0 0.0
    %1837 = vmatpush1.msra.mxu0 0.0
    %1838 = vmatprep.subr.mxu0 0.0
    %1839 = vmatpush1.msra.mxu0 0.0
    %1840 = vmatprep.subr.mxu0 0.0
    %1841 = vmatpush1.msra.mxu0 0.0
    %1842 = vmatprep.subr.mxu0 0.0
    %1843 = vmatpush1.msra.mxu0 0.0
    %1844 = vmatprep.subr.mxu0 0.0
    %1845 = vmatpush1.msra.mxu0 0.0
    %1846 = vmatprep.subr.mxu0 0.0
    %1847 = vmatpush1.msra.mxu0 0.0
    %1848 = vmatprep.subr.mxu0 0.0
    %1849 = vmatpush1.msra.mxu0 0.0
    %1850 = vmatprep.subr.mxu0 0.0
    %1851 = vmatpush1.msra.mxu0 0.0
    %1852 = vmatprep.subr.mxu0 0.0
    %1853 = vmatpush1.msra.mxu0 0.0
    %1854 = vmatprep.subr.mxu0 0.0
    %1855 = vmatpush1.msra.mxu0 0.0
    %1856 = vmatprep.subr.mxu0 0.0
    %1857 = vmatpush1.msra.mxu0 0.0
    %1858 = vmatprep.subr.mxu0 0.0
    %1859 = vmatpush1.msra.mxu0 0.0
    %1860 = vmatprep.subr.mxu0 0.0
    %1861 = vmatpush1.msra.mxu0 0.0
    %1862 = vmatprep.subr.mxu0 0.0
    %1863 = vmatpush1.msra.mxu0 0.0
    %1864 = vmatprep.mubr.f32.mxu0 0.0
    %1865 = vmatmul.mubr.f32.gmra.mrb[0].mxu0 %v1798
    %v1866 = vpop.f32.mrb[0].mxu0
    %v1867 = vadd.f32 0.0, %v1866
    %v1868 = vpop.f32.mrb[0].mxu0
    %1869 = vdwg.mxu0
    %v1870 = vadd.f32 %v1796, %v1867
    %v1872 = vsel %vm1502, %v1432, 0
    %1874 = vmatprep.subr.mxu0 0.0
    %1875 = vmatpush1.msra.mxu0 %v1462
    %1876 = vmatprep.subr.mxu0 0.0
    %1877 = vmatpush1.msra.mxu0 %v1463
    %1878 = vmatprep.subr.mxu0 0.0
    %1879 = vmatpush1.msra.mxu0 0.0
    %1880 = vmatprep.subr.mxu0 0.0
    %1881 = vmatpush1.msra.mxu0 0.0
    %1882 = vmatprep.subr.mxu0 0.0
    %1883 = vmatpush1.msra.mxu0 0.0
    %1884 = vmatprep.subr.mxu0 0.0
    %1885 = vmatpush1.msra.mxu0 0.0
    %1886 = vmatprep.subr.mxu0 0.0
    %1887 = vmatpush1.msra.mxu0 0.0
    %1888 = vmatprep.subr.mxu0 0.0
    %1889 = vmatpush1.msra.mxu0 0.0
    %1890 = vmatprep.subr.mxu0 0.0
    %1891 = vmatpush1.msra.mxu0 0.0
    %1892 = vmatprep.subr.mxu0 0.0
    %1893 = vmatpush1.msra.mxu0 0.0
    %1894 = vmatprep.subr.mxu0 0.0
    %1895 = vmatpush1.msra.mxu0 0.0
    %1896 = vmatprep.subr.mxu0 0.0
    %1897 = vmatpush1.msra.mxu0 0.0
    %1898 = vmatprep.subr.mxu0 0.0
    %1899 = vmatpush1.msra.mxu0 0.0
    %1900 = vmatprep.subr.mxu0 0.0
    %1901 = vmatpush1.msra.mxu0 0.0
    %1902 = vmatprep.subr.mxu0 0.0
    %1903 = vmatpush1.msra.mxu0 0.0
    %1904 = vmatprep.subr.mxu0 0.0
    %1905 = vmatpush1.msra.mxu0 0.0
    %1906 = vmatprep.subr.mxu0 0.0
    %1907 = vmatpush1.msra.mxu0 0.0
    %1908 = vmatprep.subr.mxu0 0.0
    %1909 = vmatpush1.msra.mxu0 0.0
    %1910 = vmatprep.subr.mxu0 0.0
    %1911 = vmatpush1.msra.mxu0 0.0
    %1912 = vmatprep.subr.mxu0 0.0
    %1913 = vmatpush1.msra.mxu0 0.0
    %1914 = vmatprep.subr.mxu0 0.0
    %1915 = vmatpush1.msra.mxu0 0.0
    %1916 = vmatprep.subr.mxu0 0.0
    %1917 = vmatpush1.msra.mxu0 0.0
    %1918 = vmatprep.subr.mxu0 0.0
    %1919 = vmatpush1.msra.mxu0 0.0
    %1920 = vmatprep.subr.mxu0 0.0
    %1921 = vmatpush1.msra.mxu0 0.0
    %1922 = vmatprep.subr.mxu0 0.0
    %1923 = vmatpush1.msra.mxu0 0.0
    %1924 = vmatprep.subr.mxu0 0.0
    %1925 = vmatpush1.msra.mxu0 0.0
    %1926 = vmatprep.subr.mxu0 0.0
    %1927 = vmatpush1.msra.mxu0 0.0
    %1928 = vmatprep.subr.mxu0 0.0
    %1929 = vmatpush1.msra.mxu0 0.0
    %1930 = vmatprep.subr.mxu0 0.0
    %1931 = vmatpush1.msra.mxu0 0.0
    %1932 = vmatprep.subr.mxu0 0.0
    %1933 = vmatpush1.msra.mxu0 0.0
    %1934 = vmatprep.subr.mxu0 0.0
    %1935 = vmatpush1.msra.mxu0 0.0
    %1936 = vmatprep.subr.mxu0 0.0
    %1937 = vmatpush1.msra.mxu0 0.0
    %1938 = vmatprep.mubr.f32.mxu0 0.0
    %1939 = vmatmul.mubr.f32.gmra.mrb[0].mxu0 %v1872
    %v1940 = vpop.f32.mrb[0].mxu0
    %v1941 = vadd.f32 0.0, %v1940
    %v1942 = vpop.f32.mrb[0].mxu0
    %1943 = vdwg.mxu0
    %v1944 = vadd.f32 %v1870, %v1941
    %v1946 = vsel %vm1502, %v1433, 0
    %1948 = vmatprep.subr.mxu0 0.0
    %1949 = vmatpush1.msra.mxu0 %v1464
    %1950 = vmatprep.subr.mxu0 0.0
    %1951 = vmatpush1.msra.mxu0 %v1465
    %1952 = vmatprep.subr.mxu0 0.0
    %1953 = vmatpush1.msra.mxu0 0.0
    %1954 = vmatprep.subr.mxu0 0.0
    %1955 = vmatpush1.msra.mxu0 0.0
    %1956 = vmatprep.subr.mxu0 0.0
    %1957 = vmatpush1.msra.mxu0 0.0
    %1958 = vmatprep.subr.mxu0 0.0
    %1959 = vmatpush1.msra.mxu0 0.0
    %1960 = vmatprep.subr.mxu0 0.0
    %1961 = vmatpush1.msra.mxu0 0.0
    %1962 = vmatprep.subr.mxu0 0.0
    %1963 = vmatpush1.msra.mxu0 0.0
    %1964 = vmatprep.subr.mxu0 0.0
    %1965 = vmatpush1.msra.mxu0 0.0
    %1966 = vmatprep.subr.mxu0 0.0
    %1967 = vmatpush1.msra.mxu0 0.0
    %1968 = vmatprep.subr.mxu0 0.0
    %1969 = vmatpush1.msra.mxu0 0.0
    %1970 = vmatprep.subr.mxu0 0.0
    %1971 = vmatpush1.msra.mxu0 0.0
    %1972 = vmatprep.subr.mxu0 0.0
    %1973 = vmatpush1.msra.mxu0 0.0
    %1974 = vmatprep.subr.mxu0 0.0
    %1975 = vmatpush1.msra.mxu0 0.0
    %1976 = vmatprep.subr.mxu0 0.0
    %1977 = vmatpush1.msra.mxu0 0.0
    %1978 = vmatprep.subr.mxu0 0.0
    %1979 = vmatpush1.msra.mxu0 0.0
    %1980 = vmatprep.subr.mxu0 0.0
    %1981 = vmatpush1.msra.mxu0 0.0
    %1982 = vmatprep.subr.mxu0 0.0
    %1983 = vmatpush1.msra.mxu0 0.0
    %1984 = vmatprep.subr.mxu0 0.0
    %1985 = vmatpush1.msra.mxu0 0.0
    %1986 = vmatprep.subr.mxu0 0.0
    %1987 = vmatpush1.msra.mxu0 0.0
    %1988 = vmatprep.subr.mxu0 0.0
    %1989 = vmatpush1.msra.mxu0 0.0
    %1990 = vmatprep.subr.mxu0 0.0
    %1991 = vmatpush1.msra.mxu0 0.0
    %1992 = vmatprep.subr.mxu0 0.0
    %1993 = vmatpush1.msra.mxu0 0.0
    %1994 = vmatprep.subr.mxu0 0.0
    %1995 = vmatpush1.msra.mxu0 0.0
    %1996 = vmatprep.subr.mxu0 0.0
    %1997 = vmatpush1.msra.mxu0 0.0
    %1998 = vmatprep.subr.mxu0 0.0
    %1999 = vmatpush1.msra.mxu0 0.0
    %2000 = vmatprep.subr.mxu0 0.0
    %2001 = vmatpush1.msra.mxu0 0.0
    %2002 = vmatprep.subr.mxu0 0.0
    %2003 = vmatpush1.msra.mxu0 0.0
    %2004 = vmatprep.subr.mxu0 0.0
    %2005 = vmatpush1.msra.mxu0 0.0
    %2006 = vmatprep.subr.mxu0 0.0
    %2007 = vmatpush1.msra.mxu0 0.0
    %2008 = vmatprep.subr.mxu0 0.0
    %2009 = vmatpush1.msra.mxu0 0.0
    %2010 = vmatprep.subr.mxu0 0.0
    %2011 = vmatpush1.msra.mxu0 0.0
    %2012 = vmatprep.mubr.f32.mxu0 0.0
    %2013 = vmatmul.mubr.f32.gmra.mrb[0].mxu0 %v1946
    %v2014 = vpop.f32.mrb[0].mxu0
    %v2015 = vadd.f32 0.0, %v2014
    %v2016 = vpop.f32.mrb[0].mxu0
    %2017 = vdwg.mxu0
    %v2018 = vadd.f32 %v1944, %v2015
    %v2020 = vsel %vm1502, %v1434, 0
    %2022 = vmatprep.subr.mxu0 0.0
    %2023 = vmatpush1.msra.mxu0 %v1466
    %2024 = vmatprep.subr.mxu0 0.0
    %2025 = vmatpush1.msra.mxu0 %v1467
    %2026 = vmatprep.subr.mxu0 0.0
    %2027 = vmatpush1.msra.mxu0 0.0
    %2028 = vmatprep.subr.mxu0 0.0
    %2029 = vmatpush1.msra.mxu0 0.0
    %2030 = vmatprep.subr.mxu0 0.0
    %2031 = vmatpush1.msra.mxu0 0.0
    %2032 = vmatprep.subr.mxu0 0.0
    %2033 = vmatpush1.msra.mxu0 0.0
    %2034 = vmatprep.subr.mxu0 0.0
    %2035 = vmatpush1.msra.mxu0 0.0
    %2036 = vmatprep.subr.mxu0 0.0
    %2037 = vmatpush1.msra.mxu0 0.0
    %2038 = vmatprep.subr.mxu0 0.0
    %2039 = vmatpush1.msra.mxu0 0.0
    %2040 = vmatprep.subr.mxu0 0.0
    %2041 = vmatpush1.msra.mxu0 0.0
    %2042 = vmatprep.subr.mxu0 0.0
    %2043 = vmatpush1.msra.mxu0 0.0
    %2044 = vmatprep.subr.mxu0 0.0
    %2045 = vmatpush1.msra.mxu0 0.0
    %2046 = vmatprep.subr.mxu0 0.0
    %2047 = vmatpush1.msra.mxu0 0.0
    %2048 = vmatprep.subr.mxu0 0.0
    %2049 = vmatpush1.msra.mxu0 0.0
    %2050 = vmatprep.subr.mxu0 0.0
    %2051 = vmatpush1.msra.mxu0 0.0
    %2052 = vmatprep.subr.mxu0 0.0
    %2053 = vmatpush1.msra.mxu0 0.0
    %2054 = vmatprep.subr.mxu0 0.0
    %2055 = vmatpush1.msra.mxu0 0.0
    %2056 = vmatprep.subr.mxu0 0.0
    %2057 = vmatpush1.msra.mxu0 0.0
    %2058 = vmatprep.subr.mxu0 0.0
    %2059 = vmatpush1.msra.mxu0 0.0
    %2060 = vmatprep.subr.mxu0 0.0
    %2061 = vmatpush1.msra.mxu0 0.0
    %2062 = vmatprep.subr.mxu0 0.0
    %2063 = vmatpush1.msra.mxu0 0.0
    %2064 = vmatprep.subr.mxu0 0.0
    %2065 = vmatpush1.msra.mxu0 0.0
    %2066 = vmatprep.subr.mxu0 0.0
    %2067 = vmatpush1.msra.mxu0 0.0
    %2068 = vmatprep.subr.mxu0 0.0
    %2069 = vmatpush1.msra.mxu0 0.0
    %2070 = vmatprep.subr.mxu0 0.0
    %2071 = vmatpush1.msra.mxu0 0.0
    %2072 = vmatprep.subr.mxu0 0.0
    %2073 = vmatpush1.msra.mxu0 0.0
    %2074 = vmatprep.subr.mxu0 0.0
    %2075 = vmatpush1.msra.mxu0 0.0
    %2076 = vmatprep.subr.mxu0 0.0
    %2077 = vmatpush1.msra.mxu0 0.0
    %2078 = vmatprep.subr.mxu0 0.0
    %2079 = vmatpush1.msra.mxu0 0.0
    %2080 = vmatprep.subr.mxu0 0.0
    %2081 = vmatpush1.msra.mxu0 0.0
    %2082 = vmatprep.subr.mxu0 0.0
    %2083 = vmatpush1.msra.mxu0 0.0
    %2084 = vmatprep.subr.mxu0 0.0
    %2085 = vmatpush1.msra.mxu0 0.0
    %2086 = vmatprep.mubr.f32.mxu0 0.0
    %2087 = vmatmul.mubr.f32.gmra.mrb[0].mxu0 %v2020
    %v2088 = vpop.f32.mrb[0].mxu0
    %v2089 = vadd.f32 0.0, %v2088
    %v2090 = vpop.f32.mrb[0].mxu0
    %2091 = vdwg.mxu0
    %v2092 = vadd.f32 %v2018, %v2089
    %v2094 = vsel %vm1502, %v1435, 0
    %2096 = vmatprep.subr.mxu0 0.0
    %2097 = vmatpush1.msra.mxu0 %v1468
    %2098 = vmatprep.subr.mxu0 0.0
    %2099 = vmatpush1.msra.mxu0 %v1469
    %2100 = vmatprep.subr.mxu0 0.0
    %2101 = vmatpush1.msra.mxu0 0.0
    %2102 = vmatprep.subr.mxu0 0.0
    %2103 = vmatpush1.msra.mxu0 0.0
    %2104 = vmatprep.subr.mxu0 0.0
    %2105 = vmatpush1.msra.mxu0 0.0
    %2106 = vmatprep.subr.mxu0 0.0
    %2107 = vmatpush1.msra.mxu0 0.0
    %2108 = vmatprep.subr.mxu0 0.0
    %2109 = vmatpush1.msra.mxu0 0.0
    %2110 = vmatprep.subr.mxu0 0.0
    %2111 = vmatpush1.msra.mxu0 0.0
    %2112 = vmatprep.subr.mxu0 0.0
    %2113 = vmatpush1.msra.mxu0 0.0
    %2114 = vmatprep.subr.mxu0 0.0
    %2115 = vmatpush1.msra.mxu0 0.0
    %2116 = vmatprep.subr.mxu0 0.0
    %2117 = vmatpush1.msra.mxu0 0.0
    %2118 = vmatprep.subr.mxu0 0.0
    %2119 = vmatpush1.msra.mxu0 0.0
    %2120 = vmatprep.subr.mxu0 0.0
    %2121 = vmatpush1.msra.mxu0 0.0
    %2122 = vmatprep.subr.mxu0 0.0
    %2123 = vmatpush1.msra.mxu0 0.0
    %2124 = vmatprep.subr.mxu0 0.0
    %2125 = vmatpush1.msra.mxu0 0.0
    %2126 = vmatprep.subr.mxu0 0.0
    %2127 = vmatpush1.msra.mxu0 0.0
    %2128 = vmatprep.subr.mxu0 0.0
    %2129 = vmatpush1.msra.mxu0 0.0
    %2130 = vmatprep.subr.mxu0 0.0
    %2131 = vmatpush1.msra.mxu0 0.0
    %2132 = vmatprep.subr.mxu0 0.0
    %2133 = vmatpush1.msra.mxu0 0.0
    %2134 = vmatprep.subr.mxu0 0.0
    %2135 = vmatpush1.msra.mxu0 0.0
    %2136 = vmatprep.subr.mxu0 0.0
    %2137 = vmatpush1.msra.mxu0 0.0
    %2138 = vmatprep.subr.mxu0 0.0
    %2139 = vmatpush1.msra.mxu0 0.0
    %2140 = vmatprep.subr.mxu0 0.0
    %2141 = vmatpush1.msra.mxu0 0.0
    %2142 = vmatprep.subr.mxu0 0.0
    %2143 = vmatpush1.msra.mxu0 0.0
    %2144 = vmatprep.subr.mxu0 0.0
    %2145 = vmatpush1.msra.mxu0 0.0
    %2146 = vmatprep.subr.mxu0 0.0
    %2147 = vmatpush1.msra.mxu0 0.0
    %2148 = vmatprep.subr.mxu0 0.0
    %2149 = vmatpush1.msra.mxu0 0.0
    %2150 = vmatprep.subr.mxu0 0.0
    %2151 = vmatpush1.msra.mxu0 0.0
    %2152 = vmatprep.subr.mxu0 0.0
    %2153 = vmatpush1.msra.mxu0 0.0
    %2154 = vmatprep.subr.mxu0 0.0
    %2155 = vmatpush1.msra.mxu0 0.0
    %2156 = vmatprep.subr.mxu0 0.0
    %2157 = vmatpush1.msra.mxu0 0.0
    %2158 = vmatprep.subr.mxu0 0.0
    %2159 = vmatpush1.msra.mxu0 0.0
    %2160 = vmatprep.mubr.f32.mxu0 0.0
    %2161 = vmatmul.mubr.f32.gmra.mrb[0].mxu0 %v2094
    %v2162 = vpop.f32.mrb[0].mxu0
    %v2163 = vadd.f32 0.0, %v2162
    %v2164 = vpop.f32.mrb[0].mxu0
    %2165 = vdwg.mxu0
    %v2166 = vadd.f32 %v2092, %v2163
    %v2168 = vsel %vm1502, %v1436, 0
    %2170 = vmatprep.subr.mxu0 0.0
    %2171 = vmatpush1.msra.mxu0 %v1470
    %2172 = vmatprep.subr.mxu0 0.0
    %2173 = vmatpush1.msra.mxu0 %v1471
    %2174 = vmatprep.subr.mxu0 0.0
    %2175 = vmatpush1.msra.mxu0 0.0
    %2176 = vmatprep.subr.mxu0 0.0
    %2177 = vmatpush1.msra.mxu0 0.0
    %2178 = vmatprep.subr.mxu0 0.0
    %2179 = vmatpush1.msra.mxu0 0.0
    %2180 = vmatprep.subr.mxu0 0.0
    %2181 = vmatpush1.msra.mxu0 0.0
    %2182 = vmatprep.subr.mxu0 0.0
    %2183 = vmatpush1.msra.mxu0 0.0
    %2184 = vmatprep.subr.mxu0 0.0
    %2185 = vmatpush1.msra.mxu0 0.0
    %2186 = vmatprep.subr.mxu0 0.0
    %2187 = vmatpush1.msra.mxu0 0.0
    %2188 = vmatprep.subr.mxu0 0.0
    %2189 = vmatpush1.msra.mxu0 0.0
    %2190 = vmatprep.subr.mxu0 0.0
    %2191 = vmatpush1.msra.mxu0 0.0
    %2192 = vmatprep.subr.mxu0 0.0
    %2193 = vmatpush1.msra.mxu0 0.0
    %2194 = vmatprep.subr.mxu0 0.0
    %2195 = vmatpush1.msra.mxu0 0.0
    %2196 = vmatprep.subr.mxu0 0.0
    %2197 = vmatpush1.msra.mxu0 0.0
    %2198 = vmatprep.subr.mxu0 0.0
    %2199 = vmatpush1.msra.mxu0 0.0
    %2200 = vmatprep.subr.mxu0 0.0
    %2201 = vmatpush1.msra.mxu0 0.0
    %2202 = vmatprep.subr.mxu0 0.0
    %2203 = vmatpush1.msra.mxu0 0.0
    %2204 = vmatprep.subr.mxu0 0.0
    %2205 = vmatpush1.msra.mxu0 0.0
    %2206 = vmatprep.subr.mxu0 0.0
    %2207 = vmatpush1.msra.mxu0 0.0
    %2208 = vmatprep.subr.mxu0 0.0
    %2209 = vmatpush1.msra.mxu0 0.0
    %2210 = vmatprep.subr.mxu0 0.0
    %2211 = vmatpush1.msra.mxu0 0.0
    %2212 = vmatprep.subr.mxu0 0.0
    %2213 = vmatpush1.msra.mxu0 0.0
    %2214 = vmatprep.subr.mxu0 0.0
    %2215 = vmatpush1.msra.mxu0 0.0
    %2216 = vmatprep.subr.mxu0 0.0
    %2217 = vmatpush1.msra.mxu0 0.0
    %2218 = vmatprep.subr.mxu0 0.0
    %2219 = vmatpush1.msra.mxu0 0.0
    %2220 = vmatprep.subr.mxu0 0.0
    %2221 = vmatpush1.msra.mxu0 0.0
    %2222 = vmatprep.subr.mxu0 0.0
    %2223 = vmatpush1.msra.mxu0 0.0
    %2224 = vmatprep.subr.mxu0 0.0
    %2225 = vmatpush1.msra.mxu0 0.0
    %2226 = vmatprep.subr.mxu0 0.0
    %2227 = vmatpush1.msra.mxu0 0.0
    %2228 = vmatprep.subr.mxu0 0.0
    %2229 = vmatpush1.msra.mxu0 0.0
    %2230 = vmatprep.subr.mxu0 0.0
    %2231 = vmatpush1.msra.mxu0 0.0
    %2232 = vmatprep.subr.mxu0 0.0
    %2233 = vmatpush1.msra.mxu0 0.0
    %2234 = vmatprep.mubr.f32.mxu0 0.0
    %2235 = vmatmul.mubr.f32.gmra.mrb[0].mxu0 %v2168
    %v2236 = vpop.f32.mrb[0].mxu0
    %v2237 = vadd.f32 0.0, %v2236
    %v2238 = vpop.f32.mrb[0].mxu0
    %2239 = vdwg.mxu0
    %v2240 = vadd.f32 %v2166, %v2237
    %v2242 = vsel %vm1502, %v1437, 0
    %2244 = vmatprep.subr.mxu0 0.0
    %2245 = vmatpush1.msra.mxu0 %v1472
    %2246 = vmatprep.subr.mxu0 0.0
    %2247 = vmatpush1.msra.mxu0 %v1473
    %2248 = vmatprep.subr.mxu0 0.0
    %2249 = vmatpush1.msra.mxu0 0.0
    %2250 = vmatprep.subr.mxu0 0.0
    %2251 = vmatpush1.msra.mxu0 0.0
    %2252 = vmatprep.subr.mxu0 0.0
    %2253 = vmatpush1.msra.mxu0 0.0
    %2254 = vmatprep.subr.mxu0 0.0
    %2255 = vmatpush1.msra.mxu0 0.0
    %2256 = vmatprep.subr.mxu0 0.0
    %2257 = vmatpush1.msra.mxu0 0.0
    %2258 = vmatprep.subr.mxu0 0.0
    %2259 = vmatpush1.msra.mxu0 0.0
    %2260 = vmatprep.subr.mxu0 0.0
    %2261 = vmatpush1.msra.mxu0 0.0
    %2262 = vmatprep.subr.mxu0 0.0
    %2263 = vmatpush1.msra.mxu0 0.0
    %2264 = vmatprep.subr.mxu0 0.0
    %2265 = vmatpush1.msra.mxu0 0.0
    %2266 = vmatprep.subr.mxu0 0.0
    %2267 = vmatpush1.msra.mxu0 0.0
    %2268 = vmatprep.subr.mxu0 0.0
    %2269 = vmatpush1.msra.mxu0 0.0
    %2270 = vmatprep.subr.mxu0 0.0
    %2271 = vmatpush1.msra.mxu0 0.0
    %2272 = vmatprep.subr.mxu0 0.0
    %2273 = vmatpush1.msra.mxu0 0.0
    %2274 = vmatprep.subr.mxu0 0.0
    %2275 = vmatpush1.msra.mxu0 0.0
    %2276 = vmatprep.subr.mxu0 0.0
    %2277 = vmatpush1.msra.mxu0 0.0
    %2278 = vmatprep.subr.mxu0 0.0
    %2279 = vmatpush1.msra.mxu0 0.0
    %2280 = vmatprep.subr.mxu0 0.0
    %2281 = vmatpush1.msra.mxu0 0.0
    %2282 = vmatprep.subr.mxu0 0.0
    %2283 = vmatpush1.msra.mxu0 0.0
    %2284 = vmatprep.subr.mxu0 0.0
    %2285 = vmatpush1.msra.mxu0 0.0
    %2286 = vmatprep.subr.mxu0 0.0
    %2287 = vmatpush1.msra.mxu0 0.0
    %2288 = vmatprep.subr.mxu0 0.0
    %2289 = vmatpush1.msra.mxu0 0.0
    %2290 = vmatprep.subr.mxu0 0.0
    %2291 = vmatpush1.msra.mxu0 0.0
    %2292 = vmatprep.subr.mxu0 0.0
    %2293 = vmatpush1.msra.mxu0 0.0
    %2294 = vmatprep.subr.mxu0 0.0
    %2295 = vmatpush1.msra.mxu0 0.0
    %2296 = vmatprep.subr.mxu0 0.0
    %2297 = vmatpush1.msra.mxu0 0.0
    %2298 = vmatprep.subr.mxu0 0.0
    %2299 = vmatpush1.msra.mxu0 0.0
    %2300 = vmatprep.subr.mxu0 0.0
    %2301 = vmatpush1.msra.mxu0 0.0
    %2302 = vmatprep.subr.mxu0 0.0
    %2303 = vmatpush1.msra.mxu0 0.0
    %2304 = vmatprep.subr.mxu0 0.0
    %2305 = vmatpush1.msra.mxu0 0.0
    %2306 = vmatprep.subr.mxu0 0.0
    %2307 = vmatpush1.msra.mxu0 0.0
    %2308 = vmatprep.mubr.f32.mxu0 0.0
    %2309 = vmatmul.mubr.f32.gmra.mrb[0].mxu0 %v2242
    %v2310 = vpop.f32.mrb[0].mxu0
    %v2311 = vadd.f32 0.0, %v2310
    %v2312 = vpop.f32.mrb[0].mxu0
    %2313 = vdwg.mxu0
    %v2314 = vadd.f32 %v2240, %v2311
    %v2316 = vsel %vm1502, %v1438, 0
    %2318 = vmatprep.subr.mxu0 0.0
    %2319 = vmatpush1.msra.mxu0 %v1474
    %2320 = vmatprep.subr.mxu0 0.0
    %2321 = vmatpush1.msra.mxu0 %v1475
    %2322 = vmatprep.subr.mxu0 0.0
    %2323 = vmatpush1.msra.mxu0 0.0
    %2324 = vmatprep.subr.mxu0 0.0
    %2325 = vmatpush1.msra.mxu0 0.0
    %2326 = vmatprep.subr.mxu0 0.0
    %2327 = vmatpush1.msra.mxu0 0.0
    %2328 = vmatprep.subr.mxu0 0.0
    %2329 = vmatpush1.msra.mxu0 0.0
    %2330 = vmatprep.subr.mxu0 0.0
    %2331 = vmatpush1.msra.mxu0 0.0
    %2332 = vmatprep.subr.mxu0 0.0
    %2333 = vmatpush1.msra.mxu0 0.0
    %2334 = vmatprep.subr.mxu0 0.0
    %2335 = vmatpush1.msra.mxu0 0.0
    %2336 = vmatprep.subr.mxu0 0.0
    %2337 = vmatpush1.msra.mxu0 0.0
    %2338 = vmatprep.subr.mxu0 0.0
    %2339 = vmatpush1.msra.mxu0 0.0
    %2340 = vmatprep.subr.mxu0 0.0
    %2341 = vmatpush1.msra.mxu0 0.0
    %2342 = vmatprep.subr.mxu0 0.0
    %2343 = vmatpush1.msra.mxu0 0.0
    %2344 = vmatprep.subr.mxu0 0.0
    %2345 = vmatpush1.msra.mxu0 0.0
    %2346 = vmatprep.subr.mxu0 0.0
    %2347 = vmatpush1.msra.mxu0 0.0
    %2348 = vmatprep.subr.mxu0 0.0
    %2349 = vmatpush1.msra.mxu0 0.0
    %2350 = vmatprep.subr.mxu0 0.0
    %2351 = vmatpush1.msra.mxu0 0.0
    %2352 = vmatprep.subr.mxu0 0.0
    %2353 = vmatpush1.msra.mxu0 0.0
    %2354 = vmatprep.subr.mxu0 0.0
    %2355 = vmatpush1.msra.mxu0 0.0
    %2356 = vmatprep.subr.mxu0 0.0
    %2357 = vmatpush1.msra.mxu0 0.0
    %2358 = vmatprep.subr.mxu0 0.0
    %2359 = vmatpush1.msra.mxu0 0.0
    %2360 = vmatprep.subr.mxu0 0.0
    %2361 = vmatpush1.msra.mxu0 0.0
    %2362 = vmatprep.subr.mxu0 0.0
    %2363 = vmatpush1.msra.mxu0 0.0
    %2364 = vmatprep.subr.mxu0 0.0
    %2365 = vmatpush1.msra.mxu0 0.0
    %2366 = vmatprep.subr.mxu0 0.0
    %2367 = vmatpush1.msra.mxu0 0.0
    %2368 = vmatprep.subr.mxu0 0.0
    %2369 = vmatpush1.msra.mxu0 0.0
    %2370 = vmatprep.subr.mxu0 0.0
    %2371 = vmatpush1.msra.mxu0 0.0
    %2372 = vmatprep.subr.mxu0 0.0
    %2373 = vmatpush1.msra.mxu0 0.0
    %2374 = vmatprep.subr.mxu0 0.0
    %2375 = vmatpush1.msra.mxu0 0.0
    %2376 = vmatprep.subr.mxu0 0.0
    %2377 = vmatpush1.msra.mxu0 0.0
    %2378 = vmatprep.subr.mxu0 0.0
    %2379 = vmatpush1.msra.mxu0 0.0
    %2380 = vmatprep.subr.mxu0 0.0
    %2381 = vmatpush1.msra.mxu0 0.0
    %2382 = vmatprep.mubr.f32.mxu0 0.0
    %2383 = vmatmul.mubr.f32.gmra.mrb[0].mxu0 %v2316
    %v2384 = vpop.f32.mrb[0].mxu0
    %v2385 = vadd.f32 0.0, %v2384
    %v2386 = vpop.f32.mrb[0].mxu0
    %2387 = vdwg.mxu0
    %v2388 = vadd.f32 %v2314, %v2385
    %v2390 = vsel %vm1502, %v1439, 0
    %2392 = vmatprep.subr.mxu0 0.0
    %2393 = vmatpush1.msra.mxu0 %v1476
    %2394 = vmatprep.subr.mxu0 0.0
    %2395 = vmatpush1.msra.mxu0 %v1477
    %2396 = vmatprep.subr.mxu0 0.0
    %2397 = vmatpush1.msra.mxu0 0.0
    %2398 = vmatprep.subr.mxu0 0.0
    %2399 = vmatpush1.msra.mxu0 0.0
    %2400 = vmatprep.subr.mxu0 0.0
    %2401 = vmatpush1.msra.mxu0 0.0
    %2402 = vmatprep.subr.mxu0 0.0
    %2403 = vmatpush1.msra.mxu0 0.0
    %2404 = vmatprep.subr.mxu0 0.0
    %2405 = vmatpush1.msra.mxu0 0.0
    %2406 = vmatprep.subr.mxu0 0.0
    %2407 = vmatpush1.msra.mxu0 0.0
    %2408 = vmatprep.subr.mxu0 0.0
    %2409 = vmatpush1.msra.mxu0 0.0
    %2410 = vmatprep.subr.mxu0 0.0
    %2411 = vmatpush1.msra.mxu0 0.0
    %2412 = vmatprep.subr.mxu0 0.0
    %2413 = vmatpush1.msra.mxu0 0.0
    %2414 = vmatprep.subr.mxu0 0.0
    %2415 = vmatpush1.msra.mxu0 0.0
    %2416 = vmatprep.subr.mxu0 0.0
    %2417 = vmatpush1.msra.mxu0 0.0
    %2418 = vmatprep.subr.mxu0 0.0
    %2419 = vmatpush1.msra.mxu0 0.0
    %2420 = vmatprep.subr.mxu0 0.0
    %2421 = vmatpush1.msra.mxu0 0.0
    %2422 = vmatprep.subr.mxu0 0.0
    %2423 = vmatpush1.msra.mxu0 0.0
    %2424 = vmatprep.subr.mxu0 0.0
    %2425 = vmatpush1.msra.mxu0 0.0
    %2426 = vmatprep.subr.mxu0 0.0
    %2427 = vmatpush1.msra.mxu0 0.0
    %2428 = vmatprep.subr.mxu0 0.0
    %2429 = vmatpush1.msra.mxu0 0.0
    %2430 = vmatprep.subr.mxu0 0.0
    %2431 = vmatpush1.msra.mxu0 0.0
    %2432 = vmatprep.subr.mxu0 0.0
    %2433 = vmatpush1.msra.mxu0 0.0
    %2434 = vmatprep.subr.mxu0 0.0
    %2435 = vmatpush1.msra.mxu0 0.0
    %2436 = vmatprep.subr.mxu0 0.0
    %2437 = vmatpush1.msra.mxu0 0.0
    %2438 = vmatprep.subr.mxu0 0.0
    %2439 = vmatpush1.msra.mxu0 0.0
    %2440 = vmatprep.subr.mxu0 0.0
    %2441 = vmatpush1.msra.mxu0 0.0
    %2442 = vmatprep.subr.mxu0 0.0
    %2443 = vmatpush1.msra.mxu0 0.0
    %2444 = vmatprep.subr.mxu0 0.0
    %2445 = vmatpush1.msra.mxu0 0.0
    %2446 = vmatprep.subr.mxu0 0.0
    %2447 = vmatpush1.msra.mxu0 0.0
    %2448 = vmatprep.subr.mxu0 0.0
    %2449 = vmatpush1.msra.mxu0 0.0
    %2450 = vmatprep.subr.mxu0 0.0
    %2451 = vmatpush1.msra.mxu0 0.0
    %2452 = vmatprep.subr.mxu0 0.0
    %2453 = vmatpush1.msra.mxu0 0.0
    %2454 = vmatprep.subr.mxu0 0.0
    %2455 = vmatpush1.msra.mxu0 0.0
    %2456 = vmatprep.mubr.f32.mxu0 0.0
    %2457 = vmatmul.mubr.f32.gmra.mrb[0].mxu0 %v2390
    %v2458 = vpop.f32.mrb[0].mxu0
    %v2459 = vadd.f32 0.0, %v2458
    %v2460 = vpop.f32.mrb[0].mxu0
    %2461 = vdwg.mxu0
    %v2462 = vadd.f32 %v2388, %v2459
    %v2464 = vsel %vm1502, %v1440, 0
    %2466 = vmatprep.subr.mxu0 0.0
    %2467 = vmatpush1.msra.mxu0 %v1478
    %2468 = vmatprep.subr.mxu0 0.0
    %2469 = vmatpush1.msra.mxu0 %v1479
    %2470 = vmatprep.subr.mxu0 0.0
    %2471 = vmatpush1.msra.mxu0 0.0
    %2472 = vmatprep.subr.mxu0 0.0
    %2473 = vmatpush1.msra.mxu0 0.0
    %2474 = vmatprep.subr.mxu0 0.0
    %2475 = vmatpush1.msra.mxu0 0.0
    %2476 = vmatprep.subr.mxu0 0.0
    %2477 = vmatpush1.msra.mxu0 0.0
    %2478 = vmatprep.subr.mxu0 0.0
    %2479 = vmatpush1.msra.mxu0 0.0
    %2480 = vmatprep.subr.mxu0 0.0
    %2481 = vmatpush1.msra.mxu0 0.0
    %2482 = vmatprep.subr.mxu0 0.0
    %2483 = vmatpush1.msra.mxu0 0.0
    %2484 = vmatprep.subr.mxu0 0.0
    %2485 = vmatpush1.msra.mxu0 0.0
    %2486 = vmatprep.subr.mxu0 0.0
    %2487 = vmatpush1.msra.mxu0 0.0
    %2488 = vmatprep.subr.mxu0 0.0
    %2489 = vmatpush1.msra.mxu0 0.0
    %2490 = vmatprep.subr.mxu0 0.0
    %2491 = vmatpush1.msra.mxu0 0.0
    %2492 = vmatprep.subr.mxu0 0.0
    %2493 = vmatpush1.msra.mxu0 0.0
    %2494 = vmatprep.subr.mxu0 0.0
    %2495 = vmatpush1.msra.mxu0 0.0
    %2496 = vmatprep.subr.mxu0 0.0
    %2497 = vmatpush1.msra.mxu0 0.0
    %2498 = vmatprep.subr.mxu0 0.0
    %2499 = vmatpush1.msra.mxu0 0.0
    %2500 = vmatprep.subr.mxu0 0.0
    %2501 = vmatpush1.msra.mxu0 0.0
    %2502 = vmatprep.subr.mxu0 0.0
    %2503 = vmatpush1.msra.mxu0 0.0
    %2504 = vmatprep.subr.mxu0 0.0
    %2505 = vmatpush1.msra.mxu0 0.0
    %2506 = vmatprep.subr.mxu0 0.0
    %2507 = vmatpush1.msra.mxu0 0.0
    %2508 = vmatprep.subr.mxu0 0.0
    %2509 = vmatpush1.msra.mxu0 0.0
    %2510 = vmatprep.subr.mxu0 0.0
    %2511 = vmatpush1.msra.mxu0 0.0
    %2512 = vmatprep.subr.mxu0 0.0
    %2513 = vmatpush1.msra.mxu0 0.0
    %2514 = vmatprep.subr.mxu0 0.0
    %2515 = vmatpush1.msra.mxu0 0.0
    %2516 = vmatprep.subr.mxu0 0.0
    %2517 = vmatpush1.msra.mxu0 0.0
    %2518 = vmatprep.subr.mxu0 0.0
    %2519 = vmatpush1.msra.mxu0 0.0
    %2520 = vmatprep.subr.mxu0 0.0
    %2521 = vmatpush1.msra.mxu0 0.0
    %2522 = vmatprep.subr.mxu0 0.0
    %2523 = vmatpush1.msra.mxu0 0.0
    %2524 = vmatprep.subr.mxu0 0.0
    %2525 = vmatpush1.msra.mxu0 0.0
    %2526 = vmatprep.subr.mxu0 0.0
    %2527 = vmatpush1.msra.mxu0 0.0
    %2528 = vmatprep.subr.mxu0 0.0
    %2529 = vmatpush1.msra.mxu0 0.0
    %2530 = vmatprep.mubr.f32.mxu0 0.0
    %2531 = vmatmul.mubr.f32.gmra.mrb[0].mxu0 %v2464
    %v2532 = vpop.f32.mrb[0].mxu0
    %v2533 = vadd.f32 0.0, %v2532
    %v2534 = vpop.f32.mrb[0].mxu0
    %2535 = vdwg.mxu0
    %v2536 = vadd.f32 %v2462, %v2533
    %v2538 = vsel %vm1502, %v1441, 0
    %2540 = vmatprep.subr.mxu0 0.0
    %2541 = vmatpush1.msra.mxu0 %v1480
    %2542 = vmatprep.subr.mxu0 0.0
    %2543 = vmatpush1.msra.mxu0 %v1481
    %2544 = vmatprep.subr.mxu0 0.0
    %2545 = vmatpush1.msra.mxu0 0.0
    %2546 = vmatprep.subr.mxu0 0.0
    %2547 = vmatpush1.msra.mxu0 0.0
    %2548 = vmatprep.subr.mxu0 0.0
    %2549 = vmatpush1.msra.mxu0 0.0
    %2550 = vmatprep.subr.mxu0 0.0
    %2551 = vmatpush1.msra.mxu0 0.0
    %2552 = vmatprep.subr.mxu0 0.0
    %2553 = vmatpush1.msra.mxu0 0.0
    %2554 = vmatprep.subr.mxu0 0.0
    %2555 = vmatpush1.msra.mxu0 0.0
    %2556 = vmatprep.subr.mxu0 0.0
    %2557 = vmatpush1.msra.mxu0 0.0
    %2558 = vmatprep.subr.mxu0 0.0
    %2559 = vmatpush1.msra.mxu0 0.0
    %2560 = vmatprep.subr.mxu0 0.0
    %2561 = vmatpush1.msra.mxu0 0.0
    %2562 = vmatprep.subr.mxu0 0.0
    %2563 = vmatpush1.msra.mxu0 0.0
    %2564 = vmatprep.subr.mxu0 0.0
    %2565 = vmatpush1.msra.mxu0 0.0
    %2566 = vmatprep.subr.mxu0 0.0
    %2567 = vmatpush1.msra.mxu0 0.0
    %2568 = vmatprep.subr.mxu0 0.0
    %2569 = vmatpush1.msra.mxu0 0.0
    %2570 = vmatprep.subr.mxu0 0.0
    %2571 = vmatpush1.msra.mxu0 0.0
    %2572 = vmatprep.subr.mxu0 0.0
    %2573 = vmatpush1.msra.mxu0 0.0
    %2574 = vmatprep.subr.mxu0 0.0
    %2575 = vmatpush1.msra.mxu0 0.0
    %2576 = vmatprep.subr.mxu0 0.0
    %2577 = vmatpush1.msra.mxu0 0.0
    %2578 = vmatprep.subr.mxu0 0.0
    %2579 = vmatpush1.msra.mxu0 0.0
    %2580 = vmatprep.subr.mxu0 0.0
    %2581 = vmatpush1.msra.mxu0 0.0
    %2582 = vmatprep.subr.mxu0 0.0
    %2583 = vmatpush1.msra.mxu0 0.0
    %2584 = vmatprep.subr.mxu0 0.0
    %2585 = vmatpush1.msra.mxu0 0.0
    %2586 = vmatprep.subr.mxu0 0.0
    %2587 = vmatpush1.msra.mxu0 0.0
    %2588 = vmatprep.subr.mxu0 0.0
    %2589 = vmatpush1.msra.mxu0 0.0
    %2590 = vmatprep.subr.mxu0 0.0
    %2591 = vmatpush1.msra.mxu0 0.0
    %2592 = vmatprep.subr.mxu0 0.0
    %2593 = vmatpush1.msra.mxu0 0.0
    %2594 = vmatprep.subr.mxu0 0.0
    %2595 = vmatpush1.msra.mxu0 0.0
    %2596 = vmatprep.subr.mxu0 0.0
    %2597 = vmatpush1.msra.mxu0 0.0
    %2598 = vmatprep.subr.mxu0 0.0
    %2599 = vmatpush1.msra.mxu0 0.0
    %2600 = vmatprep.subr.mxu0 0.0
    %2601 = vmatpush1.msra.mxu0 0.0
    %2602 = vmatprep.subr.mxu0 0.0
    %2603 = vmatpush1.msra.mxu0 0.0
    %2604 = vmatprep.mubr.f32.mxu0 0.0
    %2605 = vmatmul.mubr.f32.gmra.mrb[0].mxu0 %v2538
    %v2606 = vpop.f32.mrb[0].mxu0
    %v2607 = vadd.f32 0.0, %v2606
    %v2608 = vpop.f32.mrb[0].mxu0
    %2609 = vdwg.mxu0
    %v2610 = vadd.f32 %v2536, %v2607
    %v2612 = vsel %vm1502, %v1442, 0
    %2614 = vmatprep.subr.mxu0 0.0
    %2615 = vmatpush1.msra.mxu0 %v1482
    %2616 = vmatprep.subr.mxu0 0.0
    %2617 = vmatpush1.msra.mxu0 %v1483
    %2618 = vmatprep.subr.mxu0 0.0
    %2619 = vmatpush1.msra.mxu0 0.0
    %2620 = vmatprep.subr.mxu0 0.0
    %2621 = vmatpush1.msra.mxu0 0.0
    %2622 = vmatprep.subr.mxu0 0.0
    %2623 = vmatpush1.msra.mxu0 0.0
    %2624 = vmatprep.subr.mxu0 0.0
    %2625 = vmatpush1.msra.mxu0 0.0
    %2626 = vmatprep.subr.mxu0 0.0
    %2627 = vmatpush1.msra.mxu0 0.0
    %2628 = vmatprep.subr.mxu0 0.0
    %2629 = vmatpush1.msra.mxu0 0.0
    %2630 = vmatprep.subr.mxu0 0.0
    %2631 = vmatpush1.msra.mxu0 0.0
    %2632 = vmatprep.subr.mxu0 0.0
    %2633 = vmatpush1.msra.mxu0 0.0
    %2634 = vmatprep.subr.mxu0 0.0
    %2635 = vmatpush1.msra.mxu0 0.0
    %2636 = vmatprep.subr.mxu0 0.0
    %2637 = vmatpush1.msra.mxu0 0.0
    %2638 = vmatprep.subr.mxu0 0.0
    %2639 = vmatpush1.msra.mxu0 0.0
    %2640 = vmatprep.subr.mxu0 0.0
    %2641 = vmatpush1.msra.mxu0 0.0
    %2642 = vmatprep.subr.mxu0 0.0
    %2643 = vmatpush1.msra.mxu0 0.0
    %2644 = vmatprep.subr.mxu0 0.0
    %2645 = vmatpush1.msra.mxu0 0.0
    %2646 = vmatprep.subr.mxu0 0.0
    %2647 = vmatpush1.msra.mxu0 0.0
    %2648 = vmatprep.subr.mxu0 0.0
    %2649 = vmatpush1.msra.mxu0 0.0
    %2650 = vmatprep.subr.mxu0 0.0
    %2651 = vmatpush1.msra.mxu0 0.0
    %2652 = vmatprep.subr.mxu0 0.0
    %2653 = vmatpush1.msra.mxu0 0.0
    %2654 = vmatprep.subr.mxu0 0.0
    %2655 = vmatpush1.msra.mxu0 0.0
    %2656 = vmatprep.subr.mxu0 0.0
    %2657 = vmatpush1.msra.mxu0 0.0
    %2658 = vmatprep.subr.mxu0 0.0
    %2659 = vmatpush1.msra.mxu0 0.0
    %2660 = vmatprep.subr.mxu0 0.0
    %2661 = vmatpush1.msra.mxu0 0.0
    %2662 = vmatprep.subr.mxu0 0.0
    %2663 = vmatpush1.msra.mxu0 0.0
    %2664 = vmatprep.subr.mxu0 0.0
    %2665 = vmatpush1.msra.mxu0 0.0
    %2666 = vmatprep.subr.mxu0 0.0
    %2667 = vmatpush1.msra.mxu0 0.0
    %2668 = vmatprep.subr.mxu0 0.0
    %2669 = vmatpush1.msra.mxu0 0.0
    %2670 = vmatprep.subr.mxu0 0.0
    %2671 = vmatpush1.msra.mxu0 0.0
    %2672 = vmatprep.subr.mxu0 0.0
    %2673 = vmatpush1.msra.mxu0 0.0
    %2674 = vmatprep.subr.mxu0 0.0
    %2675 = vmatpush1.msra.mxu0 0.0
    %2676 = vmatprep.subr.mxu0 0.0
    %2677 = vmatpush1.msra.mxu0 0.0
    %2678 = vmatprep.mubr.f32.mxu0 0.0
    %2679 = vmatmul.mubr.f32.gmra.mrb[0].mxu0 %v2612
    %v2680 = vpop.f32.mrb[0].mxu0
    %v2681 = vadd.f32 0.0, %v2680
    %v2682 = vpop.f32.mrb[0].mxu0
    %2683 = vdwg.mxu0
    %v2684 = vadd.f32 %v2610, %v2681
    %v2686 = vsel %vm1502, %v1443, 0
    %2688 = vmatprep.subr.mxu0 0.0
    %2689 = vmatpush1.msra.mxu0 %v1484
    %2690 = vmatprep.subr.mxu0 0.0
    %2691 = vmatpush1.msra.mxu0 %v1485
    %2692 = vmatprep.subr.mxu0 0.0
    %2693 = vmatpush1.msra.mxu0 0.0
    %2694 = vmatprep.subr.mxu0 0.0
    %2695 = vmatpush1.msra.mxu0 0.0
    %2696 = vmatprep.subr.mxu0 0.0
    %2697 = vmatpush1.msra.mxu0 0.0
    %2698 = vmatprep.subr.mxu0 0.0
    %2699 = vmatpush1.msra.mxu0 0.0
    %2700 = vmatprep.subr.mxu0 0.0
    %2701 = vmatpush1.msra.mxu0 0.0
    %2702 = vmatprep.subr.mxu0 0.0
    %2703 = vmatpush1.msra.mxu0 0.0
    %2704 = vmatprep.subr.mxu0 0.0
    %2705 = vmatpush1.msra.mxu0 0.0
    %2706 = vmatprep.subr.mxu0 0.0
    %2707 = vmatpush1.msra.mxu0 0.0
    %2708 = vmatprep.subr.mxu0 0.0
    %2709 = vmatpush1.msra.mxu0 0.0
    %2710 = vmatprep.subr.mxu0 0.0
    %2711 = vmatpush1.msra.mxu0 0.0
    %2712 = vmatprep.subr.mxu0 0.0
    %2713 = vmatpush1.msra.mxu0 0.0
    %2714 = vmatprep.subr.mxu0 0.0
    %2715 = vmatpush1.msra.mxu0 0.0
    %2716 = vmatprep.subr.mxu0 0.0
    %2717 = vmatpush1.msra.mxu0 0.0
    %2718 = vmatprep.subr.mxu0 0.0
    %2719 = vmatpush1.msra.mxu0 0.0
    %2720 = vmatprep.subr.mxu0 0.0
    %2721 = vmatpush1.msra.mxu0 0.0
    %2722 = vmatprep.subr.mxu0 0.0
    %2723 = vmatpush1.msra.mxu0 0.0
    %2724 = vmatprep.subr.mxu0 0.0
    %2725 = vmatpush1.msra.mxu0 0.0
    %2726 = vmatprep.subr.mxu0 0.0
    %2727 = vmatpush1.msra.mxu0 0.0
    %2728 = vmatprep.subr.mxu0 0.0
    %2729 = vmatpush1.msra.mxu0 0.0
    %2730 = vmatprep.subr.mxu0 0.0
    %2731 = vmatpush1.msra.mxu0 0.0
    %2732 = vmatprep.subr.mxu0 0.0
    %2733 = vmatpush1.msra.mxu0 0.0
    %2734 = vmatprep.subr.mxu0 0.0
    %2735 = vmatpush1.msra.mxu0 0.0
    %2736 = vmatprep.subr.mxu0 0.0
    %2737 = vmatpush1.msra.mxu0 0.0
    %2738 = vmatprep.subr.mxu0 0.0
    %2739 = vmatpush1.msra.mxu0 0.0
    %2740 = vmatprep.subr.mxu0 0.0
    %2741 = vmatpush1.msra.mxu0 0.0
    %2742 = vmatprep.subr.mxu0 0.0
    %2743 = vmatpush1.msra.mxu0 0.0
    %2744 = vmatprep.subr.mxu0 0.0
    %2745 = vmatpush1.msra.mxu0 0.0
    %2746 = vmatprep.subr.mxu0 0.0
    %2747 = vmatpush1.msra.mxu0 0.0
    %2748 = vmatprep.subr.mxu0 0.0
    %2749 = vmatpush1.msra.mxu0 0.0
    %2750 = vmatprep.subr.mxu0 0.0
    %2751 = vmatpush1.msra.mxu0 0.0
    %2752 = vmatprep.mubr.f32.mxu0 0.0
    %2753 = vmatmul.mubr.f32.gmra.mrb[0].mxu0 %v2686
    %v2754 = vpop.f32.mrb[0].mxu0
    %v2755 = vadd.f32 0.0, %v2754
    %v2756 = vpop.f32.mrb[0].mxu0
    %2757 = vdwg.mxu0
    %v2758 = vadd.f32 %v2684, %v2755
    %v2760 = vsel %vm1502, %v1444, 0
    %2762 = vmatprep.subr.mxu0 0.0
    %2763 = vmatpush1.msra.mxu0 %v1486
    %2764 = vmatprep.subr.mxu0 0.0
    %2765 = vmatpush1.msra.mxu0 %v1487
    %2766 = vmatprep.subr.mxu0 0.0
    %2767 = vmatpush1.msra.mxu0 0.0
    %2768 = vmatprep.subr.mxu0 0.0
    %2769 = vmatpush1.msra.mxu0 0.0
    %2770 = vmatprep.subr.mxu0 0.0
    %2771 = vmatpush1.msra.mxu0 0.0
    %2772 = vmatprep.subr.mxu0 0.0
    %2773 = vmatpush1.msra.mxu0 0.0
    %2774 = vmatprep.subr.mxu0 0.0
    %2775 = vmatpush1.msra.mxu0 0.0
    %2776 = vmatprep.subr.mxu0 0.0
    %2777 = vmatpush1.msra.mxu0 0.0
    %2778 = vmatprep.subr.mxu0 0.0
    %2779 = vmatpush1.msra.mxu0 0.0
    %2780 = vmatprep.subr.mxu0 0.0
    %2781 = vmatpush1.msra.mxu0 0.0
    %2782 = vmatprep.subr.mxu0 0.0
    %2783 = vmatpush1.msra.mxu0 0.0
    %2784 = vmatprep.subr.mxu0 0.0
    %2785 = vmatpush1.msra.mxu0 0.0
    %2786 = vmatprep.subr.mxu0 0.0
    %2787 = vmatpush1.msra.mxu0 0.0
    %2788 = vmatprep.subr.mxu0 0.0
    %2789 = vmatpush1.msra.mxu0 0.0
    %2790 = vmatprep.subr.mxu0 0.0
    %2791 = vmatpush1.msra.mxu0 0.0
    %2792 = vmatprep.subr.mxu0 0.0
    %2793 = vmatpush1.msra.mxu0 0.0
    %2794 = vmatprep.subr.mxu0 0.0
    %2795 = vmatpush1.msra.mxu0 0.0
    %2796 = vmatprep.subr.mxu0 0.0
    %2797 = vmatpush1.msra.mxu0 0.0
    %2798 = vmatprep.subr.mxu0 0.0
    %2799 = vmatpush1.msra.mxu0 0.0
    %2800 = vmatprep.subr.mxu0 0.0
    %2801 = vmatpush1.msra.mxu0 0.0
    %2802 = vmatprep.subr.mxu0 0.0
    %2803 = vmatpush1.msra.mxu0 0.0
    %2804 = vmatprep.subr.mxu0 0.0
    %2805 = vmatpush1.msra.mxu0 0.0
    %2806 = vmatprep.subr.mxu0 0.0
    %2807 = vmatpush1.msra.mxu0 0.0
    %2808 = vmatprep.subr.mxu0 0.0
    %2809 = vmatpush1.msra.mxu0 0.0
    %2810 = vmatprep.subr.mxu0 0.0
    %2811 = vmatpush1.msra.mxu0 0.0
    %2812 = vmatprep.subr.mxu0 0.0
    %2813 = vmatpush1.msra.mxu0 0.0
    %2814 = vmatprep.subr.mxu0 0.0
    %2815 = vmatpush1.msra.mxu0 0.0
    %2816 = vmatprep.subr.mxu0 0.0
    %2817 = vmatpush1.msra.mxu0 0.0
    %2818 = vmatprep.subr.mxu0 0.0
    %2819 = vmatpush1.msra.mxu0 0.0
    %2820 = vmatprep.subr.mxu0 0.0
    %2821 = vmatpush1.msra.mxu0 0.0
    %2822 = vmatprep.subr.mxu0 0.0
    %2823 = vmatpush1.msra.mxu0 0.0
    %2824 = vmatprep.subr.mxu0 0.0
    %2825 = vmatpush1.msra.mxu0 0.0
    %2826 = vmatprep.mubr.f32.mxu0 0.0
    %2827 = vmatmul.mubr.f32.gmra.mrb[0].mxu0 %v2760
    %v2828 = vpop.f32.mrb[0].mxu0
    %v2829 = vadd.f32 0.0, %v2828
    %v2830 = vpop.f32.mrb[0].mxu0
    %2831 = vdwg.mxu0
    %v2832 = vadd.f32 %v2758, %v2829
    %v2834 = vsel %vm1502, %v1445, 0
    %2836 = vmatprep.subr.mxu0 0.0
    %2837 = vmatpush1.msra.mxu0 %v1488
    %2838 = vmatprep.subr.mxu0 0.0
    %2839 = vmatpush1.msra.mxu0 %v1489
    %2840 = vmatprep.subr.mxu0 0.0
    %2841 = vmatpush1.msra.mxu0 0.0
    %2842 = vmatprep.subr.mxu0 0.0
    %2843 = vmatpush1.msra.mxu0 0.0
    %2844 = vmatprep.subr.mxu0 0.0
    %2845 = vmatpush1.msra.mxu0 0.0
    %2846 = vmatprep.subr.mxu0 0.0
    %2847 = vmatpush1.msra.mxu0 0.0
    %2848 = vmatprep.subr.mxu0 0.0
    %2849 = vmatpush1.msra.mxu0 0.0
    %2850 = vmatprep.subr.mxu0 0.0
    %2851 = vmatpush1.msra.mxu0 0.0
    %2852 = vmatprep.subr.mxu0 0.0
    %2853 = vmatpush1.msra.mxu0 0.0
    %2854 = vmatprep.subr.mxu0 0.0
    %2855 = vmatpush1.msra.mxu0 0.0
    %2856 = vmatprep.subr.mxu0 0.0
    %2857 = vmatpush1.msra.mxu0 0.0
    %2858 = vmatprep.subr.mxu0 0.0
    %2859 = vmatpush1.msra.mxu0 0.0
    %2860 = vmatprep.subr.mxu0 0.0
    %2861 = vmatpush1.msra.mxu0 0.0
    %2862 = vmatprep.subr.mxu0 0.0
    %2863 = vmatpush1.msra.mxu0 0.0
    %2864 = vmatprep.subr.mxu0 0.0
    %2865 = vmatpush1.msra.mxu0 0.0
    %2866 = vmatprep.subr.mxu0 0.0
    %2867 = vmatpush1.msra.mxu0 0.0
    %2868 = vmatprep.subr.mxu0 0.0
    %2869 = vmatpush1.msra.mxu0 0.0
    %2870 = vmatprep.subr.mxu0 0.0
    %2871 = vmatpush1.msra.mxu0 0.0
    %2872 = vmatprep.subr.mxu0 0.0
    %2873 = vmatpush1.msra.mxu0 0.0
    %2874 = vmatprep.subr.mxu0 0.0
    %2875 = vmatpush1.msra.mxu0 0.0
    %2876 = vmatprep.subr.mxu0 0.0
    %2877 = vmatpush1.msra.mxu0 0.0
    %2878 = vmatprep.subr.mxu0 0.0
    %2879 = vmatpush1.msra.mxu0 0.0
    %2880 = vmatprep.subr.mxu0 0.0
    %2881 = vmatpush1.msra.mxu0 0.0
    %2882 = vmatprep.subr.mxu0 0.0
    %2883 = vmatpush1.msra.mxu0 0.0
    %2884 = vmatprep.subr.mxu0 0.0
    %2885 = vmatpush1.msra.mxu0 0.0
    %2886 = vmatprep.subr.mxu0 0.0
    %2887 = vmatpush1.msra.mxu0 0.0
    %2888 = vmatprep.subr.mxu0 0.0
    %2889 = vmatpush1.msra.mxu0 0.0
    %2890 = vmatprep.subr.mxu0 0.0
    %2891 = vmatpush1.msra.mxu0 0.0
    %2892 = vmatprep.subr.mxu0 0.0
    %2893 = vmatpush1.msra.mxu0 0.0
    %2894 = vmatprep.subr.mxu0 0.0
    %2895 = vmatpush1.msra.mxu0 0.0
    %2896 = vmatprep.subr.mxu0 0.0
    %2897 = vmatpush1.msra.mxu0 0.0
    %2898 = vmatprep.subr.mxu0 0.0
    %2899 = vmatpush1.msra.mxu0 0.0
    %2900 = vmatprep.mubr.f32.mxu0 0.0
    %2901 = vmatmul.mubr.f32.gmra.mrb[0].mxu0 %v2834
    %v2902 = vpop.f32.mrb[0].mxu0
    %v2903 = vadd.f32 0.0, %v2902
    %v2904 = vpop.f32.mrb[0].mxu0
    %2905 = vdwg.mxu0
    %v2906 = vadd.f32 %v2832, %v2903
    %v2908 = vsel %vm1502, %v1446, 0
    %2910 = vmatprep.subr.mxu0 0.0
    %2911 = vmatpush1.msra.mxu0 %v1490
    %2912 = vmatprep.subr.mxu0 0.0
    %2913 = vmatpush1.msra.mxu0 %v1491
    %2914 = vmatprep.subr.mxu0 0.0
    %2915 = vmatpush1.msra.mxu0 0.0
    %2916 = vmatprep.subr.mxu0 0.0
    %2917 = vmatpush1.msra.mxu0 0.0
    %2918 = vmatprep.subr.mxu0 0.0
    %2919 = vmatpush1.msra.mxu0 0.0
    %2920 = vmatprep.subr.mxu0 0.0
    %2921 = vmatpush1.msra.mxu0 0.0
    %2922 = vmatprep.subr.mxu0 0.0
    %2923 = vmatpush1.msra.mxu0 0.0
    %2924 = vmatprep.subr.mxu0 0.0
    %2925 = vmatpush1.msra.mxu0 0.0
    %2926 = vmatprep.subr.mxu0 0.0
    %2927 = vmatpush1.msra.mxu0 0.0
    %2928 = vmatprep.subr.mxu0 0.0
    %2929 = vmatpush1.msra.mxu0 0.0
    %2930 = vmatprep.subr.mxu0 0.0
    %2931 = vmatpush1.msra.mxu0 0.0
    %2932 = vmatprep.subr.mxu0 0.0
    %2933 = vmatpush1.msra.mxu0 0.0
    %2934 = vmatprep.subr.mxu0 0.0
    %2935 = vmatpush1.msra.mxu0 0.0
    %2936 = vmatprep.subr.mxu0 0.0
    %2937 = vmatpush1.msra.mxu0 0.0
    %2938 = vmatprep.subr.mxu0 0.0
    %2939 = vmatpush1.msra.mxu0 0.0
    %2940 = vmatprep.subr.mxu0 0.0
    %2941 = vmatpush1.msra.mxu0 0.0
    %2942 = vmatprep.subr.mxu0 0.0
    %2943 = vmatpush1.msra.mxu0 0.0
    %2944 = vmatprep.subr.mxu0 0.0
    %2945 = vmatpush1.msra.mxu0 0.0
    %2946 = vmatprep.subr.mxu0 0.0
    %2947 = vmatpush1.msra.mxu0 0.0
    %2948 = vmatprep.subr.mxu0 0.0
    %2949 = vmatpush1.msra.mxu0 0.0
    %2950 = vmatprep.subr.mxu0 0.0
    %2951 = vmatpush1.msra.mxu0 0.0
    %2952 = vmatprep.subr.mxu0 0.0
    %2953 = vmatpush1.msra.mxu0 0.0
    %2954 = vmatprep.subr.mxu0 0.0
    %2955 = vmatpush1.msra.mxu0 0.0
    %2956 = vmatprep.subr.mxu0 0.0
    %2957 = vmatpush1.msra.mxu0 0.0
    %2958 = vmatprep.subr.mxu0 0.0
    %2959 = vmatpush1.msra.mxu0 0.0
    %2960 = vmatprep.subr.mxu0 0.0
    %2961 = vmatpush1.msra.mxu0 0.0
    %2962 = vmatprep.subr.mxu0 0.0
    %2963 = vmatpush1.msra.mxu0 0.0
    %2964 = vmatprep.subr.mxu0 0.0
    %2965 = vmatpush1.msra.mxu0 0.0
    %2966 = vmatprep.subr.mxu0 0.0
    %2967 = vmatpush1.msra.mxu0 0.0
    %2968 = vmatprep.subr.mxu0 0.0
    %2969 = vmatpush1.msra.mxu0 0.0
    %2970 = vmatprep.subr.mxu0 0.0
    %2971 = vmatpush1.msra.mxu0 0.0
    %2972 = vmatprep.subr.mxu0 0.0
    %2973 = vmatpush1.msra.mxu0 0.0
    %2974 = vmatprep.mubr.f32.mxu0 0.0
    %2975 = vmatmul.mubr.f32.gmra.mrb[0].mxu0 %v2908
    %v2976 = vpop.f32.mrb[0].mxu0
    %v2977 = vadd.f32 0.0, %v2976
    %v2978 = vpop.f32.mrb[0].mxu0
    %2979 = vdwg.mxu0
    %v2980 = vadd.f32 %v2906, %v2977
    %v2982 = vsel %vm1502, %v1447, 0
    %2984 = vmatprep.subr.mxu0 0.0
    %2985 = vmatpush1.msra.mxu0 %v1492
    %2986 = vmatprep.subr.mxu0 0.0
    %2987 = vmatpush1.msra.mxu0 %v1493
    %2988 = vmatprep.subr.mxu0 0.0
    %2989 = vmatpush1.msra.mxu0 0.0
    %2990 = vmatprep.subr.mxu0 0.0
    %2991 = vmatpush1.msra.mxu0 0.0
    %2992 = vmatprep.subr.mxu0 0.0
    %2993 = vmatpush1.msra.mxu0 0.0
    %2994 = vmatprep.subr.mxu0 0.0
    %2995 = vmatpush1.msra.mxu0 0.0
    %2996 = vmatprep.subr.mxu0 0.0
    %2997 = vmatpush1.msra.mxu0 0.0
    %2998 = vmatprep.subr.mxu0 0.0
    %2999 = vmatpush1.msra.mxu0 0.0
    %3000 = vmatprep.subr.mxu0 0.0
    %3001 = vmatpush1.msra.mxu0 0.0
    %3002 = vmatprep.subr.mxu0 0.0
    %3003 = vmatpush1.msra.mxu0 0.0
    %3004 = vmatprep.subr.mxu0 0.0
    %3005 = vmatpush1.msra.mxu0 0.0
    %3006 = vmatprep.subr.mxu0 0.0
    %3007 = vmatpush1.msra.mxu0 0.0
    %3008 = vmatprep.subr.mxu0 0.0
    %3009 = vmatpush1.msra.mxu0 0.0
    %3010 = vmatprep.subr.mxu0 0.0
    %3011 = vmatpush1.msra.mxu0 0.0
    %3012 = vmatprep.subr.mxu0 0.0
    %3013 = vmatpush1.msra.mxu0 0.0
    %3014 = vmatprep.subr.mxu0 0.0
    %3015 = vmatpush1.msra.mxu0 0.0
    %3016 = vmatprep.subr.mxu0 0.0
    %3017 = vmatpush1.msra.mxu0 0.0
    %3018 = vmatprep.subr.mxu0 0.0
    %3019 = vmatpush1.msra.mxu0 0.0
    %3020 = vmatprep.subr.mxu0 0.0
    %3021 = vmatpush1.msra.mxu0 0.0
    %3022 = vmatprep.subr.mxu0 0.0
    %3023 = vmatpush1.msra.mxu0 0.0
    %3024 = vmatprep.subr.mxu0 0.0
    %3025 = vmatpush1.msra.mxu0 0.0
    %3026 = vmatprep.subr.mxu0 0.0
    %3027 = vmatpush1.msra.mxu0 0.0
    %3028 = vmatprep.subr.mxu0 0.0
    %3029 = vmatpush1.msra.mxu0 0.0
    %3030 = vmatprep.subr.mxu0 0.0
    %3031 = vmatpush1.msra.mxu0 0.0
    %3032 = vmatprep.subr.mxu0 0.0
    %3033 = vmatpush1.msra.mxu0 0.0
    %3034 = vmatprep.subr.mxu0 0.0
    %3035 = vmatpush1.msra.mxu0 0.0
    %3036 = vmatprep.subr.mxu0 0.0
    %3037 = vmatpush1.msra.mxu0 0.0
    %3038 = vmatprep.subr.mxu0 0.0
    %3039 = vmatpush1.msra.mxu0 0.0
    %3040 = vmatprep.subr.mxu0 0.0
    %3041 = vmatpush1.msra.mxu0 0.0
    %3042 = vmatprep.subr.mxu0 0.0
    %3043 = vmatpush1.msra.mxu0 0.0
    %3044 = vmatprep.subr.mxu0 0.0
    %3045 = vmatpush1.msra.mxu0 0.0
    %3046 = vmatprep.subr.mxu0 0.0
    %3047 = vmatpush1.msra.mxu0 0.0
    %3048 = vmatprep.mubr.f32.mxu0 0.0
    %3049 = vmatmul.mubr.f32.gmra.mrb[0].mxu0 %v2982
    %v3050 = vpop.f32.mrb[0].mxu0
    %v3051 = vadd.f32 0.0, %v3050
    %v3052 = vpop.f32.mrb[0].mxu0
    %3053 = vdwg.mxu0
    %v3054 = vadd.f32 %v2980, %v3051
    %v3056 = vsel %vm1502, %v1448, 0
    %3058 = vmatprep.subr.mxu0 0.0
    %3059 = vmatpush1.msra.mxu0 %v1494
    %3060 = vmatprep.subr.mxu0 0.0
    %3061 = vmatpush1.msra.mxu0 %v1495
    %3062 = vmatprep.subr.mxu0 0.0
    %3063 = vmatpush1.msra.mxu0 0.0
    %3064 = vmatprep.subr.mxu0 0.0
    %3065 = vmatpush1.msra.mxu0 0.0
    %3066 = vmatprep.subr.mxu0 0.0
    %3067 = vmatpush1.msra.mxu0 0.0
    %3068 = vmatprep.subr.mxu0 0.0
    %3069 = vmatpush1.msra.mxu0 0.0
    %3070 = vmatprep.subr.mxu0 0.0
    %3071 = vmatpush1.msra.mxu0 0.0
    %3072 = vmatprep.subr.mxu0 0.0
    %3073 = vmatpush1.msra.mxu0 0.0
    %3074 = vmatprep.subr.mxu0 0.0
    %3075 = vmatpush1.msra.mxu0 0.0
    %3076 = vmatprep.subr.mxu0 0.0
    %3077 = vmatpush1.msra.mxu0 0.0
    %3078 = vmatprep.subr.mxu0 0.0
    %3079 = vmatpush1.msra.mxu0 0.0
    %3080 = vmatprep.subr.mxu0 0.0
    %3081 = vmatpush1.msra.mxu0 0.0
    %3082 = vmatprep.subr.mxu0 0.0
    %3083 = vmatpush1.msra.mxu0 0.0
    %3084 = vmatprep.subr.mxu0 0.0
    %3085 = vmatpush1.msra.mxu0 0.0
    %3086 = vmatprep.subr.mxu0 0.0
    %3087 = vmatpush1.msra.mxu0 0.0
    %3088 = vmatprep.subr.mxu0 0.0
    %3089 = vmatpush1.msra.mxu0 0.0
    %3090 = vmatprep.subr.mxu0 0.0
    %3091 = vmatpush1.msra.mxu0 0.0
    %3092 = vmatprep.subr.mxu0 0.0
    %3093 = vmatpush1.msra.mxu0 0.0
    %3094 = vmatprep.subr.mxu0 0.0
    %3095 = vmatpush1.msra.mxu0 0.0
    %3096 = vmatprep.subr.mxu0 0.0
    %3097 = vmatpush1.msra.mxu0 0.0
    %3098 = vmatprep.subr.mxu0 0.0
    %3099 = vmatpush1.msra.mxu0 0.0
    %3100 = vmatprep.subr.mxu0 0.0
    %3101 = vmatpush1.msra.mxu0 0.0
    %3102 = vmatprep.subr.mxu0 0.0
    %3103 = vmatpush1.msra.mxu0 0.0
    %3104 = vmatprep.subr.mxu0 0.0
    %3105 = vmatpush1.msra.mxu0 0.0
    %3106 = vmatprep.subr.mxu0 0.0
    %3107 = vmatpush1.msra.mxu0 0.0
    %3108 = vmatprep.subr.mxu0 0.0
    %3109 = vmatpush1.msra.mxu0 0.0
    %3110 = vmatprep.subr.mxu0 0.0
    %3111 = vmatpush1.msra.mxu0 0.0
    %3112 = vmatprep.subr.mxu0 0.0
    %3113 = vmatpush1.msra.mxu0 0.0
    %3114 = vmatprep.subr.mxu0 0.0
    %3115 = vmatpush1.msra.mxu0 0.0
    %3116 = vmatprep.subr.mxu0 0.0
    %3117 = vmatpush1.msra.mxu0 0.0
    %3118 = vmatprep.subr.mxu0 0.0
    %3119 = vmatpush1.msra.mxu0 0.0
    %3120 = vmatprep.subr.mxu0 0.0
    %3121 = vmatpush1.msra.mxu0 0.0
    %3122 = vmatprep.mubr.f32.mxu0 0.0
    %3123 = vmatmul.mubr.f32.gmra.mrb[0].mxu0 %v3056
    %v3124 = vpop.f32.mrb[0].mxu0
    %v3125 = vadd.f32 0.0, %v3124
    %v3126 = vpop.f32.mrb[0].mxu0
    %3127 = vdwg.mxu0
    %v3128 = vadd.f32 %v3054, %v3125
    %v3130 = vsel %vm1502, %v1449, 0
    %3132 = vmatprep.subr.mxu0 0.0
    %3133 = vmatpush1.msra.mxu0 %v1496
    %3134 = vmatprep.subr.mxu0 0.0
    %3135 = vmatpush1.msra.mxu0 %v1497
    %3136 = vmatprep.subr.mxu0 0.0
    %3137 = vmatpush1.msra.mxu0 0.0
    %3138 = vmatprep.subr.mxu0 0.0
    %3139 = vmatpush1.msra.mxu0 0.0
    %3140 = vmatprep.subr.mxu0 0.0
    %3141 = vmatpush1.msra.mxu0 0.0
    %3142 = vmatprep.subr.mxu0 0.0
    %3143 = vmatpush1.msra.mxu0 0.0
    %3144 = vmatprep.subr.mxu0 0.0
    %3145 = vmatpush1.msra.mxu0 0.0
    %3146 = vmatprep.subr.mxu0 0.0
    %3147 = vmatpush1.msra.mxu0 0.0
    %3148 = vmatprep.subr.mxu0 0.0
    %3149 = vmatpush1.msra.mxu0 0.0
    %3150 = vmatprep.subr.mxu0 0.0
    %3151 = vmatpush1.msra.mxu0 0.0
    %3152 = vmatprep.subr.mxu0 0.0
    %3153 = vmatpush1.msra.mxu0 0.0
    %3154 = vmatprep.subr.mxu0 0.0
    %3155 = vmatpush1.msra.mxu0 0.0
    %3156 = vmatprep.subr.mxu0 0.0
    %3157 = vmatpush1.msra.mxu0 0.0
    %3158 = vmatprep.subr.mxu0 0.0
    %3159 = vmatpush1.msra.mxu0 0.0
    %3160 = vmatprep.subr.mxu0 0.0
    %3161 = vmatpush1.msra.mxu0 0.0
    %3162 = vmatprep.subr.mxu0 0.0
    %3163 = vmatpush1.msra.mxu0 0.0
    %3164 = vmatprep.subr.mxu0 0.0
    %3165 = vmatpush1.msra.mxu0 0.0
    %3166 = vmatprep.subr.mxu0 0.0
    %3167 = vmatpush1.msra.mxu0 0.0
    %3168 = vmatprep.subr.mxu0 0.0
    %3169 = vmatpush1.msra.mxu0 0.0
    %3170 = vmatprep.subr.mxu0 0.0
    %3171 = vmatpush1.msra.mxu0 0.0
    %3172 = vmatprep.subr.mxu0 0.0
    %3173 = vmatpush1.msra.mxu0 0.0
    %3174 = vmatprep.subr.mxu0 0.0
    %3175 = vmatpush1.msra.mxu0 0.0
    %3176 = vmatprep.subr.mxu0 0.0
    %3177 = vmatpush1.msra.mxu0 0.0
    %3178 = vmatprep.subr.mxu0 0.0
    %3179 = vmatpush1.msra.mxu0 0.0
    %3180 = vmatprep.subr.mxu0 0.0
    %3181 = vmatpush1.msra.mxu0 0.0
    %3182 = vmatprep.subr.mxu0 0.0
    %3183 = vmatpush1.msra.mxu0 0.0
    %3184 = vmatprep.subr.mxu0 0.0
    %3185 = vmatpush1.msra.mxu0 0.0
    %3186 = vmatprep.subr.mxu0 0.0
    %3187 = vmatpush1.msra.mxu0 0.0
    %3188 = vmatprep.subr.mxu0 0.0
    %3189 = vmatpush1.msra.mxu0 0.0
    %3190 = vmatprep.subr.mxu0 0.0
    %3191 = vmatpush1.msra.mxu0 0.0
    %3192 = vmatprep.subr.mxu0 0.0
    %3193 = vmatpush1.msra.mxu0 0.0
    %3194 = vmatprep.subr.mxu0 0.0
    %3195 = vmatpush1.msra.mxu0 0.0
    %3196 = vmatprep.mubr.f32.mxu0 0.0
    %3197 = vmatmul.mubr.f32.gmra.mrb[0].mxu0 %v3130
    %v3198 = vpop.f32.mrb[0].mxu0
    %v3199 = vadd.f32 0.0, %v3198
    %v3200 = vpop.f32.mrb[0].mxu0
    %3201 = vdwg.mxu0
    %v3202 = vadd.f32 %v3128, %v3199
    %v3204 = vsel %vm1502, %v1450, 0
    %3206 = vmatprep.subr.mxu0 0.0
    %3207 = vmatpush1.msra.mxu0 %v1498
    %3208 = vmatprep.subr.mxu0 0.0
    %3209 = vmatpush1.msra.mxu0 %v1499
    %3210 = vmatprep.subr.mxu0 0.0
    %3211 = vmatpush1.msra.mxu0 0.0
    %3212 = vmatprep.subr.mxu0 0.0
    %3213 = vmatpush1.msra.mxu0 0.0
    %3214 = vmatprep.subr.mxu0 0.0
    %3215 = vmatpush1.msra.mxu0 0.0
    %3216 = vmatprep.subr.mxu0 0.0
    %3217 = vmatpush1.msra.mxu0 0.0
    %3218 = vmatprep.subr.mxu0 0.0
    %3219 = vmatpush1.msra.mxu0 0.0
    %3220 = vmatprep.subr.mxu0 0.0
    %3221 = vmatpush1.msra.mxu0 0.0
    %3222 = vmatprep.subr.mxu0 0.0
    %3223 = vmatpush1.msra.mxu0 0.0
    %3224 = vmatprep.subr.mxu0 0.0
    %3225 = vmatpush1.msra.mxu0 0.0
    %3226 = vmatprep.subr.mxu0 0.0
    %3227 = vmatpush1.msra.mxu0 0.0
    %3228 = vmatprep.subr.mxu0 0.0
    %3229 = vmatpush1.msra.mxu0 0.0
    %3230 = vmatprep.subr.mxu0 0.0
    %3231 = vmatpush1.msra.mxu0 0.0
    %3232 = vmatprep.subr.mxu0 0.0
    %3233 = vmatpush1.msra.mxu0 0.0
    %3234 = vmatprep.subr.mxu0 0.0
    %3235 = vmatpush1.msra.mxu0 0.0
    %3236 = vmatprep.subr.mxu0 0.0
    %3237 = vmatpush1.msra.mxu0 0.0
    %3238 = vmatprep.subr.mxu0 0.0
    %3239 = vmatpush1.msra.mxu0 0.0
    %3240 = vmatprep.subr.mxu0 0.0
    %3241 = vmatpush1.msra.mxu0 0.0
    %3242 = vmatprep.subr.mxu0 0.0
    %3243 = vmatpush1.msra.mxu0 0.0
    %3244 = vmatprep.subr.mxu0 0.0
    %3245 = vmatpush1.msra.mxu0 0.0
    %3246 = vmatprep.subr.mxu0 0.0
    %3247 = vmatpush1.msra.mxu0 0.0
    %3248 = vmatprep.subr.mxu0 0.0
    %3249 = vmatpush1.msra.mxu0 0.0
    %3250 = vmatprep.subr.mxu0 0.0
    %3251 = vmatpush1.msra.mxu0 0.0
    %3252 = vmatprep.subr.mxu0 0.0
    %3253 = vmatpush1.msra.mxu0 0.0
    %3254 = vmatprep.subr.mxu0 0.0
    %3255 = vmatpush1.msra.mxu0 0.0
    %3256 = vmatprep.subr.mxu0 0.0
    %3257 = vmatpush1.msra.mxu0 0.0
    %3258 = vmatprep.subr.mxu0 0.0
    %3259 = vmatpush1.msra.mxu0 0.0
    %3260 = vmatprep.subr.mxu0 0.0
    %3261 = vmatpush1.msra.mxu0 0.0
    %3262 = vmatprep.subr.mxu0 0.0
    %3263 = vmatpush1.msra.mxu0 0.0
    %3264 = vmatprep.subr.mxu0 0.0
    %3265 = vmatpush1.msra.mxu0 0.0
    %3266 = vmatprep.subr.mxu0 0.0
    %3267 = vmatpush1.msra.mxu0 0.0
    %3268 = vmatprep.subr.mxu0 0.0
    %3269 = vmatpush1.msra.mxu0 0.0
    %3270 = vmatprep.mubr.f32.mxu0 0.0
    %3271 = vmatmul.mubr.f32.gmra.mrb[0].mxu0 %v3204
    %v3272 = vpop.f32.mrb[0].mxu0
    %v3273 = vadd.f32 0.0, %v3272
    %v3274 = vpop.f32.mrb[0].mxu0
    %3275 = vdwg.mxu0
    %v3276 = vadd.f32 %v3202, %v3273
    %v3278 = vsel %vm1502, %v1451, 0
    %3280 = vmatprep.subr.mxu0 0.0
    %3281 = vmatpush1.msra.mxu0 %v1500
    %3282 = vmatprep.subr.mxu0 0.0
    %3283 = vmatpush1.msra.mxu0 %v1501
    %3284 = vmatprep.subr.mxu0 0.0
    %3285 = vmatpush1.msra.mxu0 0.0
    %3286 = vmatprep.subr.mxu0 0.0
    %3287 = vmatpush1.msra.mxu0 0.0
    %3288 = vmatprep.subr.mxu0 0.0
    %3289 = vmatpush1.msra.mxu0 0.0
    %3290 = vmatprep.subr.mxu0 0.0
    %3291 = vmatpush1.msra.mxu0 0.0
    %3292 = vmatprep.subr.mxu0 0.0
    %3293 = vmatpush1.msra.mxu0 0.0
    %3294 = vmatprep.subr.mxu0 0.0
    %3295 = vmatpush1.msra.mxu0 0.0
    %3296 = vmatprep.subr.mxu0 0.0
    %3297 = vmatpush1.msra.mxu0 0.0
    %3298 = vmatprep.subr.mxu0 0.0
    %3299 = vmatpush1.msra.mxu0 0.0
    %3300 = vmatprep.subr.mxu0 0.0
    %3301 = vmatpush1.msra.mxu0 0.0
    %3302 = vmatprep.subr.mxu0 0.0
    %3303 = vmatpush1.msra.mxu0 0.0
    %3304 = vmatprep.subr.mxu0 0.0
    %3305 = vmatpush1.msra.mxu0 0.0
    %3306 = vmatprep.subr.mxu0 0.0
    %3307 = vmatpush1.msra.mxu0 0.0
    %3308 = vmatprep.subr.mxu0 0.0
    %3309 = vmatpush1.msra.mxu0 0.0
    %3310 = vmatprep.subr.mxu0 0.0
    %3311 = vmatpush1.msra.mxu0 0.0
    %3312 = vmatprep.subr.mxu0 0.0
    %3313 = vmatpush1.msra.mxu0 0.0
    %3314 = vmatprep.subr.mxu0 0.0
    %3315 = vmatpush1.msra.mxu0 0.0
    %3316 = vmatprep.subr.mxu0 0.0
    %3317 = vmatpush1.msra.mxu0 0.0
    %3318 = vmatprep.subr.mxu0 0.0
    %3319 = vmatpush1.msra.mxu0 0.0
    %3320 = vmatprep.subr.mxu0 0.0
    %3321 = vmatpush1.msra.mxu0 0.0
    %3322 = vmatprep.subr.mxu0 0.0
    %3323 = vmatpush1.msra.mxu0 0.0
    %3324 = vmatprep.subr.mxu0 0.0
    %3325 = vmatpush1.msra.mxu0 0.0
    %3326 = vmatprep.subr.mxu0 0.0
    %3327 = vmatpush1.msra.mxu0 0.0
    %3328 = vmatprep.subr.mxu0 0.0
    %3329 = vmatpush1.msra.mxu0 0.0
    %3330 = vmatprep.subr.mxu0 0.0
    %3331 = vmatpush1.msra.mxu0 0.0
    %3332 = vmatprep.subr.mxu0 0.0
    %3333 = vmatpush1.msra.mxu0 0.0
    %3334 = vmatprep.subr.mxu0 0.0
    %3335 = vmatpush1.msra.mxu0 0.0
    %3336 = vmatprep.subr.mxu0 0.0
    %3337 = vmatpush1.msra.mxu0 0.0
    %3338 = vmatprep.subr.mxu0 0.0
    %3339 = vmatpush1.msra.mxu0 0.0
    %3340 = vmatprep.subr.mxu0 0.0
    %3341 = vmatpush1.msra.mxu0 0.0
    %3342 = vmatprep.subr.mxu0 0.0
    %3343 = vmatpush1.msra.mxu0 0.0
    %3344 = vmatprep.mubr.f32.mxu0 0.0
    %3345 = vmatmul.mubr.f32.gmra.mrb[0].mxu0 %v3278
    %v3346 = vpop.f32.mrb[0].mxu0
    %v3347 = vadd.f32 0.0, %v3346
    %v3348 = vpop.f32.mrb[0].mxu0
    %3349 = vdwg.mxu0
    %v3350 = vadd.f32 %v3276, %v3347
    %v3351 = vld [vmem:[%s4] sm:$0x1]
    %v3353 = vlaneseq
    %v3354 = vshrl.u32 %v3353, 7
    %v3355 = vsub.s32 0, %v3354
    %v3356 = vrot.slane %v3351, %v3355
    %v3358 = vadd.f32 %v3350, %v3356
    %v3359 = vmax.f32 %v3358, 0.0
    %v3360 = vld [vmem:[%s5] sm:$0xff]
    %v3361 = vld [vmem:[%s5 + $0x8] sm:$0xff]
    %v3362 = vld [vmem:[%s5 + $0x10] sm:$0xff]
    %v3363 = vld [vmem:[%s5 + $0x18] sm:$0xff]
    %v3364 = vld [vmem:[%s5 + $0x20] sm:$0xff]
    %v3365 = vld [vmem:[%s5 + $0x28] sm:$0xff]
    %v3366 = vld [vmem:[%s5 + $0x30] sm:$0xff]
    %v3367 = vld [vmem:[%s5 + $0x38] sm:$0xff]
    %v3368 = vld [vmem:[%s5 + $0x40] sm:$0xff]
    %v3369 = vld [vmem:[%s5 + $0x48] sm:$0xff]
    %v3370 = vld [vmem:[%s5 + $0x50] sm:$0xff]
    %v3371 = vld [vmem:[%s5 + $0x58] sm:$0xff]
    %v3372 = vld [vmem:[%s5 + $0x60] sm:$0xff]
    %v3373 = vld [vmem:[%s5 + $0x68] sm:$0xff]
    %v3374 = vld [vmem:[%s5 + $0x70] sm:$0xff]
    %v3375 = vld [vmem:[%s6] sm:$0x1]
    %v3377 = vlaneseq
    %v3378 = vshrl.u32 %v3377, 7
    %v3379 = vsub.s32 0, %v3378
    %v3380 = vrot.slane %v3375, %v3379
    %vm3382 = vcmask 982016
    %v3384 = vsel %vm3382, %v3359, 0
    %3386 = vmatprep.subr.mxu0 0.0
    %3387 = vmatpush1.msra.mxu0 %v3360
    %3388 = vmatprep.subr.mxu0 0.0
    %3389 = vmatpush1.msra.mxu0 %v3361
    %3390 = vmatprep.subr.mxu0 0.0
    %3391 = vmatpush1.msra.mxu0 %v3362
    %3392 = vmatprep.subr.mxu0 0.0
    %3393 = vmatpush1.msra.mxu0 %v3363
    %3394 = vmatprep.subr.mxu0 0.0
    %3395 = vmatpush1.msra.mxu0 %v3364
    %3396 = vmatprep.subr.mxu0 0.0
    %3397 = vmatpush1.msra.mxu0 %v3365
    %3398 = vmatprep.subr.mxu0 0.0
    %3399 = vmatpush1.msra.mxu0 %v3366
    %3400 = vmatprep.subr.mxu0 0.0
    %3401 = vmatpush1.msra.mxu0 %v3367
    %3402 = vmatprep.subr.mxu0 0.0
    %3403 = vmatpush1.msra.mxu0 %v3368
    %3404 = vmatprep.subr.mxu0 0.0
    %3405 = vmatpush1.msra.mxu0 %v3369
    %3406 = vmatprep.subr.mxu0 0.0
    %3407 = vmatpush1.msra.mxu0 %v3370
    %3408 = vmatprep.subr.mxu0 0.0
    %3409 = vmatpush1.msra.mxu0 %v3371
    %3410 = vmatprep.subr.mxu0 0.0
    %3411 = vmatpush1.msra.mxu0 %v3372
    %3412 = vmatprep.subr.mxu0 0.0
    %3413 = vmatpush1.msra.mxu0 %v3373
    %3414 = vmatprep.subr.mxu0 0.0
    %3415 = vmatpush1.msra.mxu0 %v3374
    %3416 = vmatprep.subr.mxu0 0.0
    %3417 = vmatpush1.msra.mxu0 0.0
    %3418 = vmatprep.subr.mxu0 0.0
    %3419 = vmatpush1.msra.mxu0 0.0
    %3420 = vmatprep.subr.mxu0 0.0
    %3421 = vmatpush1.msra.mxu0 0.0
    %3422 = vmatprep.subr.mxu0 0.0
    %3423 = vmatpush1.msra.mxu0 0.0
    %3424 = vmatprep.subr.mxu0 0.0
    %3425 = vmatpush1.msra.mxu0 0.0
    %3426 = vmatprep.subr.mxu0 0.0
    %3427 = vmatpush1.msra.mxu0 0.0
    %3428 = vmatprep.subr.mxu0 0.0
    %3429 = vmatpush1.msra.mxu0 0.0
    %3430 = vmatprep.subr.mxu0 0.0
    %3431 = vmatpush1.msra.mxu0 0.0
    %3432 = vmatprep.subr.mxu0 0.0
    %3433 = vmatpush1.msra.mxu0 0.0
    %3434 = vmatprep.subr.mxu0 0.0
    %3435 = vmatpush1.msra.mxu0 0.0
    %3436 = vmatprep.subr.mxu0 0.0
    %3437 = vmatpush1.msra.mxu0 0.0
    %3438 = vmatprep.subr.mxu0 0.0
    %3439 = vmatpush1.msra.mxu0 0.0
    %3440 = vmatprep.subr.mxu0 0.0
    %3441 = vmatpush1.msra.mxu0 0.0
    %3442 = vmatprep.subr.mxu0 0.0
    %3443 = vmatpush1.msra.mxu0 0.0
    %3444 = vmatprep.subr.mxu0 0.0
    %3445 = vmatpush1.msra.mxu0 0.0
    %3446 = vmatprep.subr.mxu0 0.0
    %3447 = vmatpush1.msra.mxu0 0.0
    %3448 = vmatprep.subr.mxu0 0.0
    %3449 = vmatpush1.msra.mxu0 0.0
    %3450 = vmatprep.mubr.f32.mxu0 0.0
    %3451 = vmatmul.mubr.f32.gmra.mrb[0].mxu0 %v3384
    %v3452 = vpop.f32.mrb[0].mxu0
    %v3453 = vadd.f32 %v3380, %v3452
    %v3454 = vpop.f32.mrb[0].mxu0
    %3455 = vdwg.mxu0
    %v3456 = vmax.f32 %v3453, 0.0
    %v3457 = vld [vmem:[%s7] sm:$0xff]
    %v3458 = vld [vmem:[%s7 + $0x8] sm:$0xff]
    %v3459 = vld [vmem:[%s7 + $0x10] sm:$0xff]
    %v3460 = vld [vmem:[%s7 + $0x18] sm:$0xff]
    %v3461 = vld [vmem:[%s7 + $0x20] sm:$0xff]
    %v3462 = vld [vmem:[%s7 + $0x28] sm:$0xff]
    %v3463 = vld [vmem:[%s7 + $0x30] sm:$0xff]
    %v3464 = vld [vmem:[%s7 + $0x38] sm:$0xff]
    %v3465 = vld [vmem:[%s7 + $0x40] sm:$0xff]
    %v3466 = vld [vmem:[%s7 + $0x48] sm:$0xff]
    %v3467 = vld [vmem:[%s7 + $0x50] sm:$0xf]
    %v3468 = vld [vmem:[%s8] sm:$0x1]
    %v3470 = vlaneseq
    %v3471 = vshrl.u32 %v3470, 7
    %v3472 = vsub.s32 0, %v3471
    %v3473 = vrot.slane %v3468, %v3472
    %vm3475 = vcmask 687104
    %v3477 = vsel %vm3475, %v3456, 0
    %vm3479 = vcmask 1043456
    %v3481 = vsel %vm3479, %v3467, 0
    %3483 = vmatprep.subr.mxu0 0.0
    %3484 = vmatpush1.msra.mxu0 %v3457
    %3485 = vmatprep.subr.mxu0 0.0
    %3486 = vmatpush1.msra.mxu0 %v3458
    %3487 = vmatprep.subr.mxu0 0.0
    %3488 = vmatpush1.msra.mxu0 %v3459
    %3489 = vmatprep.subr.mxu0 0.0
    %3490 = vmatpush1.msra.mxu0 %v3460
    %3491 = vmatprep.subr.mxu0 0.0
    %3492 = vmatpush1.msra.mxu0 %v3461
    %3493 = vmatprep.subr.mxu0 0.0
    %3494 = vmatpush1.msra.mxu0 %v3462
    %3495 = vmatprep.subr.mxu0 0.0
    %3496 = vmatpush1.msra.mxu0 %v3463
    %3497 = vmatprep.subr.mxu0 0.0
    %3498 = vmatpush1.msra.mxu0 %v3464
    %3499 = vmatprep.subr.mxu0 0.0
    %3500 = vmatpush1.msra.mxu0 %v3465
    %3501 = vmatprep.subr.mxu0 0.0
    %3502 = vmatpush1.msra.mxu0 %v3466
    %3503 = vmatprep.subr.mxu0 0.0
    %3504 = vmatpush1.msra.mxu0 %v3481
    %3505 = vmatprep.subr.mxu0 0.0
    %3506 = vmatpush1.msra.mxu0 0.0
    %3507 = vmatprep.subr.mxu0 0.0
    %3508 = vmatpush1.msra.mxu0 0.0
    %3509 = vmatprep.subr.mxu0 0.0
    %3510 = vmatpush1.msra.mxu0 0.0
    %3511 = vmatprep.subr.mxu0 0.0
    %3512 = vmatpush1.msra.mxu0 0.0
    %3513 = vmatprep.subr.mxu0 0.0
    %3514 = vmatpush1.msra.mxu0 0.0
    %3515 = vmatprep.subr.mxu0 0.0
    %3516 = vmatpush1.msra.mxu0 0.0
    %3517 = vmatprep.subr.mxu0 0.0
    %3518 = vmatpush1.msra.mxu0 0.0
    %3519 = vmatprep.subr.mxu0 0.0
    %3520 = vmatpush1.msra.mxu0 0.0
    %3521 = vmatprep.subr.mxu0 0.0
    %3522 = vmatpush1.msra.mxu0 0.0
    %3523 = vmatprep.subr.mxu0 0.0
    %3524 = vmatpush1.msra.mxu0 0.0
    %3525 = vmatprep.subr.mxu0 0.0
    %3526 = vmatpush1.msra.mxu0 0.0
    %3527 = vmatprep.subr.mxu0 0.0
    %3528 = vmatpush1.msra.mxu0 0.0
    %3529 = vmatprep.subr.mxu0 0.0
    %3530 = vmatpush1.msra.mxu0 0.0
    %3531 = vmatprep.subr.mxu0 0.0
    %3532 = vmatpush1.msra.mxu0 0.0
    %3533 = vmatprep.subr.mxu0 0.0
    %3534 = vmatpush1.msra.mxu0 0.0
    %3535 = vmatprep.subr.mxu0 0.0
    %3536 = vmatpush1.msra.mxu0 0.0
    %3537 = vmatprep.subr.mxu0 0.0
    %3538 = vmatpush1.msra.mxu0 0.0
    %3539 = vmatprep.subr.mxu0 0.0
    %3540 = vmatpush1.msra.mxu0 0.0
    %3541 = vmatprep.subr.mxu0 0.0
    %3542 = vmatpush1.msra.mxu0 0.0
    %3543 = vmatprep.subr.mxu0 0.0
    %3544 = vmatpush1.msra.mxu0 0.0
    %3545 = vmatprep.subr.mxu0 0.0
    %3546 = vmatpush1.msra.mxu0 0.0
    %3547 = vmatprep.mubr.f32.mxu0 0.0
    %3548 = vmatmul.mubr.f32.gmra.mrb[0].mxu0 %v3477
    %v3549 = vpop.f32.mrb[0].mxu0
    %v3550 = vadd.f32 %v3473, %v3549
    %v3551 = vpop.f32.mrb[0].mxu0
    %3552 = vdwg.mxu0
    %vm3553 = vcmask 74752
    %3554 = vst.msk [vmem:[#allocation2] sm:$0x3] %vm3553, %v3550
    // Predicated region
    $region38: #{net_forward.3} parent=1 // pred_check
      _
    $region39: #{net_forward.3} parent=1 // pred_check_branch
      %3556 = sbr.rel (0) target = $region41
    $region40: #{net_forward.3} parent=1 // pred_region
      %s3558 = ssub.s32 32, 32
      %3559 = vsyncadd [#allocation3], %s3558
      %s3561 = sshll.u32 [#allocation2], 4
      %s3562 = int_to_ptr.vmem [resolvable:$true] %s3561
      %3564 = dma.vmem_to_hbm [thread:$0]  %s3562, 32, %s9, [#allocation3]
    $region41: #{net_forward.3} parent=1 // pred_fallthru
      _
    // Predicated region
    $region42: #{net_forward.3} parent=1 // pred_check
      _
    $region43: #{net_forward.3} parent=1 // pred_check_branch
      %3566 = sbr.rel (0) target = $region45
    $region44: #{net_forward.3} parent=1 // pred_region
      %3567 = dma.done [#allocation3], 32
    $region45: #{net_forward.3} parent=1 // pred_fallthru
      _
    %3568 = vsyncpa [#allocation3], 1

</llo_original>
